<compile_context>
chip_gen: v5e
topology: v5e:2x2
jax: 0.10.0
libtpu: 0.0.40
codegen_flags: <defaults>
</compile_context>

<pallas_src>
import functools

import jax
import jax.numpy as jnp
from jax.experimental import pallas as pl
from jax.experimental.pallas import tpu as pltpu


# ----------------------------------------------------------------------------- helpers

_VMEM_LIMIT = 48 * 1024 * 1024   # fits v5e/v6e (128 MiB phys) and v7x (64 MiB phys)


def _pick_tile(dim, target, align=8):
    """Largest tile <= target that divides `dim` and is `align`-aligned; else full dim."""
    if dim <= target:
        return dim
    start = (min(target, dim) // align) * align
    for cand in range(start, 0, -align):
        if dim % cand == 0:
            return cand
    return dim


def _cparams(sem):
    return pltpu.CompilerParams(dimension_semantics=sem,
                                vmem_limit_bytes=_VMEM_LIMIT)


def _ce(flops, bytes_accessed):
    return pl.CostEstimate(flops=int(flops), transcendentals=0,
                           bytes_accessed=int(bytes_accessed))


# ----------------------------------------------------------------------------- edge projection (single lane-dense dot)

def _edge_proj_kernel(x_ref, w_ref, o_ref):
    x = x_ref[...].astype(jnp.bfloat16)
    o_ref[...] = jnp.dot(x, w_ref[...],
                         preferred_element_type=jnp.float32).astype(o_ref.dtype)


def edge_proj(x2d, w_cat, *, row_tile=2048):
    m, cin = x2d.shape
    co2 = w_cat.shape[1]                         # 2 * cout (== 128)
    tm = _pick_tile(m, row_tile)
    return pl.pallas_call(
        _edge_proj_kernel,
        grid=(m // tm,),
        out_shape=jax.ShapeDtypeStruct((m, co2), jnp.bfloat16),
        in_specs=[pl.BlockSpec((tm, cin), lambda i: (i, 0)),
                  pl.BlockSpec((cin, co2), lambda i: (0, 0))],
        out_specs=pl.BlockSpec((tm, co2), lambda i: (i, 0)),
        compiler_params=_cparams(("parallel",)),
        cost_estimate=_ce(2 * m * cin * co2,
                          4 * m * cin + 2 * cin * co2 + 2 * m * co2),
    )(x2d, w_cat)


# ----------------------------------------------------------------------------- fused EdgeConv blocks

def _edgeconv_block1_kernel(ps_ref, pn_ref, s1_ref, b1_ref,
                            w2_ref, s2_ref, b2_ref,
                            w3_ref, s3_ref, b3_ref,
                            mm_ref, o_ref):
    tr, k, _ = pn_ref.shape
    ps = ps_ref[...].astype(jnp.float32)
    pn = pn_ref[...].astype(jnp.float32)
    s1 = s1_ref[...]; b1 = b1_ref[...]
    # per-edge 6->64 affine+relu for all k edges, stacked row-wise (j-major)
    h1 = jnp.concatenate(
        [jnp.maximum((ps + pn[:, j, :]) * s1 + b1, 0.0) for j in range(k)], axis=0)
    # batched per-edge 64->64 conv: ONE (k*tr, c1) @ (c1, c2) MXU matmul
    h2 = jnp.dot(h1.astype(jnp.bfloat16), w2_ref[...],
                 preferred_element_type=jnp.float32)
    h2 = jnp.maximum(h2 * s2_ref[...] + b2_ref[...], 0.0)
    mx = h2[0:tr]
    sm = h2[0:tr]
    for j in range(1, k):
        piece = h2[j * tr:(j + 1) * tr]
        mx = jnp.maximum(mx, piece)
        sm = sm + piece
    mm = jnp.concatenate([mx, sm * (1.0 / k)], axis=-1)        # (tr, 128) lane dense
    mm_ref[...] = mm
    y = jnp.dot(mm.astype(jnp.bfloat16), w3_ref[...],          # one K=128 matmul
                preferred_element_type=jnp.float32)
    o_ref[...] = jnp.maximum(y * s3_ref[...] + b3_ref[...], 0.0)


def edgeconv_block1(ps, pn, bn1, conv2, conv3, *, row_tile=512):
    r, c1 = ps.shape
    k = pn.shape[1]
    s1, b1 = bn1
    w2, s2, b2 = conv2
    w3, s3, b3 = conv3
    c2 = w2.shape[1]
    c3 = w3.shape[1]
    tr = _pick_tile(r, row_tile)
    return pl.pallas_call(
        _edgeconv_block1_kernel,
        grid=(r // tr,),
        out_shape=(jax.ShapeDtypeStruct((r, 2 * c2), jnp.float32),
                   jax.ShapeDtypeStruct((r, c3), jnp.float32)),
        in_specs=[
            pl.BlockSpec((tr, c1), lambda i: (i, 0)),
            pl.BlockSpec((tr, k, c1), lambda i: (i, 0, 0)),
            pl.BlockSpec((1, c1), lambda i: (0, 0)),
            pl.BlockSpec((1, c1), lambda i: (0, 0)),
            pl.BlockSpec((c1, c2), lambda i: (0, 0)),
            pl.BlockSpec((1, c2), lambda i: (0, 0)),
            pl.BlockSpec((1, c2), lambda i: (0, 0)),
            pl.BlockSpec((2 * c2, c3), lambda i: (0, 0)),
            pl.BlockSpec((1, c3), lambda i: (0, 0)),
            pl.BlockSpec((1, c3), lambda i: (0, 0)),
        ],
        out_specs=(pl.BlockSpec((tr, 2 * c2), lambda i: (i, 0)),
                   pl.BlockSpec((tr, c3), lambda i: (i, 0))),
        compiler_params=_cparams(("parallel",)),
        cost_estimate=_ce(2 * r * k * c1 * c2 + 2 * r * 2 * c2 * c3,
                          2 * r * c1 + 2 * r * k * c1 + 4 * r * 2 * c2 + 4 * r * c3),
    )(ps, pn, s1, b1,
      w2.astype(jnp.bfloat16), s2, b2,
      w3.astype(jnp.bfloat16), s3, b3)


def _edgeconv_block23_kernel(ps_ref, pn_ref, s1_ref, b1_ref,
                             w2_ref, s2_ref, b2_ref, mm_ref, o_ref):
    _, k, _ = pn_ref.shape
    ps = ps_ref[...].astype(jnp.float32)
    pn = pn_ref[...].astype(jnp.float32)
    s1 = s1_ref[...]; b1 = b1_ref[...]
    h = jnp.maximum((ps + pn[:, 0, :]) * s1 + b1, 0.0)
    mx = h
    sm = h
    for j in range(1, k):
        h = jnp.maximum((ps + pn[:, j, :]) * s1 + b1, 0.0)
        mx = jnp.maximum(mx, h)
        sm = sm + h
    mm = jnp.concatenate([mx, sm * (1.0 / k)], axis=-1)        # (tr, 128) lane dense
    mm_ref[...] = mm
    y = jnp.dot(mm.astype(jnp.bfloat16), w2_ref[...],          # one K=128 matmul
                preferred_element_type=jnp.float32)
    o_ref[...] = jnp.maximum(y * s2_ref[...] + b2_ref[...], 0.0)


def edgeconv_block23(ps, pn, bn1, conv2, *, row_tile=512):
    r, c1 = ps.shape
    k = pn.shape[1]
    s1, b1 = bn1
    w2, s2, b2 = conv2
    c2 = w2.shape[1]
    tr = _pick_tile(r, row_tile)
    return pl.pallas_call(
        _edgeconv_block23_kernel,
        grid=(r // tr,),
        out_shape=(jax.ShapeDtypeStruct((r, 2 * c1), jnp.float32),
                   jax.ShapeDtypeStruct((r, c2), jnp.float32)),
        in_specs=[
            pl.BlockSpec((tr, c1), lambda i: (i, 0)),
            pl.BlockSpec((tr, k, c1), lambda i: (i, 0, 0)),
            pl.BlockSpec((1, c1), lambda i: (0, 0)),
            pl.BlockSpec((1, c1), lambda i: (0, 0)),
            pl.BlockSpec((2 * c1, c2), lambda i: (0, 0)),
            pl.BlockSpec((1, c2), lambda i: (0, 0)),
            pl.BlockSpec((1, c2), lambda i: (0, 0)),
        ],
        out_specs=(pl.BlockSpec((tr, 2 * c1), lambda i: (i, 0)),
                   pl.BlockSpec((tr, c2), lambda i: (i, 0))),
        compiler_params=_cparams(("parallel",)),
        cost_estimate=_ce(2 * r * 2 * c1 * c2,
                          2 * r * c1 + 2 * r * k * c1 + 4 * r * 2 * c1 + 4 * r * c2),
    )(ps, pn, s1, b1, w2.astype(jnp.bfloat16), s2, b2)


def _transform_edge_kernel(ps_ref, pn_ref, s1_ref, b1_ref,
                           w2_ref, s2_ref, b2_ref, mx_ref):
    # conv1 per edge (affine+relu on projected features), conv2 (64->128) per edge
    # batched over k, max over k only (mean unused by transform_net).
    tr, k, _ = pn_ref.shape
    ps = ps_ref[...].astype(jnp.float32)
    pn = pn_ref[...].astype(jnp.float32)
    s1 = s1_ref[...]; b1 = b1_ref[...]
    h1 = jnp.concatenate(
        [jnp.maximum((ps + pn[:, j, :]) * s1 + b1, 0.0) for j in range(k)], axis=0)
    h2 = jnp.dot(h1.astype(jnp.bfloat16), w2_ref[...],
                 preferred_element_type=jnp.float32)
    h2 = jnp.maximum(h2 * s2_ref[...] + b2_ref[...], 0.0)
    mx = h2[0:tr]
    for j in range(1, k):
        mx = jnp.maximum(mx, h2[j * tr:(j + 1) * tr])
    mx_ref[...] = mx.astype(mx_ref.dtype)


def transform_edge(ps, pn, bn1, conv2, *, row_tile=256):
    r, c1 = ps.shape
    k = pn.shape[1]
    s1, b1 = bn1
    w2, s2, b2 = conv2
    c2 = w2.shape[1]
    tr = _pick_tile(r, row_tile)
    return pl.pallas_call(
        _transform_edge_kernel,
        grid=(r // tr,),
        out_shape=jax.ShapeDtypeStruct((r, c2), jnp.bfloat16),
        in_specs=[
            pl.BlockSpec((tr, c1), lambda i: (i, 0)),
            pl.BlockSpec((tr, k, c1), lambda i: (i, 0, 0)),
            pl.BlockSpec((1, c1), lambda i: (0, 0)),
            pl.BlockSpec((1, c1), lambda i: (0, 0)),
            pl.BlockSpec((c1, c2), lambda i: (0, 0)),
            pl.BlockSpec((1, c2), lambda i: (0, 0)),
            pl.BlockSpec((1, c2), lambda i: (0, 0)),
        ],
        out_specs=pl.BlockSpec((tr, c2), lambda i: (i, 0)),
        compiler_params=_cparams(("parallel",)),
        cost_estimate=_ce(2 * r * k * c1 * c2,
                          2 * r * c1 + 2 * r * k * c1 + 2 * r * c2 + 2 * c1 * c2),
    )(ps, pn, s1, b1, w2.astype(jnp.bfloat16), s2, b2)


# ----------------------------------------------------------------------------- fused (linear + BN + ReLU) -> global max over points

def _lin_bn_relu_gmax_kernel(x_ref, w_ref, s_ref, b_ref, f_ref):
    x = x_ref[0].astype(jnp.bfloat16)
    y = jnp.dot(x, w_ref[...], preferred_element_type=jnp.float32)
    y = jnp.maximum(y * s_ref[...] + b_ref[...], 0.0)
    part = jnp.max(y, axis=0, keepdims=True)

    @pl.when(pl.program_id(1) == 0)
    def _init():
        f_ref[0] = part

    @pl.when(pl.program_id(1) > 0)
    def _acc():
        f_ref[0] = jnp.maximum(f_ref[0], part)


def linear_bn_relu_gmax(x3d, w, s, b, *, row_tile=1024):
    """relu(affine(x @ W)) followed by max over the point axis; only the max is
    written (the (B*N, cout) intermediate never touches HBM)."""
    bsz, n, cin = x3d.shape
    cout = w.shape[1]
    tm = _pick_tile(n, row_tile)
    out = pl.pallas_call(
        _lin_bn_relu_gmax_kernel,
        grid=(bsz, n // tm),
        out_shape=jax.ShapeDtypeStruct((bsz, 1, cout), jnp.float32),
        in_specs=[pl.BlockSpec((1, tm, cin), lambda bi, i: (bi, i, 0)),
                  pl.BlockSpec((cin, cout), lambda bi, i: (0, 0)),
                  pl.BlockSpec((1, cout), lambda bi, i: (0, 0)),
                  pl.BlockSpec((1, cout), lambda bi, i: (0, 0))],
        out_specs=pl.BlockSpec((1, 1, cout), lambda bi, i: (bi, 0, 0)),
        compiler_params=_cparams(("parallel", "arbitrary")),
        cost_estimate=_ce(2 * bsz * n * cin * cout,
                          x3d.dtype.itemsize * bsz * n * cin
                          + 2 * cin * cout + 4 * bsz * cout),
    )(x3d, w.astype(jnp.bfloat16), s, b)
    return out.reshape(bsz, cout)


def _lin_bn_relu_max_kernel(x_ref, w_ref, s_ref, b_ref, o_ref, f_ref):
    x = x_ref[0].astype(jnp.bfloat16)
    y = jnp.dot(x, w_ref[...], preferred_element_type=jnp.float32)
    y = jnp.maximum(y * s_ref[...] + b_ref[...], 0.0)
    o_ref[0] = y
    part = jnp.max(y, axis=0, keepdims=True)

    @pl.when(pl.program_id(1) == 0)
    def _init():
        f_ref[0] = part

    @pl.when(pl.program_id(1) > 0)
    def _acc():
        f_ref[0] = jnp.maximum(f_ref[0], part)


def linear_bn_relu_max(x3d, w, s, b, *, row_tile=1024):
    """Same as above but also emits the per-point output (needed downstream)."""
    bsz, n, cin = x3d.shape
    cout = w.shape[1]
    tm = _pick_tile(n, row_tile)
    o4, feat = pl.pallas_call(
        _lin_bn_relu_max_kernel,
        grid=(bsz, n // tm),
        out_shape=(jax.ShapeDtypeStruct((bsz, n, cout), jnp.float32),
                   jax.ShapeDtypeStruct((bsz, 1, cout), jnp.float32)),
        in_specs=[pl.BlockSpec((1, tm, cin), lambda bi, i: (bi, i, 0)),
                  pl.BlockSpec((cin, cout), lambda bi, i: (0, 0)),
                  pl.BlockSpec((1, cout), lambda bi, i: (0, 0)),
                  pl.BlockSpec((1, cout), lambda bi, i: (0, 0))],
        out_specs=(pl.BlockSpec((1, tm, cout), lambda bi, i: (bi, i, 0)),
                   pl.BlockSpec((1, 1, cout), lambda bi, i: (bi, 0, 0))),
        compiler_params=_cparams(("parallel", "arbitrary")),
        cost_estimate=_ce(2 * bsz * n * cin * cout,
                          x3d.dtype.itemsize * bsz * n * cin + 2 * cin * cout
                          + 4 * bsz * n * cout + 4 * bsz * cout),
    )(x3d, w.astype(jnp.bfloat16), s, b)
    return o4, feat.reshape(bsz, cout)


# ----------------------------------------------------------------------------- pairwise distances (Gram matrix, tiled, bf16 out)

def _neg_pdist_kernel(xq_ref, xk_ref, o_ref):
    xq = xq_ref[0]                                         # (TQ, C) f32
    xk = xk_ref[0]                                         # (TK, C) f32
    g = jax.lax.dot_general(xq.astype(jnp.bfloat16), xk.astype(jnp.bfloat16),
                            (((1,), (1,)), ((), ())),
                            preferred_element_type=jnp.float32)        # (TQ, TK)
    rq = jnp.sum(xq * xq, axis=-1, keepdims=True)                      # (TQ, 1)
    ones_row = jnp.ones((1, xk.shape[-1]), dtype=jnp.float32)
    rk = jax.lax.dot_general(ones_row, xk * xk, (((1,), (1,)), ((), ())),
                             preferred_element_type=jnp.float32)       # (1, TK)
    o_ref[0] = (2.0 * g - rq - rk).astype(o_ref.dtype)


def neg_pdist(x, *, q_tile=256, k_tile=512):
    b, n, c = x.shape
    tk = _pick_tile(n, k_tile, align=128)        # lane dim: 128-aligned divisor or full n
    # bound the output block even when tk falls back to the full key dim
    q_cap = max(8, min(q_tile, (2 * 1024 * 1024) // max(tk, 1)))
    tq = _pick_tile(n, q_cap, align=8)
    return pl.pallas_call(
        _neg_pdist_kernel,
        grid=(b, n // tq, n // tk),
        out_shape=jax.ShapeDtypeStruct((b, n, n), jnp.bfloat16),
        in_specs=[
            pl.BlockSpec((1, tq, c), lambda bi, i, j: (bi, i, 0)),
            pl.BlockSpec((1, tk, c), lambda bi, i, j: (bi, j, 0)),
        ],
        out_specs=pl.BlockSpec((1, tq, tk), lambda bi, i, j: (bi, i, j)),
        compiler_params=_cparams(("parallel", "parallel", "parallel")),
        cost_estimate=_ce(2 * b * n * n * c, 8 * b * n * c + 2 * b * n * n),
    )(x, x)


# ----------------------------------------------------------------------------- JAX glue

def knn_indices(x, k):
    # TODO(synk): fuse a streaming top-k into the distance kernel to kill the
    # (B,N,N) HBM round trip entirely; for now distances are emitted in bf16
    # (half traffic; near-tie neighbor sets may differ from an f32 reference)
    # and top-k selection stays in lax.top_k.
    neg_d = neg_pdist(x)                              # (B, N, N) bf16
    _, idx = jax.lax.top_k(neg_d, k)                  # (B, N, k), includes self
    return idx


def gather_neighbors(feat, idx):
    # feat: (B, N, C) bf16, idx: (B, N, k) -> (B, N, k, C)
    # TODO(synk): replace with a VMEM-resident in-kernel gather (projected table
    # is only N*64*2 bytes per batch) to avoid materializing (B*N,k,64) in HBM.
    return jax.vmap(lambda fb, ib: fb[ib])(feat, idx)


def edge_projections(x_pts, w1, idx):
    """Fold conv-on-concat([x_i, x_j - x_i]) into per-point projections + gather."""
    b, n, cp = x_pts.shape
    k = idx.shape[-1]
    cout = w1.shape[1]
    # edge @ W1 = x_i @ (W_top - W_bot) + x_j @ W_bot ; single fused (cin,128) weight.
    # TODO(synk): if the reference _baseEdgeConv orders the edge feature as
    # cat([x_j - x_i, x_i]), use w_self = W[cp:] - W[:cp], w_nbr = W[:cp] instead.
    w_cat = jnp.concatenate([w1[:cp] - w1[cp:], w1[cp:]], axis=1).astype(jnp.bfloat16)
    proj = edge_proj(x_pts.reshape(b * n, cp), w_cat)           # (B*N, 2*cout) bf16
    proj = proj.reshape(b, n, 2 * cout)
    p_self = proj[..., :cout].reshape(b * n, cout)              # bf16
    p_nbr = gather_neighbors(proj[..., cout:], idx).reshape(b * n, k, cout)
    return p_self, p_nbr


def transform_net_fwd(pc, p, k):
    b, n, _ = pc.shape
    idx = knn_indices(pc, k)
    w1, s1, b1 = p["conv1"]
    ps, pn = edge_projections(pc, w1, idx)
    hmax = transform_edge(ps, pn, (s1, b1), p["conv2"])         # (B*N, 128) bf16
    # conv3 (128->1024) fused with the global max over points -> (B, 1024)
    g = linear_bn_relu_gmax(hmax.reshape(b, n, -1), *p["conv3"])
    # Tiny (B, .) rows: plain XLA dots (pallas_call overhead dominates here).
    g = jnp.maximum(g @ p["fc1"][0] * p["fc1"][1] + p["fc1"][2], 0.0)
    g = jnp.maximum(g @ p["fc2"][0] * p["fc2"][1] + p["fc2"][2], 0.0)
    t = g @ p["fc3_w"] + p["fc3_b"]                             # (B, 9), bias init = I
    return t.reshape(b, 3, 3)


def dgcnn_seg_feature_fwd(pc, classes_labels, params, *, k):
    # pc: (B, N, 3), classes_labels: (B, num_classes)
    b, n, _ = pc.shape

    transform = transform_net_fwd(pc, params["transform"], k)
    # (tn,3)@(3,3) is pure MXU waste in a Pallas kernel -> plain XLA einsum.
    x = jnp.einsum("bnc,bcd->bnd", pc, transform)               # (B, N, 3)

    # ---- EdgeConv block 1 (6->64 per edge, 64->64 per edge, max/mean over k, 128->64)
    idx = knn_indices(x, k)
    w1, s1, b1 = params["ec1_1"]
    ps, pn = edge_projections(x, w1, idx)
    mm1, o1 = edgeconv_block1(ps, pn, (s1, b1), params["ec1_2"], params["ec1_3"])

    # ---- EdgeConv block 2
    x2 = o1.reshape(b, n, -1)
    idx = knn_indices(x2, k)
    w1, s1, b1 = params["ec2_1"]
    ps, pn = edge_projections(x2, w1, idx)
    mm2, o2 = edgeconv_block23(ps, pn, (s1, b1), params["ec2_2"])

    # ---- EdgeConv block 3
    x3 = o2.reshape(b, n, -1)
    idx = knn_indices(x3, k)
    w1, s1, b1 = params["ec3_1"]
    ps, pn = edge_projections(x3, w1, idx)
    mm3, o3 = edgeconv_block23(ps, pn, (s1, b1), params["ec3_2"])

    # ---- point MLP (192 -> 1024) fused with the global max over points
    mlp_in = jnp.concatenate([o1, o2, o3], axis=-1).reshape(b, n, -1)
    o4, feature = linear_bn_relu_max(mlp_in, *params["mlp"])    # (B,N,1024), (B,1024)

    # one-hot class expansion: tiny (B, num_classes) rows -> plain XLA
    w, s, bb = params["one_hot"]
    one_hot_expand = jnp.maximum(classes_labels @ w * s + bb, 0.0)     # (B, 128)

    glob = jnp.concatenate([feature, one_hot_expand], axis=-1)         # (B, 1152)
    glob = jnp.broadcast_to(glob[:, None, :], (b, n, glob.shape[-1]))

    pp = lambda a: a.reshape(b, n, -1)
    # mm_i == [net_max_i || net_mean_i] so the concat order matches the torch cat.
    concat = jnp.concatenate(
        [glob, pp(mm1), pp(o1), pp(mm2), pp(o2), pp(mm3), pp(o3), o4],
        axis=-1)                                                # (B, N, 2752)

    return feature, concat


# ----------------------------------------------------------------------------- params

def _conv_params(key, cin, cout):
    kw, ks, kb = jax.random.split(key, 3)
    w = 0.1 * jax.random.normal(kw, (cin, cout), jnp.float32)
    s = 1.0 + 0.05 * jax.random.normal(ks, (1, cout), jnp.float32)   # folded BN scale
    b = 0.05 * jax.random.normal(kb, (1, cout), jnp.float32)         # folded BN bias
    return (w, s, b)


def init_params(key, num_classes=16):
    keys = jax.random.split(key, 20)
    params = {
        "transform": {
            "conv1": _conv_params(keys[0], 6, 64),
            "conv2": _conv_params(keys[1], 64, 128),
            "conv3": _conv_params(keys[2], 128, 1024),
            "fc1": _conv_params(keys[3], 1024, 512),
            "fc2": _conv_params(keys[4], 512, 256),
            "fc3_w": 0.01 * jax.random.normal(keys[5], (256, 9), jnp.float32),
            "fc3_b": jnp.eye(3, dtype=jnp.float32).reshape(1, 9),
        },
        "ec1_1": _conv_params(keys[6], 6, 64),
        "ec1_2": _conv_params(keys[7], 64, 64),
        "ec1_3": _conv_params(keys[8], 128, 64),
        "ec2_1": _conv_params(keys[9], 128, 64),
        "ec2_2": _conv_params(keys[10], 128, 64),
        "ec3_1": _conv_params(keys[11], 128, 64),
        "ec3_2": _conv_params(keys[12], 128, 64),
        "mlp": _conv_params(keys[13], 192, 1024),
        "one_hot": _conv_params(keys[14], num_classes, 128),
    }
    return params


# ----------------------------------------------------------------------------- main

if __name__ == "__main__":
    B, N, K, NUM_CLASSES = 2, 16, 4, 16

    key = jax.random.PRNGKey(0)
    kpc, klab, kparam = jax.random.split(key, 3)

    pc = jax.random.normal(kpc, (B, N, 3), jnp.float32)                 # (B, N, 3)
    labels = jnp.eye(NUM_CLASSES, dtype=jnp.float32)[
        jax.random.randint(klab, (B,), 0, NUM_CLASSES)]                 # (B, num_classes)

    params = init_params(kparam, NUM_CLASSES)

    fwd = jax.jit(functools.partial(dgcnn_seg_feature_fwd, k=K))
    feature, concat = fwd(pc, labels, params)
    jax.block_until_ready((feature, concat))

    assert feature.shape == (B, 1024)
    assert concat.shape == (B, N, 1024 + 128 + 9 * 64 + 1024)           # (B, N, 2752)
    assert bool(jnp.all(jnp.isfinite(feature))) and bool(jnp.all(jnp.isfinite(concat)))

    print("KERNEL_OK")
</pallas_src>

<mosaic_0001>
module attributes {stable_mosaic.version = 11 : i64} {
  func.func @_neg_pdist_kernel(%arg0: i32, %arg1: i32, %arg2: i32, %arg3: memref<1x16x3xf32, #tpu.memory_space<vmem>>, %arg4: memref<1x16x3xf32, #tpu.memory_space<vmem>>, %arg5: memref<1x16x16xbf16, #tpu.memory_space<vmem>>) attributes {dimension_semantics = [#tpu.dimension_semantics<parallel>, #tpu.dimension_semantics<parallel>, #tpu.dimension_semantics<parallel>], iteration_bounds = array<i64: 2, 1, 1>, scalar_prefetch = 0 : i64, scratch_operands = 0 : i64, tpu.core_type = #tpu.core_type<tc>, window_params = [{transform_indices = @transform_0, window_bounds = array<i64: 1, 16, 3>}, {transform_indices = @transform_1, window_bounds = array<i64: 1, 16, 3>}, {transform_indices = @transform_2, window_bounds = array<i64: 1, 16, 16>}]} {
    %c0 = arith.constant 0 : index
    %c0_0 = arith.constant 0 : index
    %c0_1 = arith.constant 0 : index
    %0 = vector.load %arg3[%c0, %c0_0, %c0_1] : memref<1x16x3xf32, #tpu.memory_space<vmem>>, vector<1x16x3xf32>
    %1 = vector.shape_cast %0 : vector<1x16x3xf32> to vector<16x3xf32>
    %c0_2 = arith.constant 0 : index
    %c0_3 = arith.constant 0 : index
    %c0_4 = arith.constant 0 : index
    %2 = vector.load %arg4[%c0_2, %c0_3, %c0_4] : memref<1x16x3xf32, #tpu.memory_space<vmem>>, vector<1x16x3xf32>
    %3 = vector.shape_cast %2 : vector<1x16x3xf32> to vector<16x3xf32>
    %4 = arith.truncf %1 : vector<16x3xf32> to vector<16x3xbf16>
    %5 = arith.truncf %3 : vector<16x3xf32> to vector<16x3xbf16>
    %cst = arith.constant dense<0.000000e+00> : vector<16x16xf32>
    %6 = tpu.matmul %4, %5, %cst {dimension_numbers = #tpu.dot_dimension_numbers<[1], [1], [0], [0], [0, 0, 1, 0], [], []>} : vector<16x3xbf16>, vector<16x3xbf16>, vector<16x16xf32> -> vector<16x16xf32>
    %7 = arith.mulf %1, %1 : vector<16x3xf32>
    %cst_5 = arith.constant dense<0.000000e+00> : vector<16xf32>
    %8 = vector.multi_reduction <add>, %7, %cst_5 [1] : vector<16x3xf32> to vector<16xf32>
    %9 = vector.shape_cast %8 : vector<16xf32> to vector<16x1xf32>
    %cst_6 = arith.constant 1.000000e+00 : f32
    %10 = vector.broadcast %cst_6 : f32 to vector<1x3xf32>
    %11 = arith.mulf %3, %3 : vector<16x3xf32>
    %cst_7 = arith.constant dense<0.000000e+00> : vector<1x16xf32>
    %12 = tpu.matmul %10, %11, %cst_7 {dimension_numbers = #tpu.dot_dimension_numbers<[1], [1], [0], [0], [0, 0, 1, 0], [], []>} : vector<1x3xf32>, vector<16x3xf32>, vector<1x16xf32> -> vector<1x16xf32>
    %cst_8 = arith.constant 2.000000e+00 : f32
    %13 = vector.broadcast %cst_8 : f32 to vector<16x16xf32>
    %14 = arith.mulf %13, %6 : vector<16x16xf32>
    %15 = vector.broadcast %9 : vector<16x1xf32> to vector<16x16xf32>
    %16 = arith.subf %14, %15 : vector<16x16xf32>
    %17 = vector.broadcast %12 : vector<1x16xf32> to vector<16x16xf32>
    %18 = arith.subf %16, %17 : vector<16x16xf32>
    %19 = arith.truncf %18 : vector<16x16xf32> to vector<16x16xbf16>
    %c0_9 = arith.constant 0 : index
    %c0_10 = arith.constant 0 : index
    %c0_11 = arith.constant 0 : index
    %20 = vector.load %arg5[%c0_9, %c0_10, %c0_11] : memref<1x16x16xbf16, #tpu.memory_space<vmem>>, vector<1x16x16xbf16>
    %21 = vector.shape_cast %20 : vector<1x16x16xbf16> to vector<16x16xbf16>
    %22 = vector.shape_cast %19 : vector<16x16xbf16> to vector<1x16x16xbf16>
    tpu.vector_store %arg5[%c0_9, %c0_10, %c0_11], %22 {strides = array<i32>} : memref<1x16x16xbf16, #tpu.memory_space<vmem>>, vector<1x16x16xbf16>,
    return
  }
  func.func @transform_0(%arg0: i32, %arg1: i32, %arg2: i32) -> (i32, i32, i32) {
    %c0_i32 = arith.constant 0 : i32
    %c0_i32_0 = arith.constant 0 : i32
    return %arg0, %arg1, %c0_i32 : i32, i32, i32
  }
  func.func @transform_1(%arg0: i32, %arg1: i32, %arg2: i32) -> (i32, i32, i32) {
    %c0_i32 = arith.constant 0 : i32
    %c0_i32_0 = arith.constant 0 : i32
    return %arg0, %arg2, %c0_i32 : i32, i32, i32
  }
  func.func @transform_2(%arg0: i32, %arg1: i32, %arg2: i32) -> (i32, i32, i32) {
    %c0_i32 = arith.constant 0 : i32
    return %arg0, %arg1, %arg2 : i32, i32, i32
  }
}

module attributes {stable_mosaic.version = 11 : i64} {
  func.func @_edge_proj_kernel(%arg0: i32, %arg1: memref<32x3xf32, #tpu.memory_space<vmem>>, %arg2: memref<3x128xbf16, #tpu.memory_space<vmem>>, %arg3: memref<32x128xbf16, #tpu.memory_space<vmem>>) attributes {dimension_semantics = [#tpu.dimension_semantics<parallel>], iteration_bounds = array<i64: 1>, scalar_prefetch = 0 : i64, scratch_operands = 0 : i64, tpu.core_type = #tpu.core_type<tc>, window_params = [{transform_indices = @transform_0, window_bounds = array<i64: 32, 3>}, {pipeline_mode = #tpu.pipeline_mode<synchronous>, transform_indices = @transform_1, window_bounds = array<i64: 3, 128>}, {transform_indices = @transform_2, window_bounds = array<i64: 32, 128>}]} {
    %c0 = arith.constant 0 : index
    %c0_0 = arith.constant 0 : index
    %0 = vector.load %arg1[%c0, %c0_0] : memref<32x3xf32, #tpu.memory_space<vmem>>, vector<32x3xf32>
    %1 = arith.truncf %0 : vector<32x3xf32> to vector<32x3xbf16>
    %c0_1 = arith.constant 0 : index
    %c0_2 = arith.constant 0 : index
    %2 = vector.load %arg2[%c0_1, %c0_2] : memref<3x128xbf16, #tpu.memory_space<vmem>>, vector<3x128xbf16>
    %cst = arith.constant dense<0.000000e+00> : vector<32x128xf32>
    %3 = tpu.matmul %1, %2, %cst {dimension_numbers = #tpu.dot_dimension_numbers<[1], [0], [0], [1], [0, 0, 1, 1], [], []>} : vector<32x3xbf16>, vector<3x128xbf16>, vector<32x128xf32> -> vector<32x128xf32>
    %4 = arith.truncf %3 : vector<32x128xf32> to vector<32x128xbf16>
    %c0_3 = arith.constant 0 : index
    %c0_4 = arith.constant 0 : index
    %5 = vector.load %arg3[%c0_3, %c0_4] : memref<32x128xbf16, #tpu.memory_space<vmem>>, vector<32x128xbf16>
    tpu.vector_store %arg3[%c0_3, %c0_4], %4 {strides = array<i32>} : memref<32x128xbf16, #tpu.memory_space<vmem>>, vector<32x128xbf16>,
    return
  }
  func.func @transform_0(%arg0: i32) -> (i32, i32) {
    %c0_i32 = arith.constant 0 : i32
    %c0_i32_0 = arith.constant 0 : i32
    return %arg0, %c0_i32 : i32, i32
  }
  func.func @transform_1(%arg0: i32) -> (i32, i32) {
    %c0_i32 = arith.constant 0 : i32
    %c0_i32_0 = arith.constant 0 : i32
    %c0_i32_1 = arith.constant 0 : i32
    return %c0_i32, %c0_i32_0 : i32, i32
  }
  func.func @transform_2(%arg0: i32) -> (i32, i32) {
    %c0_i32 = arith.constant 0 : i32
    %c0_i32_0 = arith.constant 0 : i32
    return %arg0, %c0_i32 : i32, i32
  }
}

module attributes {stable_mosaic.version = 11 : i64} {
  func.func @_transform_edge_kernel(%arg0: i32, %arg1: memref<32x64xbf16, #tpu.memory_space<vmem>>, %arg2: memref<32x4x64xbf16, #tpu.memory_space<vmem>>, %arg3: memref<1x64xf32, #tpu.memory_space<vmem>>, %arg4: memref<1x64xf32, #tpu.memory_space<vmem>>, %arg5: memref<64x128xbf16, #tpu.memory_space<vmem>>, %arg6: memref<1x128xf32, #tpu.memory_space<vmem>>, %arg7: memref<1x128xf32, #tpu.memory_space<vmem>>, %arg8: memref<32x128xbf16, #tpu.memory_space<vmem>>) attributes {dimension_semantics = [#tpu.dimension_semantics<parallel>], iteration_bounds = array<i64: 1>, scalar_prefetch = 0 : i64, scratch_operands = 0 : i64, tpu.core_type = #tpu.core_type<tc>, window_params = [{transform_indices = @transform_0, window_bounds = array<i64: 32, 64>}, {transform_indices = @transform_1, window_bounds = array<i64: 32, 4, 64>}, {pipeline_mode = #tpu.pipeline_mode<synchronous>, transform_indices = @transform_2, window_bounds = array<i64: 1, 64>}, {pipeline_mode = #tpu.pipeline_mode<synchronous>, transform_indices = @transform_3, window_bounds = array<i64: 1, 64>}, {pipeline_mode = #tpu.pipeline_mode<synchronous>, transform_indices = @transform_4, window_bounds = array<i64: 64, 128>}, {pipeline_mode = #tpu.pipeline_mode<synchronous>, transform_indices = @transform_5, window_bounds = array<i64: 1, 128>}, {pipeline_mode = #tpu.pipeline_mode<synchronous>, transform_indices = @transform_6, window_bounds = array<i64: 1, 128>}, {transform_indices = @transform_7, window_bounds = array<i64: 32, 128>}]} {
    %c0 = arith.constant 0 : index
    %c0_0 = arith.constant 0 : index
    %0 = vector.load %arg1[%c0, %c0_0] : memref<32x64xbf16, #tpu.memory_space<vmem>>, vector<32x64xbf16>
    %1 = arith.extf %0 : vector<32x64xbf16> to vector<32x64xf32>
    %c0_1 = arith.constant 0 : index
    %c0_2 = arith.constant 0 : index
    %c0_3 = arith.constant 0 : index
    %2 = vector.load %arg2[%c0_1, %c0_2, %c0_3] : memref<32x4x64xbf16, #tpu.memory_space<vmem>>, vector<32x4x64xbf16>
    %3 = arith.extf %2 : vector<32x4x64xbf16> to vector<32x4x64xf32>
    %c0_4 = arith.constant 0 : index
    %c0_5 = arith.constant 0 : index
    %4 = vector.load %arg3[%c0_4, %c0_5] : memref<1x64xf32, #tpu.memory_space<vmem>>, vector<1x64xf32>
    %c0_6 = arith.constant 0 : index
    %c0_7 = arith.constant 0 : index
    %5 = vector.load %arg4[%c0_6, %c0_7] : memref<1x64xf32, #tpu.memory_space<vmem>>, vector<1x64xf32>
    %6 = vector.extract_strided_slice %3 {offsets = [0, 0, 0], sizes = [32, 1, 64], strides = [1, 1, 1]} : vector<32x4x64xf32> to vector<32x1x64xf32>
    %7 = vector.shape_cast %6 : vector<32x1x64xf32> to vector<32x64xf32>
    %8 = arith.addf %1, %7 : vector<32x64xf32>
    %9 = vector.broadcast %4 : vector<1x64xf32> to vector<32x64xf32>
    %10 = arith.mulf %8, %9 : vector<32x64xf32>
    %11 = vector.broadcast %5 : vector<1x64xf32> to vector<32x64xf32>
    %12 = arith.addf %10, %11 : vector<32x64xf32>
    %cst = arith.constant 0.000000e+00 : f32
    %13 = vector.broadcast %cst : f32 to vector<32x64xf32>
    %14 = arith.maximumf %12, %13 : vector<32x64xf32>
    %15 = vector.extract_strided_slice %3 {offsets = [0, 1, 0], sizes = [32, 1, 64], strides = [1, 1, 1]} : vector<32x4x64xf32> to vector<32x1x64xf32>
    %16 = vector.shape_cast %15 : vector<32x1x64xf32> to vector<32x64xf32>
    %17 = arith.addf %1, %16 : vector<32x64xf32>
    %18 = vector.broadcast %4 : vector<1x64xf32> to vector<32x64xf32>
    %19 = arith.mulf %17, %18 : vector<32x64xf32>
    %20 = vector.broadcast %5 : vector<1x64xf32> to vector<32x64xf32>
    %21 = arith.addf %19, %20 : vector<32x64xf32>
    %cst_8 = arith.constant 0.000000e+00 : f32
    %22 = vector.broadcast %cst_8 : f32 to vector<32x64xf32>
    %23 = arith.maximumf %21, %22 : vector<32x64xf32>
    %24 = vector.extract_strided_slice %3 {offsets = [0, 2, 0], sizes = [32, 1, 64], strides = [1, 1, 1]} : vector<32x4x64xf32> to vector<32x1x64xf32>
    %25 = vector.shape_cast %24 : vector<32x1x64xf32> to vector<32x64xf32>
    %26 = arith.addf %1, %25 : vector<32x64xf32>
    %27 = vector.broadcast %4 : vector<1x64xf32> to vector<32x64xf32>
    %28 = arith.mulf %26, %27 : vector<32x64xf32>
    %29 = vector.broadcast %5 : vector<1x64xf32> to vector<32x64xf32>
    %30 = arith.addf %28, %29 : vector<32x64xf32>
    %cst_9 = arith.constant 0.000000e+00 : f32
    %31 = vector.broadcast %cst_9 : f32 to vector<32x64xf32>
    %32 = arith.maximumf %30, %31 : vector<32x64xf32>
    %33 = vector.extract_strided_slice %3 {offsets = [0, 3, 0], sizes = [32, 1, 64], strides = [1, 1, 1]} : vector<32x4x64xf32> to vector<32x1x64xf32>
    %34 = vector.shape_cast %33 : vector<32x1x64xf32> to vector<32x64xf32>
    %35 = arith.addf %1, %34 : vector<32x64xf32>
    %36 = vector.broadcast %4 : vector<1x64xf32> to vector<32x64xf32>
    %37 = arith.mulf %35, %36 : vector<32x64xf32>
    %38 = vector.broadcast %5 : vector<1x64xf32> to vector<32x64xf32>
    %39 = arith.addf %37, %38 : vector<32x64xf32>
    %cst_10 = arith.constant 0.000000e+00 : f32
    %40 = vector.broadcast %cst_10 : f32 to vector<32x64xf32>
    %41 = arith.maximumf %39, %40 : vector<32x64xf32>
    %42 = tpu.concatenate %14, %23, %32, %41 in 0 : vector<32x64xf32>, vector<32x64xf32>, vector<32x64xf32>, vector<32x64xf32> -> vector<128x64xf32>
    %43 = arith.truncf %42 : vector<128x64xf32> to vector<128x64xbf16>
    %c0_11 = arith.constant 0 : index
    %c0_12 = arith.constant 0 : index
    %44 = vector.load %arg5[%c0_11, %c0_12] : memref<64x128xbf16, #tpu.memory_space<vmem>>, vector<64x128xbf16>
    %cst_13 = arith.constant dense<0.000000e+00> : vector<128x128xf32>
    %45 = tpu.matmul %43, %44, %cst_13 {dimension_numbers = #tpu.dot_dimension_numbers<[1], [0], [0], [1], [0, 0, 1, 1], [], []>} : vector<128x64xbf16>, vector<64x128xbf16>, vector<128x128xf32> -> vector<128x128xf32>
    %c0_14 = arith.constant 0 : index
    %c0_15 = arith.constant 0 : index
    %46 = vector.load %arg6[%c0_14, %c0_15] : memref<1x128xf32, #tpu.memory_space<vmem>>, vector<1x128xf32>
    %47 = vector.broadcast %46 : vector<1x128xf32> to vector<128x128xf32>
    %48 = arith.mulf %45, %47 : vector<128x128xf32>
    %c0_16 = arith.constant 0 : index
    %c0_17 = arith.constant 0 : index
    %49 = vector.load %arg7[%c0_16, %c0_17] : memref<1x128xf32, #tpu.memory_space<vmem>>, vector<1x128xf32>
    %50 = vector.broadcast %49 : vector<1x128xf32> to vector<128x128xf32>
    %51 = arith.addf %48, %50 : vector<128x128xf32>
    %cst_18 = arith.constant 0.000000e+00 : f32
    %52 = vector.broadcast %cst_18 : f32 to vector<128x128xf32>
    %53 = arith.maximumf %51, %52 : vector<128x128xf32>
    %54 = vector.extract_strided_slice %53 {offsets = [0, 0], sizes = [32, 128], strides = [1, 1]} : vector<128x128xf32> to vector<32x128xf32>
    %55 = vector.extract_strided_slice %53 {offsets = [32, 0], sizes = [32, 128], strides = [1, 1]} : vector<128x128xf32> to vector<32x128xf32>
    %56 = arith.maximumf %54, %55 : vector<32x128xf32>
    %57 = vector.extract_strided_slice %53 {offsets = [64, 0], sizes = [32, 128], strides = [1, 1]} : vector<128x128xf32> to vector<32x128xf32>
    %58 = arith.maximumf %56, %57 : vector<32x128xf32>
    %59 = vector.extract_strided_slice %53 {offsets = [96, 0], sizes = [32, 128], strides = [1, 1]} : vector<128x128xf32> to vector<32x128xf32>
    %60 = arith.maximumf %58, %59 : vector<32x128xf32>
    %61 = arith.truncf %60 : vector<32x128xf32> to vector<32x128xbf16>
    %c0_19 = arith.constant 0 : index
    %c0_20 = arith.constant 0 : index
    %62 = vector.load %arg8[%c0_19, %c0_20] : memref<32x128xbf16, #tpu.memory_space<vmem>>, vector<32x128xbf16>
    tpu.vector_store %arg8[%c0_19, %c0_20], %61 {strides = array<i32>} : memref<32x128xbf16, #tpu.memory_space<vmem>>, vector<32x128xbf16>,
    return
  }
  func.func @transform_0(%arg0: i32) -> (i32, i32) {
    %c0_i32 = arith.constant 0 : i32
    %c0_i32_0 = arith.constant 0 : i32
    return %arg0, %c0_i32 : i32, i32
  }
  func.func @transform_1(%arg0: i32) -> (i32, i32, i32) {
    %c0_i32 = arith.constant 0 : i32
    %c0_i32_0 = arith.constant 0 : i32
    %c0_i32_1 = arith.constant 0 : i32
    return %arg0, %c0_i32, %c0_i32_0 : i32, i32, i32
  }
  func.func @transform_2(%arg0: i32) -> (i32, i32) {
    %c0_i32 = arith.constant 0 : i32
    %c0_i32_0 = arith.constant 0 : i32
    %c0_i32_1 = arith.constant 0 : i32
    return %c0_i32, %c0_i32_0 : i32, i32
  }
  func.func @transform_3(%arg0: i32) -> (i32, i32) {
    %c0_i32 = arith.constant 0 : i32
    %c0_i32_0 = arith.constant 0 : i32
    %c0_i32_1 = arith.constant 0 : i32
    return %c0_i32, %c0_i32_0 : i32, i32
  }
  func.func @transform_4(%arg0: i32) -> (i32, i32) {
    %c0_i32 = arith.constant 0 : i32
    %c0_i32_0 = arith.constant 0 : i32
    %c0_i32_1 = arith.constant 0 : i32
    return %c0_i32, %c0_i32_0 : i32, i32
  }
  func.func @transform_5(%arg0: i32) -> (i32, i32) {
    %c0_i32 = arith.constant 0 : i32
    %c0_i32_0 = arith.constant 0 : i32
    %c0_i32_1 = arith.constant 0 : i32
    return %c0_i32, %c0_i32_0 : i32, i32
  }
  func.func @transform_6(%arg0: i32) -> (i32, i32) {
    %c0_i32 = arith.constant 0 : i32
    %c0_i32_0 = arith.constant 0 : i32
    %c0_i32_1 = arith.constant 0 : i32
    return %c0_i32, %c0_i32_0 : i32, i32
  }
  func.func @transform_7(%arg0: i32) -> (i32, i32) {
    %c0_i32 = arith.constant 0 : i32
    %c0_i32_0 = arith.constant 0 : i32
    return %arg0, %c0_i32 : i32, i32
  }
}

module attributes {stable_mosaic.version = 11 : i64} {
  func.func @_lin_bn_relu_gmax_kernel(%arg0: i32, %arg1: i32, %arg2: memref<1x16x128xbf16, #tpu.memory_space<vmem>>, %arg3: memref<128x1024xbf16, #tpu.memory_space<vmem>>, %arg4: memref<1x1024xf32, #tpu.memory_space<vmem>>, %arg5: memref<1x1024xf32, #tpu.memory_space<vmem>>, %arg6: memref<1x1x1024xf32, #tpu.memory_space<vmem>>) attributes {dimension_semantics = [#tpu.dimension_semantics<parallel>, #tpu.dimension_semantics<arbitrary>], iteration_bounds = array<i64: 2, 1>, scalar_prefetch = 0 : i64, scratch_operands = 0 : i64, tpu.core_type = #tpu.core_type<tc>, window_params = [{transform_indices = @transform_0, window_bounds = array<i64: 1, 16, 128>}, {pipeline_mode = #tpu.pipeline_mode<synchronous>, transform_indices = @transform_1, window_bounds = array<i64: 128, 1024>}, {pipeline_mode = #tpu.pipeline_mode<synchronous>, transform_indices = @transform_2, window_bounds = array<i64: 1, 1024>}, {pipeline_mode = #tpu.pipeline_mode<synchronous>, transform_indices = @transform_3, window_bounds = array<i64: 1, 1024>}, {transform_indices = @transform_4, window_bounds = array<i64: 1, 1, 1024>}]} {
    %c0 = arith.constant 0 : index
    %c0_0 = arith.constant 0 : index
    %c0_1 = arith.constant 0 : index
    %0 = vector.load %arg2[%c0, %c0_0, %c0_1] : memref<1x16x128xbf16, #tpu.memory_space<vmem>>, vector<1x16x128xbf16>
    %1 = vector.shape_cast %0 : vector<1x16x128xbf16> to vector<16x128xbf16>
    %c0_2 = arith.constant 0 : index
    %c0_3 = arith.constant 0 : index
    %2 = vector.load %arg3[%c0_2, %c0_3] : memref<128x1024xbf16, #tpu.memory_space<vmem>>, vector<128x1024xbf16>
    %cst = arith.constant dense<0.000000e+00> : vector<16x1024xf32>
    %3 = tpu.matmul %1, %2, %cst {dimension_numbers = #tpu.dot_dimension_numbers<[1], [0], [0], [1], [0, 0, 1, 1], [], []>} : vector<16x128xbf16>, vector<128x1024xbf16>, vector<16x1024xf32> -> vector<16x1024xf32>
    %c0_4 = arith.constant 0 : index
    %c0_5 = arith.constant 0 : index
    %4 = vector.load %arg4[%c0_4, %c0_5] : memref<1x1024xf32, #tpu.memory_space<vmem>>, vector<1x1024xf32>
    %5 = vector.broadcast %4 : vector<1x1024xf32> to vector<16x1024xf32>
    %6 = arith.mulf %3, %5 : vector<16x1024xf32>
    %c0_6 = arith.constant 0 : index
    %c0_7 = arith.constant 0 : index
    %7 = vector.load %arg5[%c0_6, %c0_7] : memref<1x1024xf32, #tpu.memory_space<vmem>>, vector<1x1024xf32>
    %8 = vector.broadcast %7 : vector<1x1024xf32> to vector<16x1024xf32>
    %9 = arith.addf %6, %8 : vector<16x1024xf32>
    %cst_8 = arith.constant 0.000000e+00 : f32
    %10 = vector.broadcast %cst_8 : f32 to vector<16x1024xf32>
    %11 = arith.maximumf %9, %10 : vector<16x1024xf32>
    %cst_9 = arith.constant dense<0xFF800000> : vector<1024xf32>
    %12 = vector.multi_reduction <maximumf>, %11, %cst_9 [0] : vector<16x1024xf32> to vector<1024xf32>
    %13 = vector.shape_cast %12 : vector<1024xf32> to vector<1x1024xf32>
    %c0_i32 = arith.constant 0 : i32
    %14 = arith.cmpi eq, %arg1, %c0_i32 : i32
    %15 = arith.extui %14 : i1 to i32
    %c0_i32_10 = arith.constant 0 : i32
    %16 = arith.cmpi ne, %15, %c0_i32_10 : i32
    scf.if %16 {
      %c0_13 = arith.constant 0 : index
      %c0_14 = arith.constant 0 : index
      %c0_15 = arith.constant 0 : index
      %20 = vector.load %arg6[%c0_13, %c0_14, %c0_15] : memref<1x1x1024xf32, #tpu.memory_space<vmem>>, vector<1x1x1024xf32>
      %21 = vector.shape_cast %20 : vector<1x1x1024xf32> to vector<1x1024xf32>
      %22 = vector.shape_cast %13 : vector<1x1024xf32> to vector<1x1x1024xf32>
      tpu.vector_store %arg6[%c0_13, %c0_14, %c0_15], %22 {strides = array<i32>} : memref<1x1x1024xf32, #tpu.memory_space<vmem>>, vector<1x1x1024xf32>,
    } else {
    }
    %c0_i32_11 = arith.constant 0 : i32
    %17 = arith.cmpi sgt, %arg1, %c0_i32_11 : i32
    %18 = arith.extui %17 : i1 to i32
    %c0_i32_12 = arith.constant 0 : i32
    %19 = arith.cmpi ne, %18, %c0_i32_12 : i32
    scf.if %19 {
      %c0_13 = arith.constant 0 : index
      %c0_14 = arith.constant 0 : index
      %c0_15 = arith.constant 0 : index
      %20 = vector.load %arg6[%c0_13, %c0_14, %c0_15] : memref<1x1x1024xf32, #tpu.memory_space<vmem>>, vector<1x1x1024xf32>
      %21 = vector.shape_cast %20 : vector<1x1x1024xf32> to vector<1x1024xf32>
      %22 = arith.maximumf %21, %13 : vector<1x1024xf32>
      %c0_16 = arith.constant 0 : index
      %c0_17 = arith.constant 0 : index
      %c0_18 = arith.constant 0 : index
      %23 = vector.load %arg6[%c0_16, %c0_17, %c0_18] : memref<1x1x1024xf32, #tpu.memory_space<vmem>>, vector<1x1x1024xf32>
      %24 = vector.shape_cast %23 : vector<1x1x1024xf32> to vector<1x1024xf32>
      %25 = vector.shape_cast %22 : vector<1x1024xf32> to vector<1x1x1024xf32>
      tpu.vector_store %arg6[%c0_16, %c0_17, %c0_18], %25 {strides = array<i32>} : memref<1x1x1024xf32, #tpu.memory_space<vmem>>, vector<1x1x1024xf32>,
    } else {
    }
    return
  }
  func.func @transform_0(%arg0: i32, %arg1: i32) -> (i32, i32, i32) {
    %c0_i32 = arith.constant 0 : i32
    %c0_i32_0 = arith.constant 0 : i32
    return %arg0, %arg1, %c0_i32 : i32, i32, i32
  }
  func.func @transform_1(%arg0: i32, %arg1: i32) -> (i32, i32) {
    %c0_i32 = arith.constant 0 : i32
    %c0_i32_0 = arith.constant 0 : i32
    %c0_i32_1 = arith.constant 0 : i32
    return %c0_i32, %c0_i32_0 : i32, i32
  }
  func.func @transform_2(%arg0: i32, %arg1: i32) -> (i32, i32) {
    %c0_i32 = arith.constant 0 : i32
    %c0_i32_0 = arith.constant 0 : i32
    %c0_i32_1 = arith.constant 0 : i32
    return %c0_i32, %c0_i32_0 : i32, i32
  }
  func.func @transform_3(%arg0: i32, %arg1: i32) -> (i32, i32) {
    %c0_i32 = arith.constant 0 : i32
    %c0_i32_0 = arith.constant 0 : i32
    %c0_i32_1 = arith.constant 0 : i32
    return %c0_i32, %c0_i32_0 : i32, i32
  }
  func.func @transform_4(%arg0: i32, %arg1: i32) -> (i32, i32, i32) {
    %c0_i32 = arith.constant 0 : i32
    %c0_i32_0 = arith.constant 0 : i32
    %c0_i32_1 = arith.constant 0 : i32
    return %arg0, %c0_i32, %c0_i32_0 : i32, i32, i32
  }
}

module attributes {stable_mosaic.version = 11 : i64} {
  func.func @_edgeconv_block1_kernel(%arg0: i32, %arg1: memref<32x64xbf16, #tpu.memory_space<vmem>>, %arg2: memref<32x4x64xbf16, #tpu.memory_space<vmem>>, %arg3: memref<1x64xf32, #tpu.memory_space<vmem>>, %arg4: memref<1x64xf32, #tpu.memory_space<vmem>>, %arg5: memref<64x64xbf16, #tpu.memory_space<vmem>>, %arg6: memref<1x64xf32, #tpu.memory_space<vmem>>, %arg7: memref<1x64xf32, #tpu.memory_space<vmem>>, %arg8: memref<128x64xbf16, #tpu.memory_space<vmem>>, %arg9: memref<1x64xf32, #tpu.memory_space<vmem>>, %arg10: memref<1x64xf32, #tpu.memory_space<vmem>>, %arg11: memref<32x128xf32, #tpu.memory_space<vmem>>, %arg12: memref<32x64xf32, #tpu.memory_space<vmem>>) attributes {dimension_semantics = [#tpu.dimension_semantics<parallel>], iteration_bounds = array<i64: 1>, scalar_prefetch = 0 : i64, scratch_operands = 0 : i64, tpu.core_type = #tpu.core_type<tc>, window_params = [{transform_indices = @transform_0, window_bounds = array<i64: 32, 64>}, {transform_indices = @transform_1, window_bounds = array<i64: 32, 4, 64>}, {pipeline_mode = #tpu.pipeline_mode<synchronous>, transform_indices = @transform_2, window_bounds = array<i64: 1, 64>}, {pipeline_mode = #tpu.pipeline_mode<synchronous>, transform_indices = @transform_3, window_bounds = array<i64: 1, 64>}, {pipeline_mode = #tpu.pipeline_mode<synchronous>, transform_indices = @transform_4, window_bounds = array<i64: 64, 64>}, {pipeline_mode = #tpu.pipeline_mode<synchronous>, transform_indices = @transform_5, window_bounds = array<i64: 1, 64>}, {pipeline_mode = #tpu.pipeline_mode<synchronous>, transform_indices = @transform_6, window_bounds = array<i64: 1, 64>}, {pipeline_mode = #tpu.pipeline_mode<synchronous>, transform_indices = @transform_7, window_bounds = array<i64: 128, 64>}, {pipeline_mode = #tpu.pipeline_mode<synchronous>, transform_indices = @transform_8, window_bounds = array<i64: 1, 64>}, {pipeline_mode = #tpu.pipeline_mode<synchronous>, transform_indices = @transform_9, window_bounds = array<i64: 1, 64>}, {transform_indices = @transform_10, window_bounds = array<i64: 32, 128>}, {transform_indices = @transform_11, window_bounds = array<i64: 32, 64>}]} {
    %c0 = arith.constant 0 : index
    %c0_0 = arith.constant 0 : index
    %0 = vector.load %arg1[%c0, %c0_0] : memref<32x64xbf16, #tpu.memory_space<vmem>>, vector<32x64xbf16>
    %1 = arith.extf %0 : vector<32x64xbf16> to vector<32x64xf32>
    %c0_1 = arith.constant 0 : index
    %c0_2 = arith.constant 0 : index
    %c0_3 = arith.constant 0 : index
    %2 = vector.load %arg2[%c0_1, %c0_2, %c0_3] : memref<32x4x64xbf16, #tpu.memory_space<vmem>>, vector<32x4x64xbf16>
    %3 = arith.extf %2 : vector<32x4x64xbf16> to vector<32x4x64xf32>
    %c0_4 = arith.constant 0 : index
    %c0_5 = arith.constant 0 : index
    %4 = vector.load %arg3[%c0_4, %c0_5] : memref<1x64xf32, #tpu.memory_space<vmem>>, vector<1x64xf32>
    %c0_6 = arith.constant 0 : index
    %c0_7 = arith.constant 0 : index
    %5 = vector.load %arg4[%c0_6, %c0_7] : memref<1x64xf32, #tpu.memory_space<vmem>>, vector<1x64xf32>
    %6 = vector.extract_strided_slice %3 {offsets = [0, 0, 0], sizes = [32, 1, 64], strides = [1, 1, 1]} : vector<32x4x64xf32> to vector<32x1x64xf32>
    %7 = vector.shape_cast %6 : vector<32x1x64xf32> to vector<32x64xf32>
    %8 = arith.addf %1, %7 : vector<32x64xf32>
    %9 = vector.broadcast %4 : vector<1x64xf32> to vector<32x64xf32>
    %10 = arith.mulf %8, %9 : vector<32x64xf32>
    %11 = vector.broadcast %5 : vector<1x64xf32> to vector<32x64xf32>
    %12 = arith.addf %10, %11 : vector<32x64xf32>
    %cst = arith.constant 0.000000e+00 : f32
    %13 = vector.broadcast %cst : f32 to vector<32x64xf32>
    %14 = arith.maximumf %12, %13 : vector<32x64xf32>
    %15 = vector.extract_strided_slice %3 {offsets = [0, 1, 0], sizes = [32, 1, 64], strides = [1, 1, 1]} : vector<32x4x64xf32> to vector<32x1x64xf32>
    %16 = vector.shape_cast %15 : vector<32x1x64xf32> to vector<32x64xf32>
    %17 = arith.addf %1, %16 : vector<32x64xf32>
    %18 = vector.broadcast %4 : vector<1x64xf32> to vector<32x64xf32>
    %19 = arith.mulf %17, %18 : vector<32x64xf32>
    %20 = vector.broadcast %5 : vector<1x64xf32> to vector<32x64xf32>
    %21 = arith.addf %19, %20 : vector<32x64xf32>
    %cst_8 = arith.constant 0.000000e+00 : f32
    %22 = vector.broadcast %cst_8 : f32 to vector<32x64xf32>
    %23 = arith.maximumf %21, %22 : vector<32x64xf32>
    %24 = vector.extract_strided_slice %3 {offsets = [0, 2, 0], sizes = [32, 1, 64], strides = [1, 1, 1]} : vector<32x4x64xf32> to vector<32x1x64xf32>
    %25 = vector.shape_cast %24 : vector<32x1x64xf32> to vector<32x64xf32>
    %26 = arith.addf %1, %25 : vector<32x64xf32>
    %27 = vector.broadcast %4 : vector<1x64xf32> to vector<32x64xf32>
    %28 = arith.mulf %26, %27 : vector<32x64xf32>
    %29 = vector.broadcast %5 : vector<1x64xf32> to vector<32x64xf32>
    %30 = arith.addf %28, %29 : vector<32x64xf32>
    %cst_9 = arith.constant 0.000000e+00 : f32
    %31 = vector.broadcast %cst_9 : f32 to vector<32x64xf32>
    %32 = arith.maximumf %30, %31 : vector<32x64xf32>
    %33 = vector.extract_strided_slice %3 {offsets = [0, 3, 0], sizes = [32, 1, 64], strides = [1, 1, 1]} : vector<32x4x64xf32> to vector<32x1x64xf32>
    %34 = vector.shape_cast %33 : vector<32x1x64xf32> to vector<32x64xf32>
    %35 = arith.addf %1, %34 : vector<32x64xf32>
    %36 = vector.broadcast %4 : vector<1x64xf32> to vector<32x64xf32>
    %37 = arith.mulf %35, %36 : vector<32x64xf32>
    %38 = vector.broadcast %5 : vector<1x64xf32> to vector<32x64xf32>
    %39 = arith.addf %37, %38 : vector<32x64xf32>
    %cst_10 = arith.constant 0.000000e+00 : f32
    %40 = vector.broadcast %cst_10 : f32 to vector<32x64xf32>
    %41 = arith.maximumf %39, %40 : vector<32x64xf32>
    %42 = tpu.concatenate %14, %23, %32, %41 in 0 : vector<32x64xf32>, vector<32x64xf32>, vector<32x64xf32>, vector<32x64xf32> -> vector<128x64xf32>
    %43 = arith.truncf %42 : vector<128x64xf32> to vector<128x64xbf16>
    %c0_11 = arith.constant 0 : index
    %c0_12 = arith.constant 0 : index
    %44 = vector.load %arg5[%c0_11, %c0_12] : memref<64x64xbf16, #tpu.memory_space<vmem>>, vector<64x64xbf16>
    %cst_13 = arith.constant dense<0.000000e+00> : vector<128x64xf32>
    %45 = tpu.matmul %43, %44, %cst_13 {dimension_numbers = #tpu.dot_dimension_numbers<[1], [0], [0], [1], [0, 0, 1, 1], [], []>} : vector<128x64xbf16>, vector<64x64xbf16>, vector<128x64xf32> -> vector<128x64xf32>
    %c0_14 = arith.constant 0 : index
    %c0_15 = arith.constant 0 : index
    %46 = vector.load %arg6[%c0_14, %c0_15] : memref<1x64xf32, #tpu.memory_space<vmem>>, vector<1x64xf32>
    %47 = vector.broadcast %46 : vector<1x64xf32> to vector<128x64xf32>
    %48 = arith.mulf %45, %47 : vector<128x64xf32>
    %c0_16 = arith.constant 0 : index
    %c0_17 = arith.constant 0 : index
    %49 = vector.load %arg7[%c0_16, %c0_17] : memref<1x64xf32, #tpu.memory_space<vmem>>, vector<1x64xf32>
    %50 = vector.broadcast %49 : vector<1x64xf32> to vector<128x64xf32>
    %51 = arith.addf %48, %50 : vector<128x64xf32>
    %cst_18 = arith.constant 0.000000e+00 : f32
    %52 = vector.broadcast %cst_18 : f32 to vector<128x64xf32>
    %53 = arith.maximumf %51, %52 : vector<128x64xf32>
    %54 = vector.extract_strided_slice %53 {offsets = [0, 0], sizes = [32, 64], strides = [1, 1]} : vector<128x64xf32> to vector<32x64xf32>
    %55 = vector.extract_strided_slice %53 {offsets = [0, 0], sizes = [32, 64], strides = [1, 1]} : vector<128x64xf32> to vector<32x64xf32>
    %56 = vector.extract_strided_slice %53 {offsets = [32, 0], sizes = [32, 64], strides = [1, 1]} : vector<128x64xf32> to vector<32x64xf32>
    %57 = arith.maximumf %54, %56 : vector<32x64xf32>
    %58 = arith.addf %55, %56 : vector<32x64xf32>
    %59 = vector.extract_strided_slice %53 {offsets = [64, 0], sizes = [32, 64], strides = [1, 1]} : vector<128x64xf32> to vector<32x64xf32>
    %60 = arith.maximumf %57, %59 : vector<32x64xf32>
    %61 = arith.addf %58, %59 : vector<32x64xf32>
    %62 = vector.extract_strided_slice %53 {offsets = [96, 0], sizes = [32, 64], strides = [1, 1]} : vector<128x64xf32> to vector<32x64xf32>
    %63 = arith.maximumf %60, %62 : vector<32x64xf32>
    %64 = arith.addf %61, %62 : vector<32x64xf32>
    %cst_19 = arith.constant 2.500000e-01 : f32
    %65 = vector.broadcast %cst_19 : f32 to vector<32x64xf32>
    %66 = arith.mulf %64, %65 : vector<32x64xf32>
    %67 = tpu.concatenate %63, %66 in 1 : vector<32x64xf32>, vector<32x64xf32> -> vector<32x128xf32>
    %c0_20 = arith.constant 0 : index
    %c0_21 = arith.constant 0 : index
    %68 = vector.load %arg11[%c0_20, %c0_21] : memref<32x128xf32, #tpu.memory_space<vmem>>, vector<32x128xf32>
    tpu.vector_store %arg11[%c0_20, %c0_21], %67 {strides = array<i32>} : memref<32x128xf32, #tpu.memory_space<vmem>>, vector<32x128xf32>,
    %69 = arith.truncf %67 : vector<32x128xf32> to vector<32x128xbf16>
    %c0_22 = arith.constant 0 : index
    %c0_23 = arith.constant 0 : index
    %70 = vector.load %arg8[%c0_22, %c0_23] : memref<128x64xbf16, #tpu.memory_space<vmem>>, vector<128x64xbf16>
    %cst_24 = arith.constant dense<0.000000e+00> : vector<32x64xf32>
    %71 = tpu.matmul %69, %70, %cst_24 {dimension_numbers = #tpu.dot_dimension_numbers<[1], [0], [0], [1], [0, 0, 1, 1], [], []>} : vector<32x128xbf16>, vector<128x64xbf16>, vector<32x64xf32> -> vector<32x64xf32>
    %c0_25 = arith.constant 0 : index
    %c0_26 = arith.constant 0 : index
    %72 = vector.load %arg9[%c0_25, %c0_26] : memref<1x64xf32, #tpu.memory_space<vmem>>, vector<1x64xf32>
    %73 = vector.broadcast %72 : vector<1x64xf32> to vector<32x64xf32>
    %74 = arith.mulf %71, %73 : vector<32x64xf32>
    %c0_27 = arith.constant 0 : index
    %c0_28 = arith.constant 0 : index
    %75 = vector.load %arg10[%c0_27, %c0_28] : memref<1x64xf32, #tpu.memory_space<vmem>>, vector<1x64xf32>
    %76 = vector.broadcast %75 : vector<1x64xf32> to vector<32x64xf32>
    %77 = arith.addf %74, %76 : vector<32x64xf32>
    %cst_29 = arith.constant 0.000000e+00 : f32
    %78 = vector.broadcast %cst_29 : f32 to vector<32x64xf32>
    %79 = arith.maximumf %77, %78 : vector<32x64xf32>
    %c0_30 = arith.constant 0 : index
    %c0_31 = arith.constant 0 : index
    %80 = vector.load %arg12[%c0_30, %c0_31] : memref<32x64xf32, #tpu.memory_space<vmem>>, vector<32x64xf32>
    tpu.vector_store %arg12[%c0_30, %c0_31], %79 {strides = array<i32>} : memref<32x64xf32, #tpu.memory_space<vmem>>, vector<32x64xf32>,
    return
  }
  func.func @transform_0(%arg0: i32) -> (i32, i32) {
    %c0_i32 = arith.constant 0 : i32
    %c0_i32_0 = arith.constant 0 : i32
    return %arg0, %c0_i32 : i32, i32
  }
  func.func @transform_1(%arg0: i32) -> (i32, i32, i32) {
    %c0_i32 = arith.constant 0 : i32
    %c0_i32_0 = arith.constant 0 : i32
    %c0_i32_1 = arith.constant 0 : i32
    return %arg0, %c0_i32, %c0_i32_0 : i32, i32, i32
  }
  func.func @transform_2(%arg0: i32) -> (i32, i32) {
    %c0_i32 = arith.constant 0 : i32
    %c0_i32_0 = arith.constant 0 : i32
    %c0_i32_1 = arith.constant 0 : i32
    return %c0_i32, %c0_i32_0 : i32, i32
  }
  func.func @transform_3(%arg0: i32) -> (i32, i32) {
    %c0_i32 = arith.constant 0 : i32
    %c0_i32_0 = arith.constant 0 : i32
    %c0_i32_1 = arith.constant 0 : i32
    return %c0_i32, %c0_i32_0 : i32, i32
  }
  func.func @transform_4(%arg0: i32) -> (i32, i32) {
    %c0_i32 = arith.constant 0 : i32
    %c0_i32_0 = arith.constant 0 : i32
    %c0_i32_1 = arith.constant 0 : i32
    return %c0_i32, %c0_i32_0 : i32, i32
  }
  func.func @transform_5(%arg0: i32) -> (i32, i32) {
    %c0_i32 = arith.constant 0 : i32
    %c0_i32_0 = arith.constant 0 : i32
    %c0_i32_1 = arith.constant 0 : i32
    return %c0_i32, %c0_i32_0 : i32, i32
  }
  func.func @transform_6(%arg0: i32) -> (i32, i32) {
    %c0_i32 = arith.constant 0 : i32
    %c0_i32_0 = arith.constant 0 : i32
    %c0_i32_1 = arith.constant 0 : i32
    return %c0_i32, %c0_i32_0 : i32, i32
  }
  func.func @transform_7(%arg0: i32) -> (i32, i32) {
    %c0_i32 = arith.constant 0 : i32
    %c0_i32_0 = arith.constant 0 : i32
    %c0_i32_1 = arith.constant 0 : i32
    return %c0_i32, %c0_i32_0 : i32, i32
  }
  func.func @transform_8(%arg0: i32) -> (i32, i32) {
    %c0_i32 = arith.constant 0 : i32
    %c0_i32_0 = arith.constant 0 : i32
    %c0_i32_1 = arith.constant 0 : i32
    return %c0_i32, %c0_i32_0 : i32, i32
  }
  func.func @transform_9(%arg0: i32) -> (i32, i32) {
    %c0_i32 = arith.constant 0 : i32
    %c0_i32_0 = arith.constant 0 : i32
    %c0_i32_1 = arith.constant 0 : i32
    return %c0_i32, %c0_i32_0 : i32, i32
  }
  func.func @transform_10(%arg0: i32) -> (i32, i32) {
    %c0_i32 = arith.constant 0 : i32
    %c0_i32_0 = arith.constant 0 : i32
    return %arg0, %c0_i32 : i32, i32
  }
  func.func @transform_11(%arg0: i32) -> (i32, i32) {
    %c0_i32 = arith.constant 0 : i32
    %c0_i32_0 = arith.constant 0 : i32
    return %arg0, %c0_i32 : i32, i32
  }
}

module attributes {stable_mosaic.version = 11 : i64} {
  func.func @_edge_proj_kernel(%arg0: i32, %arg1: memref<32x64xf32, #tpu.memory_space<vmem>>, %arg2: memref<64x128xbf16, #tpu.memory_space<vmem>>, %arg3: memref<32x128xbf16, #tpu.memory_space<vmem>>) attributes {dimension_semantics = [#tpu.dimension_semantics<parallel>], iteration_bounds = array<i64: 1>, scalar_prefetch = 0 : i64, scratch_operands = 0 : i64, tpu.core_type = #tpu.core_type<tc>, window_params = [{transform_indices = @transform_0, window_bounds = array<i64: 32, 64>}, {pipeline_mode = #tpu.pipeline_mode<synchronous>, transform_indices = @transform_1, window_bounds = array<i64: 64, 128>}, {transform_indices = @transform_2, window_bounds = array<i64: 32, 128>}]} {
    %c0 = arith.constant 0 : index
    %c0_0 = arith.constant 0 : index
    %0 = vector.load %arg1[%c0, %c0_0] : memref<32x64xf32, #tpu.memory_space<vmem>>, vector<32x64xf32>
    %1 = arith.truncf %0 : vector<32x64xf32> to vector<32x64xbf16>
    %c0_1 = arith.constant 0 : index
    %c0_2 = arith.constant 0 : index
    %2 = vector.load %arg2[%c0_1, %c0_2] : memref<64x128xbf16, #tpu.memory_space<vmem>>, vector<64x128xbf16>
    %cst = arith.constant dense<0.000000e+00> : vector<32x128xf32>
    %3 = tpu.matmul %1, %2, %cst {dimension_numbers = #tpu.dot_dimension_numbers<[1], [0], [0], [1], [0, 0, 1, 1], [], []>} : vector<32x64xbf16>, vector<64x128xbf16>, vector<32x128xf32> -> vector<32x128xf32>
    %4 = arith.truncf %3 : vector<32x128xf32> to vector<32x128xbf16>
    %c0_3 = arith.constant 0 : index
    %c0_4 = arith.constant 0 : index
    %5 = vector.load %arg3[%c0_3, %c0_4] : memref<32x128xbf16, #tpu.memory_space<vmem>>, vector<32x128xbf16>
    tpu.vector_store %arg3[%c0_3, %c0_4], %4 {strides = array<i32>} : memref<32x128xbf16, #tpu.memory_space<vmem>>, vector<32x128xbf16>,
    return
  }
  func.func @transform_0(%arg0: i32) -> (i32, i32) {
    %c0_i32 = arith.constant 0 : i32
    %c0_i32_0 = arith.constant 0 : i32
    return %arg0, %c0_i32 : i32, i32
  }
  func.func @transform_1(%arg0: i32) -> (i32, i32) {
    %c0_i32 = arith.constant 0 : i32
    %c0_i32_0 = arith.constant 0 : i32
    %c0_i32_1 = arith.constant 0 : i32
    return %c0_i32, %c0_i32_0 : i32, i32
  }
  func.func @transform_2(%arg0: i32) -> (i32, i32) {
    %c0_i32 = arith.constant 0 : i32
    %c0_i32_0 = arith.constant 0 : i32
    return %arg0, %c0_i32 : i32, i32
  }
}

module attributes {stable_mosaic.version = 11 : i64} {
  func.func @_neg_pdist_kernel(%arg0: i32, %arg1: i32, %arg2: i32, %arg3: memref<1x16x64xf32, #tpu.memory_space<vmem>>, %arg4: memref<1x16x64xf32, #tpu.memory_space<vmem>>, %arg5: memref<1x16x16xbf16, #tpu.memory_space<vmem>>) attributes {dimension_semantics = [#tpu.dimension_semantics<parallel>, #tpu.dimension_semantics<parallel>, #tpu.dimension_semantics<parallel>], iteration_bounds = array<i64: 2, 1, 1>, scalar_prefetch = 0 : i64, scratch_operands = 0 : i64, tpu.core_type = #tpu.core_type<tc>, window_params = [{transform_indices = @transform_0, window_bounds = array<i64: 1, 16, 64>}, {transform_indices = @transform_1, window_bounds = array<i64: 1, 16, 64>}, {transform_indices = @transform_2, window_bounds = array<i64: 1, 16, 16>}]} {
    %c0 = arith.constant 0 : index
    %c0_0 = arith.constant 0 : index
    %c0_1 = arith.constant 0 : index
    %0 = vector.load %arg3[%c0, %c0_0, %c0_1] : memref<1x16x64xf32, #tpu.memory_space<vmem>>, vector<1x16x64xf32>
    %1 = vector.shape_cast %0 : vector<1x16x64xf32> to vector<16x64xf32>
    %c0_2 = arith.constant 0 : index
    %c0_3 = arith.constant 0 : index
    %c0_4 = arith.constant 0 : index
    %2 = vector.load %arg4[%c0_2, %c0_3, %c0_4] : memref<1x16x64xf32, #tpu.memory_space<vmem>>, vector<1x16x64xf32>
    %3 = vector.shape_cast %2 : vector<1x16x64xf32> to vector<16x64xf32>
    %4 = arith.truncf %1 : vector<16x64xf32> to vector<16x64xbf16>
    %5 = arith.truncf %3 : vector<16x64xf32> to vector<16x64xbf16>
    %cst = arith.constant dense<0.000000e+00> : vector<16x16xf32>
    %6 = tpu.matmul %4, %5, %cst {dimension_numbers = #tpu.dot_dimension_numbers<[1], [1], [0], [0], [0, 0, 1, 0], [], []>} : vector<16x64xbf16>, vector<16x64xbf16>, vector<16x16xf32> -> vector<16x16xf32>
    %7 = arith.mulf %1, %1 : vector<16x64xf32>
    %cst_5 = arith.constant dense<0.000000e+00> : vector<16xf32>
    %8 = vector.multi_reduction <add>, %7, %cst_5 [1] : vector<16x64xf32> to vector<16xf32>
    %9 = vector.shape_cast %8 : vector<16xf32> to vector<16x1xf32>
    %cst_6 = arith.constant 1.000000e+00 : f32
    %10 = vector.broadcast %cst_6 : f32 to vector<1x64xf32>
    %11 = arith.mulf %3, %3 : vector<16x64xf32>
    %cst_7 = arith.constant dense<0.000000e+00> : vector<1x16xf32>
    %12 = tpu.matmul %10, %11, %cst_7 {dimension_numbers = #tpu.dot_dimension_numbers<[1], [1], [0], [0], [0, 0, 1, 0], [], []>} : vector<1x64xf32>, vector<16x64xf32>, vector<1x16xf32> -> vector<1x16xf32>
    %cst_8 = arith.constant 2.000000e+00 : f32
    %13 = vector.broadcast %cst_8 : f32 to vector<16x16xf32>
    %14 = arith.mulf %13, %6 : vector<16x16xf32>
    %15 = vector.broadcast %9 : vector<16x1xf32> to vector<16x16xf32>
    %16 = arith.subf %14, %15 : vector<16x16xf32>
    %17 = vector.broadcast %12 : vector<1x16xf32> to vector<16x16xf32>
    %18 = arith.subf %16, %17 : vector<16x16xf32>
    %19 = arith.truncf %18 : vector<16x16xf32> to vector<16x16xbf16>
    %c0_9 = arith.constant 0 : index
    %c0_10 = arith.constant 0 : index
    %c0_11 = arith.constant 0 : index
    %20 = vector.load %arg5[%c0_9, %c0_10, %c0_11] : memref<1x16x16xbf16, #tpu.memory_space<vmem>>, vector<1x16x16xbf16>
    %21 = vector.shape_cast %20 : vector<1x16x16xbf16> to vector<16x16xbf16>
    %22 = vector.shape_cast %19 : vector<16x16xbf16> to vector<1x16x16xbf16>
    tpu.vector_store %arg5[%c0_9, %c0_10, %c0_11], %22 {strides = array<i32>} : memref<1x16x16xbf16, #tpu.memory_space<vmem>>, vector<1x16x16xbf16>,
    return
  }
  func.func @transform_0(%arg0: i32, %arg1: i32, %arg2: i32) -> (i32, i32, i32) {
    %c0_i32 = arith.constant 0 : i32
    %c0_i32_0 = arith.constant 0 : i32
    return %arg0, %arg1, %c0_i32 : i32, i32, i32
  }
  func.func @transform_1(%arg0: i32, %arg1: i32, %arg2: i32) -> (i32, i32, i32) {
    %c0_i32 = arith.constant 0 : i32
    %c0_i32_0 = arith.constant 0 : i32
    return %arg0, %arg2, %c0_i32 : i32, i32, i32
  }
  func.func @transform_2(%arg0: i32, %arg1: i32, %arg2: i32) -> (i32, i32, i32) {
    %c0_i32 = arith.constant 0 : i32
    return %arg0, %arg1, %arg2 : i32, i32, i32
  }
}

module attributes {stable_mosaic.version = 11 : i64} {
  func.func @_edgeconv_block23_kernel(%arg0: i32, %arg1: memref<32x64xbf16, #tpu.memory_space<vmem>>, %arg2: memref<32x4x64xbf16, #tpu.memory_space<vmem>>, %arg3: memref<1x64xf32, #tpu.memory_space<vmem>>, %arg4: memref<1x64xf32, #tpu.memory_space<vmem>>, %arg5: memref<128x64xbf16, #tpu.memory_space<vmem>>, %arg6: memref<1x64xf32, #tpu.memory_space<vmem>>, %arg7: memref<1x64xf32, #tpu.memory_space<vmem>>, %arg8: memref<32x128xf32, #tpu.memory_space<vmem>>, %arg9: memref<32x64xf32, #tpu.memory_space<vmem>>) attributes {dimension_semantics = [#tpu.dimension_semantics<parallel>], iteration_bounds = array<i64: 1>, scalar_prefetch = 0 : i64, scratch_operands = 0 : i64, tpu.core_type = #tpu.core_type<tc>, window_params = [{transform_indices = @transform_0, window_bounds = array<i64: 32, 64>}, {transform_indices = @transform_1, window_bounds = array<i64: 32, 4, 64>}, {pipeline_mode = #tpu.pipeline_mode<synchronous>, transform_indices = @transform_2, window_bounds = array<i64: 1, 64>}, {pipeline_mode = #tpu.pipeline_mode<synchronous>, transform_indices = @transform_3, window_bounds = array<i64: 1, 64>}, {pipeline_mode = #tpu.pipeline_mode<synchronous>, transform_indices = @transform_4, window_bounds = array<i64: 128, 64>}, {pipeline_mode = #tpu.pipeline_mode<synchronous>, transform_indices = @transform_5, window_bounds = array<i64: 1, 64>}, {pipeline_mode = #tpu.pipeline_mode<synchronous>, transform_indices = @transform_6, window_bounds = array<i64: 1, 64>}, {transform_indices = @transform_7, window_bounds = array<i64: 32, 128>}, {transform_indices = @transform_8, window_bounds = array<i64: 32, 64>}]} {
    %c0 = arith.constant 0 : index
    %c0_0 = arith.constant 0 : index
    %0 = vector.load %arg1[%c0, %c0_0] : memref<32x64xbf16, #tpu.memory_space<vmem>>, vector<32x64xbf16>
    %1 = arith.extf %0 : vector<32x64xbf16> to vector<32x64xf32>
    %c0_1 = arith.constant 0 : index
    %c0_2 = arith.constant 0 : index
    %c0_3 = arith.constant 0 : index
    %2 = vector.load %arg2[%c0_1, %c0_2, %c0_3] : memref<32x4x64xbf16, #tpu.memory_space<vmem>>, vector<32x4x64xbf16>
    %3 = arith.extf %2 : vector<32x4x64xbf16> to vector<32x4x64xf32>
    %c0_4 = arith.constant 0 : index
    %c0_5 = arith.constant 0 : index
    %4 = vector.load %arg3[%c0_4, %c0_5] : memref<1x64xf32, #tpu.memory_space<vmem>>, vector<1x64xf32>
    %c0_6 = arith.constant 0 : index
    %c0_7 = arith.constant 0 : index
    %5 = vector.load %arg4[%c0_6, %c0_7] : memref<1x64xf32, #tpu.memory_space<vmem>>, vector<1x64xf32>
    %6 = vector.extract_strided_slice %3 {offsets = [0, 0, 0], sizes = [32, 1, 64], strides = [1, 1, 1]} : vector<32x4x64xf32> to vector<32x1x64xf32>
    %7 = vector.shape_cast %6 : vector<32x1x64xf32> to vector<32x64xf32>
    %8 = arith.addf %1, %7 : vector<32x64xf32>
    %9 = vector.broadcast %4 : vector<1x64xf32> to vector<32x64xf32>
    %10 = arith.mulf %8, %9 : vector<32x64xf32>
    %11 = vector.broadcast %5 : vector<1x64xf32> to vector<32x64xf32>
    %12 = arith.addf %10, %11 : vector<32x64xf32>
    %cst = arith.constant 0.000000e+00 : f32
    %13 = vector.broadcast %cst : f32 to vector<32x64xf32>
    %14 = arith.maximumf %12, %13 : vector<32x64xf32>
    %15 = vector.extract_strided_slice %3 {offsets = [0, 1, 0], sizes = [32, 1, 64], strides = [1, 1, 1]} : vector<32x4x64xf32> to vector<32x1x64xf32>
    %16 = vector.shape_cast %15 : vector<32x1x64xf32> to vector<32x64xf32>
    %17 = arith.addf %1, %16 : vector<32x64xf32>
    %18 = vector.broadcast %4 : vector<1x64xf32> to vector<32x64xf32>
    %19 = arith.mulf %17, %18 : vector<32x64xf32>
    %20 = vector.broadcast %5 : vector<1x64xf32> to vector<32x64xf32>
    %21 = arith.addf %19, %20 : vector<32x64xf32>
    %cst_8 = arith.constant 0.000000e+00 : f32
    %22 = vector.broadcast %cst_8 : f32 to vector<32x64xf32>
    %23 = arith.maximumf %21, %22 : vector<32x64xf32>
    %24 = arith.maximumf %14, %23 : vector<32x64xf32>
    %25 = arith.addf %14, %23 : vector<32x64xf32>
    %26 = vector.extract_strided_slice %3 {offsets = [0, 2, 0], sizes = [32, 1, 64], strides = [1, 1, 1]} : vector<32x4x64xf32> to vector<32x1x64xf32>
    %27 = vector.shape_cast %26 : vector<32x1x64xf32> to vector<32x64xf32>
    %28 = arith.addf %1, %27 : vector<32x64xf32>
    %29 = vector.broadcast %4 : vector<1x64xf32> to vector<32x64xf32>
    %30 = arith.mulf %28, %29 : vector<32x64xf32>
    %31 = vector.broadcast %5 : vector<1x64xf32> to vector<32x64xf32>
    %32 = arith.addf %30, %31 : vector<32x64xf32>
    %cst_9 = arith.constant 0.000000e+00 : f32
    %33 = vector.broadcast %cst_9 : f32 to vector<32x64xf32>
    %34 = arith.maximumf %32, %33 : vector<32x64xf32>
    %35 = arith.maximumf %24, %34 : vector<32x64xf32>
    %36 = arith.addf %25, %34 : vector<32x64xf32>
    %37 = vector.extract_strided_slice %3 {offsets = [0, 3, 0], sizes = [32, 1, 64], strides = [1, 1, 1]} : vector<32x4x64xf32> to vector<32x1x64xf32>
    %38 = vector.shape_cast %37 : vector<32x1x64xf32> to vector<32x64xf32>
    %39 = arith.addf %1, %38 : vector<32x64xf32>
    %40 = vector.broadcast %4 : vector<1x64xf32> to vector<32x64xf32>
    %41 = arith.mulf %39, %40 : vector<32x64xf32>
    %42 = vector.broadcast %5 : vector<1x64xf32> to vector<32x64xf32>
    %43 = arith.addf %41, %42 : vector<32x64xf32>
    %cst_10 = arith.constant 0.000000e+00 : f32
    %44 = vector.broadcast %cst_10 : f32 to vector<32x64xf32>
    %45 = arith.maximumf %43, %44 : vector<32x64xf32>
    %46 = arith.maximumf %35, %45 : vector<32x64xf32>
    %47 = arith.addf %36, %45 : vector<32x64xf32>
    %cst_11 = arith.constant 2.500000e-01 : f32
    %48 = vector.broadcast %cst_11 : f32 to vector<32x64xf32>
    %49 = arith.mulf %47, %48 : vector<32x64xf32>
    %50 = tpu.concatenate %46, %49 in 1 : vector<32x64xf32>, vector<32x64xf32> -> vector<32x128xf32>
    %c0_12 = arith.constant 0 : index
    %c0_13 = arith.constant 0 : index
    %51 = vector.load %arg8[%c0_12, %c0_13] : memref<32x128xf32, #tpu.memory_space<vmem>>, vector<32x128xf32>
    tpu.vector_store %arg8[%c0_12, %c0_13], %50 {strides = array<i32>} : memref<32x128xf32, #tpu.memory_space<vmem>>, vector<32x128xf32>,
    %52 = arith.truncf %50 : vector<32x128xf32> to vector<32x128xbf16>
    %c0_14 = arith.constant 0 : index
    %c0_15 = arith.constant 0 : index
    %53 = vector.load %arg5[%c0_14, %c0_15] : memref<128x64xbf16, #tpu.memory_space<vmem>>, vector<128x64xbf16>
    %cst_16 = arith.constant dense<0.000000e+00> : vector<32x64xf32>
    %54 = tpu.matmul %52, %53, %cst_16 {dimension_numbers = #tpu.dot_dimension_numbers<[1], [0], [0], [1], [0, 0, 1, 1], [], []>} : vector<32x128xbf16>, vector<128x64xbf16>, vector<32x64xf32> -> vector<32x64xf32>
    %c0_17 = arith.constant 0 : index
    %c0_18 = arith.constant 0 : index
    %55 = vector.load %arg6[%c0_17, %c0_18] : memref<1x64xf32, #tpu.memory_space<vmem>>, vector<1x64xf32>
    %56 = vector.broadcast %55 : vector<1x64xf32> to vector<32x64xf32>
    %57 = arith.mulf %54, %56 : vector<32x64xf32>
    %c0_19 = arith.constant 0 : index
    %c0_20 = arith.constant 0 : index
    %58 = vector.load %arg7[%c0_19, %c0_20] : memref<1x64xf32, #tpu.memory_space<vmem>>, vector<1x64xf32>
    %59 = vector.broadcast %58 : vector<1x64xf32> to vector<32x64xf32>
    %60 = arith.addf %57, %59 : vector<32x64xf32>
    %cst_21 = arith.constant 0.000000e+00 : f32
    %61 = vector.broadcast %cst_21 : f32 to vector<32x64xf32>
    %62 = arith.maximumf %60, %61 : vector<32x64xf32>
    %c0_22 = arith.constant 0 : index
    %c0_23 = arith.constant 0 : index
    %63 = vector.load %arg9[%c0_22, %c0_23] : memref<32x64xf32, #tpu.memory_space<vmem>>, vector<32x64xf32>
    tpu.vector_store %arg9[%c0_22, %c0_23], %62 {strides = array<i32>} : memref<32x64xf32, #tpu.memory_space<vmem>>, vector<32x64xf32>,
    return
  }
  func.func @transform_0(%arg0: i32) -> (i32, i32) {
    %c0_i32 = arith.constant 0 : i32
    %c0_i32_0 = arith.constant 0 : i32
    return %arg0, %c0_i32 : i32, i32
  }
  func.func @transform_1(%arg0: i32) -> (i32, i32, i32) {
    %c0_i32 = arith.constant 0 : i32
    %c0_i32_0 = arith.constant 0 : i32
    %c0_i32_1 = arith.constant 0 : i32
    return %arg0, %c0_i32, %c0_i32_0 : i32, i32, i32
  }
  func.func @transform_2(%arg0: i32) -> (i32, i32) {
    %c0_i32 = arith.constant 0 : i32
    %c0_i32_0 = arith.constant 0 : i32
    %c0_i32_1 = arith.constant 0 : i32
    return %c0_i32, %c0_i32_0 : i32, i32
  }
  func.func @transform_3(%arg0: i32) -> (i32, i32) {
    %c0_i32 = arith.constant 0 : i32
    %c0_i32_0 = arith.constant 0 : i32
    %c0_i32_1 = arith.constant 0 : i32
    return %c0_i32, %c0_i32_0 : i32, i32
  }
  func.func @transform_4(%arg0: i32) -> (i32, i32) {
    %c0_i32 = arith.constant 0 : i32
    %c0_i32_0 = arith.constant 0 : i32
    %c0_i32_1 = arith.constant 0 : i32
    return %c0_i32, %c0_i32_0 : i32, i32
  }
  func.func @transform_5(%arg0: i32) -> (i32, i32) {
    %c0_i32 = arith.constant 0 : i32
    %c0_i32_0 = arith.constant 0 : i32
    %c0_i32_1 = arith.constant 0 : i32
    return %c0_i32, %c0_i32_0 : i32, i32
  }
  func.func @transform_6(%arg0: i32) -> (i32, i32) {
    %c0_i32 = arith.constant 0 : i32
    %c0_i32_0 = arith.constant 0 : i32
    %c0_i32_1 = arith.constant 0 : i32
    return %c0_i32, %c0_i32_0 : i32, i32
  }
  func.func @transform_7(%arg0: i32) -> (i32, i32) {
    %c0_i32 = arith.constant 0 : i32
    %c0_i32_0 = arith.constant 0 : i32
    return %arg0, %c0_i32 : i32, i32
  }
  func.func @transform_8(%arg0: i32) -> (i32, i32) {
    %c0_i32 = arith.constant 0 : i32
    %c0_i32_0 = arith.constant 0 : i32
    return %arg0, %c0_i32 : i32, i32
  }
}

module attributes {stable_mosaic.version = 11 : i64} {
  func.func @_lin_bn_relu_max_kernel(%arg0: i32, %arg1: i32, %arg2: memref<1x16x192xf32, #tpu.memory_space<vmem>>, %arg3: memref<192x1024xbf16, #tpu.memory_space<vmem>>, %arg4: memref<1x1024xf32, #tpu.memory_space<vmem>>, %arg5: memref<1x1024xf32, #tpu.memory_space<vmem>>, %arg6: memref<1x16x1024xf32, #tpu.memory_space<vmem>>, %arg7: memref<1x1x1024xf32, #tpu.memory_space<vmem>>) attributes {dimension_semantics = [#tpu.dimension_semantics<parallel>, #tpu.dimension_semantics<arbitrary>], iteration_bounds = array<i64: 2, 1>, scalar_prefetch = 0 : i64, scratch_operands = 0 : i64, tpu.core_type = #tpu.core_type<tc>, window_params = [{transform_indices = @transform_0, window_bounds = array<i64: 1, 16, 192>}, {pipeline_mode = #tpu.pipeline_mode<synchronous>, transform_indices = @transform_1, window_bounds = array<i64: 192, 1024>}, {pipeline_mode = #tpu.pipeline_mode<synchronous>, transform_indices = @transform_2, window_bounds = array<i64: 1, 1024>}, {pipeline_mode = #tpu.pipeline_mode<synchronous>, transform_indices = @transform_3, window_bounds = array<i64: 1, 1024>}, {transform_indices = @transform_4, window_bounds = array<i64: 1, 16, 1024>}, {transform_indices = @transform_5, window_bounds = array<i64: 1, 1, 1024>}]} {
    %c0 = arith.constant 0 : index
    %c0_0 = arith.constant 0 : index
    %c0_1 = arith.constant 0 : index
    %0 = vector.load %arg2[%c0, %c0_0, %c0_1] : memref<1x16x192xf32, #tpu.memory_space<vmem>>, vector<1x16x192xf32>
    %1 = vector.shape_cast %0 : vector<1x16x192xf32> to vector<16x192xf32>
    %2 = arith.truncf %1 : vector<16x192xf32> to vector<16x192xbf16>
    %c0_2 = arith.constant 0 : index
    %c0_3 = arith.constant 0 : index
    %3 = vector.load %arg3[%c0_2, %c0_3] : memref<192x1024xbf16, #tpu.memory_space<vmem>>, vector<192x1024xbf16>
    %cst = arith.constant dense<0.000000e+00> : vector<16x1024xf32>
    %4 = tpu.matmul %2, %3, %cst {dimension_numbers = #tpu.dot_dimension_numbers<[1], [0], [0], [1], [0, 0, 1, 1], [], []>} : vector<16x192xbf16>, vector<192x1024xbf16>, vector<16x1024xf32> -> vector<16x1024xf32>
    %c0_4 = arith.constant 0 : index
    %c0_5 = arith.constant 0 : index
    %5 = vector.load %arg4[%c0_4, %c0_5] : memref<1x1024xf32, #tpu.memory_space<vmem>>, vector<1x1024xf32>
    %6 = vector.broadcast %5 : vector<1x1024xf32> to vector<16x1024xf32>
    %7 = arith.mulf %4, %6 : vector<16x1024xf32>
    %c0_6 = arith.constant 0 : index
    %c0_7 = arith.constant 0 : index
    %8 = vector.load %arg5[%c0_6, %c0_7] : memref<1x1024xf32, #tpu.memory_space<vmem>>, vector<1x1024xf32>
    %9 = vector.broadcast %8 : vector<1x1024xf32> to vector<16x1024xf32>
    %10 = arith.addf %7, %9 : vector<16x1024xf32>
    %cst_8 = arith.constant 0.000000e+00 : f32
    %11 = vector.broadcast %cst_8 : f32 to vector<16x1024xf32>
    %12 = arith.maximumf %10, %11 : vector<16x1024xf32>
    %c0_9 = arith.constant 0 : index
    %c0_10 = arith.constant 0 : index
    %c0_11 = arith.constant 0 : index
    %13 = vector.load %arg6[%c0_9, %c0_10, %c0_11] : memref<1x16x1024xf32, #tpu.memory_space<vmem>>, vector<1x16x1024xf32>
    %14 = vector.shape_cast %13 : vector<1x16x1024xf32> to vector<16x1024xf32>
    %15 = vector.shape_cast %12 : vector<16x1024xf32> to vector<1x16x1024xf32>
    tpu.vector_store %arg6[%c0_9, %c0_10, %c0_11], %15 {strides = array<i32>} : memref<1x16x1024xf32, #tpu.memory_space<vmem>>, vector<1x16x1024xf32>,
    %cst_12 = arith.constant dense<0xFF800000> : vector<1024xf32>
    %16 = vector.multi_reduction <maximumf>, %12, %cst_12 [0] : vector<16x1024xf32> to vector<1024xf32>
    %17 = vector.shape_cast %16 : vector<1024xf32> to vector<1x1024xf32>
    %c0_i32 = arith.constant 0 : i32
    %18 = arith.cmpi eq, %arg1, %c0_i32 : i32
    %19 = arith.extui %18 : i1 to i32
    %c0_i32_13 = arith.constant 0 : i32
    %20 = arith.cmpi ne, %19, %c0_i32_13 : i32
    scf.if %20 {
      %c0_16 = arith.constant 0 : index
      %c0_17 = arith.constant 0 : index
      %c0_18 = arith.constant 0 : index
      %24 = vector.load %arg7[%c0_16, %c0_17, %c0_18] : memref<1x1x1024xf32, #tpu.memory_space<vmem>>, vector<1x1x1024xf32>
      %25 = vector.shape_cast %24 : vector<1x1x1024xf32> to vector<1x1024xf32>
      %26 = vector.shape_cast %17 : vector<1x1024xf32> to vector<1x1x1024xf32>
      tpu.vector_store %arg7[%c0_16, %c0_17, %c0_18], %26 {strides = array<i32>} : memref<1x1x1024xf32, #tpu.memory_space<vmem>>, vector<1x1x1024xf32>,
    } else {
    }
    %c0_i32_14 = arith.constant 0 : i32
    %21 = arith.cmpi sgt, %arg1, %c0_i32_14 : i32
    %22 = arith.extui %21 : i1 to i32
    %c0_i32_15 = arith.constant 0 : i32
    %23 = arith.cmpi ne, %22, %c0_i32_15 : i32
    scf.if %23 {
      %c0_16 = arith.constant 0 : index
      %c0_17 = arith.constant 0 : index
      %c0_18 = arith.constant 0 : index
      %24 = vector.load %arg7[%c0_16, %c0_17, %c0_18] : memref<1x1x1024xf32, #tpu.memory_space<vmem>>, vector<1x1x1024xf32>
      %25 = vector.shape_cast %24 : vector<1x1x1024xf32> to vector<1x1024xf32>
      %26 = arith.maximumf %25, %17 : vector<1x1024xf32>
      %c0_19 = arith.constant 0 : index
      %c0_20 = arith.constant 0 : index
      %c0_21 = arith.constant 0 : index
      %27 = vector.load %arg7[%c0_19, %c0_20, %c0_21] : memref<1x1x1024xf32, #tpu.memory_space<vmem>>, vector<1x1x1024xf32>
      %28 = vector.shape_cast %27 : vector<1x1x1024xf32> to vector<1x1024xf32>
      %29 = vector.shape_cast %26 : vector<1x1024xf32> to vector<1x1x1024xf32>
      tpu.vector_store %arg7[%c0_19, %c0_20, %c0_21], %29 {strides = array<i32>} : memref<1x1x1024xf32, #tpu.memory_space<vmem>>, vector<1x1x1024xf32>,
    } else {
    }
    return
  }
  func.func @transform_0(%arg0: i32, %arg1: i32) -> (i32, i32, i32) {
    %c0_i32 = arith.constant 0 : i32
    %c0_i32_0 = arith.constant 0 : i32
    return %arg0, %arg1, %c0_i32 : i32, i32, i32
  }
  func.func @transform_1(%arg0: i32, %arg1: i32) -> (i32, i32) {
    %c0_i32 = arith.constant 0 : i32
    %c0_i32_0 = arith.constant 0 : i32
    %c0_i32_1 = arith.constant 0 : i32
    return %c0_i32, %c0_i32_0 : i32, i32
  }
  func.func @transform_2(%arg0: i32, %arg1: i32) -> (i32, i32) {
    %c0_i32 = arith.constant 0 : i32
    %c0_i32_0 = arith.constant 0 : i32
    %c0_i32_1 = arith.constant 0 : i32
    return %c0_i32, %c0_i32_0 : i32, i32
  }
  func.func @transform_3(%arg0: i32, %arg1: i32) -> (i32, i32) {
    %c0_i32 = arith.constant 0 : i32
    %c0_i32_0 = arith.constant 0 : i32
    %c0_i32_1 = arith.constant 0 : i32
    return %c0_i32, %c0_i32_0 : i32, i32
  }
  func.func @transform_4(%arg0: i32, %arg1: i32) -> (i32, i32, i32) {
    %c0_i32 = arith.constant 0 : i32
    %c0_i32_0 = arith.constant 0 : i32
    return %arg0, %arg1, %c0_i32 : i32, i32, i32
  }
  func.func @transform_5(%arg0: i32, %arg1: i32) -> (i32, i32, i32) {
    %c0_i32 = arith.constant 0 : i32
    %c0_i32_0 = arith.constant 0 : i32
    %c0_i32_1 = arith.constant 0 : i32
    return %arg0, %c0_i32, %c0_i32_0 : i32, i32, i32
  }
}

</mosaic_0001>

<llo_original>
// kernel: dgcnn_seg_feature_fwd.15
$region0: #{dgcnn_seg_feature_fwd.15}
  #allocation0 [shape = 'u32[]', space=smem, size = 0x4, offset = 0x4, fixed_abs, tag = 'smem constant byte address 0x4 - core index']
  #allocation1 [shape = 'u32[72,128]{1,0:T(1,128)}', space=vmem, size = 0x9000, scoped, tag = 'internal scratch']
  %s0 = inlined_call_operand.vmem [shape: f32[32,3], index: 0, kind: input, shape index: {}]
  %s1 = inlined_call_operand.vmem [shape: bf16[3,128], index: 1, kind: input, shape index: {}]
  %s2 = inlined_call_operand.vmem [shape: bf16[32,128], index: 2, kind: output, shape index: {}]
  %s3 = sld [smem:[#allocation0]]
  $region18: #{dgcnn_seg_feature_fwd.15} parent=0
    _
  %s5 = ssub.s32 1, %s3
  %s6 = scalar_select 0, %s5, %s3
  // Predicated region
  $region2: #{dgcnn_seg_feature_fwd.15} parent=0 // pred_check
    _
  $region3: #{dgcnn_seg_feature_fwd.15} parent=0 // pred_check_branch
    %8 = sbr.rel (0) target = $region5
  $region4: #{dgcnn_seg_feature_fwd.15} parent=0 // pred_region
    _
  $region5: #{dgcnn_seg_feature_fwd.15} parent=0 // pred_fallthru
    _
  // Predicated region
  $region6: #{dgcnn_seg_feature_fwd.15} parent=0 // pred_check
    _
  $region7: #{dgcnn_seg_feature_fwd.15} parent=0 // pred_check_branch
    %10 = sbr.rel (0) target = $region9
  $region8: #{dgcnn_seg_feature_fwd.15} parent=0 // pred_region
    _
  $region9: #{dgcnn_seg_feature_fwd.15} parent=0 // pred_fallthru
    _
  %v12 = vld [vmem:[%s0] sm:$0xff]
  %v13 = vld [vmem:[%s0 + $0x8] sm:$0xff]
  %v14 = vld [vmem:[%s0 + $0x10] sm:$0xff]
  %v15 = vld [vmem:[%s0 + $0x18] sm:$0xff]
  %v16 = vpack.c.bf16 %v13, %v12
  %v17 = vpack.c.bf16 %v15, %v14
  %v18 = vld [vmem:[%s1] sm:$0x3]
  %vm19 = vcmask 23552
  %v21 = vsel %vm19, %v16, 0
  %v24 = vsel %vm19, %v17, 0
  %vm26 = vcmask 1040384
  %vm27 = vcmask 1041408
  %v28 = vsel %vm26, 4294967295, 65535
  %v29 = vsel %vm27, %v28, 0
  %v31 = vand.u32 %v18, %v29
  %33 = vmatpush.bf16.msra.mxu0 0
  %34 = vmatpush.bf16.msra.mxu0 0
  %35 = vmatpush.bf16.msra.mxu0 0
  %36 = vmatpush.bf16.msra.mxu0 0
  %37 = vmatpush.bf16.msra.mxu0 0
  %38 = vmatpush.bf16.msra.mxu0 0
  %39 = vmatpush.bf16.msra.mxu0 0
  %40 = vmatpush.bf16.msra.mxu0 %v31
  %41 = vmatmul.bf16.gmra.mxu0 %v21
  %v42 = vpop.f32.mrf.mxu0
  %v43 = vadd.f32 0.0, %v42
  %v44 = vpop.f32.mrf.mxu0
  %v45 = vadd.f32 0.0, %v44
  %46 = vmatmul.bf16.gmra.mxu0 %v24
  %v47 = vpop.f32.mrf.mxu0
  %v48 = vadd.f32 0.0, %v47
  %v49 = vpop.f32.mrf.mxu0
  %v50 = vadd.f32 0.0, %v49
  %51 = vdwg.mxu0
  %v52 = vpack.c.bf16 %v43, %v43
  %v53 = vpack.c.bf16 %v45, %v45
  %v54 = vpack.c.bf16 %v48, %v48
  %v55 = vpack.c.bf16 %v50, %v50
  %56 = vst [vmem:[%s2] sm:$0xf] %v52
  %57 = vst [vmem:[%s2 + $0x4] sm:$0xf] %v53
  %58 = vst [vmem:[%s2 + $0x8] sm:$0xf] %v54
  %59 = vst [vmem:[%s2 + $0xc] sm:$0xf] %v55
  // Predicated region
  $region10: #{dgcnn_seg_feature_fwd.15} parent=0 // pred_check
    _
  $region11: #{dgcnn_seg_feature_fwd.15} parent=0 // pred_check_branch
    %61 = sbr.rel (0) target = $region13
  $region12: #{dgcnn_seg_feature_fwd.15} parent=0 // pred_region
    _
  $region13: #{dgcnn_seg_feature_fwd.15} parent=0 // pred_fallthru
    _
  // Predicated region
  $region14: #{dgcnn_seg_feature_fwd.15} parent=0 // pred_check
    _
  $region15: #{dgcnn_seg_feature_fwd.15} parent=0 // pred_check_branch
    %63 = sbr.rel (0) target = $region17
  $region16: #{dgcnn_seg_feature_fwd.15} parent=0 // pred_region
    _
  $region17: #{dgcnn_seg_feature_fwd.15} parent=0 // pred_fallthru
    _

// kernel: dgcnn_seg_feature_fwd.14
$region0: #{dgcnn_seg_feature_fwd.14}
  #allocation0 [shape = 'u32[]', space=smem, size = 0x4, offset = 0x4, fixed_abs, tag = 'smem constant byte address 0x4 - core index']
  #allocation1 [shape = 'u32[72,128]{1,0:T(1,128)}', space=vmem, size = 0x9000, scoped, tag = 'internal scratch']
  %s0 = inlined_call_operand.vmem [shape: f32[2,16,3], index: 0, kind: input, shape index: {}, may-alias: {0,1}]
  %s1 = inlined_call_operand.vmem [shape: f32[2,16,3], index: 1, kind: input, shape index: {}, may-alias: {0,1}]
  %s2 = inlined_call_operand.vmem [shape: bf16[2,16,16], index: 2, kind: output, shape index: {}]
  %s3 = sld [smem:[#allocation0]]
  $region41: #{dgcnn_seg_feature_fwd.14} parent=0
    _
  %s5 = ssub.s32 1, %s3
  %s6 = scalar_select 0, %s5, %s3
  loop: start=0, step=1, limit=4
  $region2: #{dgcnn_seg_feature_fwd.14} parent=0 // loop_pre_header
    _
  $region3: #{dgcnn_seg_feature_fwd.14} parent=0 // loop_header
    %s8 = sphi 0, %s12
    %p9 = scmp.ge.s32.totalorder %s8, 4
    %s15 = sphi 0, %s34
    %s16 = sphi 0, %s30
    %s17 = sphi 0, %s26
    %s18 = sphi 0, %s15
    %s19 = sphi 0, %s16
    %s20 = sphi 0, %s17
    %s21 = sphi 0, %s18
    %s22 = sphi 0, %s19
    %s23 = sphi 0, %s20
    %s39 = sphi 0, %s41
    %s42 = sphi 0, %s39
    %s43 = sphi 0, %s42
    %s59 = sphi 0, %s43
    %s67 = sphi 0, %s69
    %s70 = sphi 0, %s67
    %s71 = sphi 0, %s70
    %s87 = sphi 0, %s71
    %s97 = sphi 0, %s99
    %s100 = sphi 0, %s97
    %s101 = sphi 0, %s100
    %s117 = sphi 0, %s101
  $region4: #{dgcnn_seg_feature_fwd.14} parent=0 // loop_header_branch
    %11 = sbr.rel (%p9) target = $region8
  $region5: #{dgcnn_seg_feature_fwd.14} parent=0 // loop_body
    %s13 = ssub.s32 %s8, 1
    %s14 = ssub.s32 %s8, 2
    %s24 = sadd.s32 1, %s17
    %p25 = scmp.ge.s32.totalorder %s24, 1
    %s26 = scalar_select %p25, 0, %s24
    %s27 = sadd.s32 1, %s16
    %s28 = scalar_select %p25, %s27, %s16
    %p29 = scmp.ge.s32.totalorder %s28, 1
    %s30 = scalar_select %p29, 0, %s28
    %s31 = sadd.s32 1, %s15
    %s32 = scalar_select %p29, %s31, %s15
    %p33 = scmp.ge.s32.totalorder %s32, 2
    %s34 = scalar_select %p33, 0, %s32
    %s35 = ssub.s32 %s15, %s34
    %s36 = ssub.s32 %s16, %s30
    %s37 = sor.u32 %s35, %s36
    %p38 = scmp.eq.s32.totalorder %s37, 0
    %s40 = sadd.s32 %s39, 1
    %s41 = scalar_select %p38, %s39, %s40
    %p44 = pneg %p38
    %p45 = scmp.eq.s32.totalorder %s8, 1
    %p46 = por %p44, %p45
    %p47 = scmp.ne.s32.totalorder %s39, %s42
    %p48 = scmp.eq.s32.totalorder %s8, 0
    %p49 = por %p47, %p48
    %p50 = scmp.ne.s32.totalorder %s39, %s42
    %p51 = scmp.eq.s32.totalorder %s13, 1
    %p52 = por %p50, %p51
    %p53 = scmp.ne.s32.totalorder %s42, %s43
    %p54 = scmp.eq.s32.totalorder %s13, 0
    %p55 = por %p53, %p54
    %p56 = scmp.ne.s32.totalorder %s42, %s43
    %p57 = scmp.eq.s32.totalorder %s14, 1
    %p58 = por %p56, %p57
    %p60 = scmp.ne.s32.totalorder %s43, %s59
    %p61 = scmp.eq.s32.totalorder %s14, 0
    %p62 = por %p60, %p61
    %s63 = ssub.s32 %s15, %s34
    %s64 = ssub.s32 %s17, %s26
    %s65 = sor.u32 %s63, %s64
    %p66 = scmp.eq.s32.totalorder %s65, 0
    %s68 = sadd.s32 %s67, 1
    %s69 = scalar_select %p66, %s67, %s68
    %p72 = pneg %p66
    %p73 = scmp.eq.s32.totalorder %s8, 1
    %p74 = por %p72, %p73
    %p75 = scmp.ne.s32.totalorder %s67, %s70
    %p76 = scmp.eq.s32.totalorder %s8, 0
    %p77 = por %p75, %p76
    %p78 = scmp.ne.s32.totalorder %s67, %s70
    %p79 = scmp.eq.s32.totalorder %s13, 1
    %p80 = por %p78, %p79
    %p81 = scmp.ne.s32.totalorder %s70, %s71
    %p82 = scmp.eq.s32.totalorder %s13, 0
    %p83 = por %p81, %p82
    %p84 = scmp.ne.s32.totalorder %s70, %s71
    %p85 = scmp.eq.s32.totalorder %s14, 1
    %p86 = por %p84, %p85
    %p88 = scmp.ne.s32.totalorder %s71, %s87
    %p89 = scmp.eq.s32.totalorder %s14, 0
    %p90 = por %p88, %p89
    %s91 = ssub.s32 %s15, %s34
    %s92 = ssub.s32 %s16, %s30
    %s93 = sor.u32 %s91, %s92
    %s94 = ssub.s32 %s17, %s26
    %s95 = sor.u32 %s93, %s94
    %p96 = scmp.eq.s32.totalorder %s95, 0
    %s98 = sadd.s32 %s97, 1
    %s99 = scalar_select %p96, %s97, %s98
    %p102 = pneg %p96
    %p103 = scmp.eq.s32.totalorder %s8, 1
    %p104 = por %p102, %p103
    %p105 = scmp.ne.s32.totalorder %s97, %s100
    %p106 = scmp.eq.s32.totalorder %s8, 0
    %p107 = por %p105, %p106
    %p108 = scmp.ne.s32.totalorder %s97, %s100
    %p109 = scmp.eq.s32.totalorder %s13, 1
    %p110 = por %p108, %p109
    %p111 = scmp.ne.s32.totalorder %s100, %s101
    %p112 = scmp.eq.s32.totalorder %s13, 0
    %p113 = por %p111, %p112
    %p114 = scmp.ne.s32.totalorder %s100, %s101
    %p115 = scmp.eq.s32.totalorder %s14, 1
    %p116 = por %p114, %p115
    %p118 = scmp.ne.s32.totalorder %s101, %s117
    %p119 = scmp.eq.s32.totalorder %s14, 0
    %p120 = por %p118, %p119
    %p121 = scmp.le.s32.totalorder 1, %s8
    %p122 = scmp.lt.s32.totalorder %s8, 3
    %p123 = pnand %p121, %p122
    %p124 = pneg %p123
    // Predicated region
    $region9: #{dgcnn_seg_feature_fwd.14} parent=5 // pred_check
      _
    $region10: #{dgcnn_seg_feature_fwd.14} parent=5 // pred_check_branch
      %126 = sbr.rel (%p123) target = $region12
    $region11: #{dgcnn_seg_feature_fwd.14} parent=5 // pred_region
      %s127 = ssub.s32 %s8, 1
    $region12: #{dgcnn_seg_feature_fwd.14} parent=5 // pred_fallthru
      _
    %p128 = scmp.lt.s32.totalorder %s8, 2
    // Predicated region
    $region13: #{dgcnn_seg_feature_fwd.14} parent=5 // pred_check
      %p129 = pneg %p128
    $region14: #{dgcnn_seg_feature_fwd.14} parent=5 // pred_check_branch
      %131 = sbr.rel (%p129) target = $region16
    $region15: #{dgcnn_seg_feature_fwd.14} parent=5 // pred_region
      // Predicated region
      $region17: #{dgcnn_seg_feature_fwd.14} parent=15 // pred_check
        %p132 = pneg %p49
      $region18: #{dgcnn_seg_feature_fwd.14} parent=15 // pred_check_branch
        %134 = sbr.rel (%p132) target = $region20
      $region19: #{dgcnn_seg_feature_fwd.14} parent=15 // pred_region
        %s135 = smul.u32 2, %s16
        %p136 = scmp.lt.s32.totalorder %s15, 1
        %s137 = scalar_select %p136, %s15, 1
        %p138 = scmp.lt.s32.totalorder %s135, 1
        %s139 = scalar_select %p138, %s135, 1
        %s140 = smul.addr %s137, 2
        %s141 = sadd.s32 %s139, %s140
        %s142 = smul.addr %s141, 8
        %s143 = scalar_lea.vmem %s0, %s142
        %s144 = smul.u32 2, %s16
      $region20: #{dgcnn_seg_feature_fwd.14} parent=15 // pred_fallthru
        _
      // Predicated region
      $region21: #{dgcnn_seg_feature_fwd.14} parent=15 // pred_check
        %p145 = pneg %p77
      $region22: #{dgcnn_seg_feature_fwd.14} parent=15 // pred_check_branch
        %147 = sbr.rel (%p145) target = $region24
      $region23: #{dgcnn_seg_feature_fwd.14} parent=15 // pred_region
        %s148 = smul.u32 2, %s17
        %p149 = scmp.lt.s32.totalorder %s15, 1
        %s150 = scalar_select %p149, %s15, 1
        %p151 = scmp.lt.s32.totalorder %s148, 1
        %s152 = scalar_select %p151, %s148, 1
        %s153 = smul.addr %s150, 2
        %s154 = sadd.s32 %s152, %s153
        %s155 = smul.addr %s154, 8
        %s156 = scalar_lea.vmem %s1, %s155
        %s157 = smul.u32 2, %s17
      $region24: #{dgcnn_seg_feature_fwd.14} parent=15 // pred_fallthru
        _
    $region16: #{dgcnn_seg_feature_fwd.14} parent=5 // pred_fallthru
      _
    %p158 = scmp.le.s32.totalorder 1, %s8
    %p159 = scmp.lt.s32.totalorder %s8, 3
    %p160 = pnand %p158, %p159
    %p161 = pneg %p160
    // Predicated region
    $region25: #{dgcnn_seg_feature_fwd.14} parent=5 // pred_check
      _
    $region26: #{dgcnn_seg_feature_fwd.14} parent=5 // pred_check_branch
      %163 = sbr.rel (%p160) target = $region28
    $region27: #{dgcnn_seg_feature_fwd.14} parent=5 // pred_region
      %s164 = ssub.s32 %s8, 1
      %s165 = smul.u32 2, %s19
      %p166 = scmp.lt.s32.totalorder %s18, 1
      %s167 = scalar_select %p166, %s18, 1
      %p168 = scmp.lt.s32.totalorder %s165, 1
      %s169 = scalar_select %p168, %s165, 1
      %s170 = smul.addr %s167, 2
      %s171 = sadd.s32 %s169, %s170
      %s172 = smul.addr %s171, 8
      %s173 = scalar_lea.vmem %s0, %s172
      %p174 = pneg %p55
      %p175 = pneg %p52
      %s176 = smul.u32 2, %s20
      %p177 = scmp.lt.s32.totalorder %s18, 1
      %s178 = scalar_select %p177, %s18, 1
      %p179 = scmp.lt.s32.totalorder %s176, 1
      %s180 = scalar_select %p179, %s176, 1
      %s181 = smul.addr %s178, 2
      %s182 = sadd.s32 %s180, %s181
      %s183 = smul.addr %s182, 8
      %s184 = scalar_lea.vmem %s1, %s183
      %p185 = pneg %p83
      %p186 = pneg %p80
      %p187 = pneg %p113
      %p188 = pneg %p110
      %s189 = smul.u32 2, %s19
      %p190 = scmp.lt.s32.totalorder %s18, 1
      %s191 = scalar_select %p190, %s18, 1
      %p192 = scmp.lt.s32.totalorder %s189, 1
      %s193 = scalar_select %p192, %s189, 1
      %p194 = scmp.lt.s32.totalorder %s20, 0
      %s195 = scalar_select %p194, %s20, 0
      %s196 = sadd.s32 %s195, %s193
      %s197 = smul.addr %s191, 2
      %s198 = sadd.s32 %s196, %s197
      %s199 = smul.addr %s198, 4
      %s200 = scalar_lea.vmem %s2, %s199
      %s201 = smul.u32 2, %s19
      %p202 = scmp.lt.s32.totalorder %s18, 1
      %s203 = scalar_select %p202, %s18, 1
      %p204 = scmp.lt.s32.totalorder %s201, 1
      %s205 = scalar_select %p204, %s201, 1
      %s206 = smul.addr %s203, 2
      %s207 = sadd.s32 %s205, %s206
      %s208 = smul.addr %s207, 8
      %s209 = scalar_lea.vmem %s0, %s208
      %s210 = smul.u32 2, %s19
      %s211 = smul.u32 2, %s20
      %p212 = scmp.lt.s32.totalorder %s18, 1
      %s213 = scalar_select %p212, %s18, 1
      %p214 = scmp.lt.s32.totalorder %s211, 1
      %s215 = scalar_select %p214, %s211, 1
      %s216 = smul.addr %s213, 2
      %s217 = sadd.s32 %s215, %s216
      %s218 = smul.addr %s217, 8
      %s219 = scalar_lea.vmem %s1, %s218
      %s220 = smul.u32 2, %s20
      %s221 = smul.u32 2, %s19
      %p222 = scmp.lt.s32.totalorder %s18, 1
      %s223 = scalar_select %p222, %s18, 1
      %p224 = scmp.lt.s32.totalorder %s221, 1
      %s225 = scalar_select %p224, %s221, 1
      %p226 = scmp.lt.s32.totalorder %s20, 0
      %s227 = scalar_select %p226, %s20, 0
      %s228 = sadd.s32 %s227, %s225
      %s229 = smul.addr %s223, 2
      %s230 = sadd.s32 %s228, %s229
      %s231 = smul.addr %s230, 4
      %s232 = scalar_lea.vmem %s2, %s231
      %s233 = smul.u32 2, %s19
      %v235 = vld [vmem:[%s209] sm:$0xff]
      %v236 = vld [vmem:[%s209 + $0x8] sm:$0xff]
      %v237 = vld [vmem:[%s219] sm:$0xff]
      %v238 = vld [vmem:[%s219 + $0x8] sm:$0xff]
      %v239 = vpack.c.bf16 %v236, %v235
      %v240 = vpack.c.bf16 %v238, %v237
      %vm241 = vcmask 23552
      %v243 = vsel %vm241, %v239, 0
      %v246 = vsel %vm241, %v240, 0
      %248 = vmatpush.bf16.xpose.msra.mxu0 0
      %249 = vmatpush.bf16.xpose.msra.mxu0 0
      %250 = vmatpush.bf16.xpose.msra.mxu0 0
      %251 = vmatpush.bf16.xpose.msra.mxu0 0
      %252 = vmatpush.bf16.xpose.msra.mxu0 0
      %253 = vmatpush.bf16.xpose.msra.mxu0 0
      %254 = vmatpush.bf16.xpose.msra.mxu0 0
      %255 = vmatpush.bf16.xpose.msra.mxu0 %v246
      %256 = vmatmul.bf16.gmra.mxu0 %v243
      %v257 = vpop.f32.mrf.mxu0
      %v258 = vadd.f32 0.0, %v257
      %v259 = vpop.f32.mrf.mxu0
      %v260 = vadd.f32 0.0, %v259
      %261 = vdwg.mxu0
      %v262 = vmul.f32 %v235, %v235
      %v263 = vmul.f32 %v236, %v236
      %v264 = vsel %vm241, %v262, 0.0
      %265 = vadd.xlane.f32.xlu0 %v264
      %v266 = vpop.xlane.xlu0 %265
      %v267 = vsel %vm241, %v263, 0.0
      %268 = vadd.xlane.f32.xlu0 %v267
      %v269 = vpop.xlane.xlu0 %268
      %v270 = vmul.f32 %v237, %v237
      %v271 = vmul.f32 %v238, %v238
      %v273 = vsel %vm241, 1.0, 0
      %v276 = vsel %vm241, %v270, 0
      %v279 = vsel %vm241, %v271, 0
      %281 = vmatpush.xpose.msra.mxu0 0.0
      %282 = vmatpush.xpose.msra.mxu0 0.0
      %283 = vmatpush.xpose.msra.mxu0 0.0
      %284 = vmatpush.xpose.msra.mxu0 0.0
      %285 = vmatpush.xpose.msra.mxu0 0.0
      %286 = vmatpush.xpose.msra.mxu0 0.0
      %287 = vmatpush.xpose.msra.mxu0 0.0
      %288 = vmatpush.xpose.msra.mxu0 0.0
      %289 = vmatpush.xpose.msra.mxu0 0.0
      %290 = vmatpush.xpose.msra.mxu0 0.0
      %291 = vmatpush.xpose.msra.mxu0 0.0
      %292 = vmatpush.xpose.msra.mxu0 0.0
      %293 = vmatpush.xpose.msra.mxu0 0.0
      %294 = vmatpush.xpose.msra.mxu0 0.0
      %295 = vmatpush.xpose.msra.mxu0 %v279
      %296 = vmatpush.xpose.msra.mxu0 %v276
      %297 = vmatmul.f32.gmra.mxu0 %v273
      %v298 = vpop.f32.mrf.mxu0
      %v299 = vadd.f32 0.0, %v298
      %300 = vdwg.mxu0
      %v301 = vmul.f32 %v258, 2.0
      %v302 = vmul.f32 %v260, 2.0
      %v303 = vsub.f32 %v301, %v266
      %v304 = vsub.f32 %v302, %v269
      %v305 = vperm.slane %v299, 0
      %v306 = vsub.f32 %v303, %v305
      %v307 = vsub.f32 %v304, %v305
      %v308 = vpack.c.bf16 %v306, %v306
      %v309 = vpack.c.bf16 %v307, %v307
      %vm310 = vcmask 125952
      %311 = vst.msk [vmem:[%s232] sm:$0xf] %vm310, %v308
      %312 = vst.msk [vmem:[%s232 + $0x4] sm:$0xf] %vm310, %v309
      %s313 = smul.u32 2, %s19
      %p314 = scmp.lt.s32.totalorder %s18, 1
      %s315 = scalar_select %p314, %s18, 1
      %p316 = scmp.lt.s32.totalorder %s313, 1
      %s317 = scalar_select %p316, %s313, 1
      %p318 = scmp.lt.s32.totalorder %s20, 0
      %s319 = scalar_select %p318, %s20, 0
      %s320 = sadd.s32 %s319, %s317
      %s321 = smul.addr %s315, 2
      %s322 = sadd.s32 %s320, %s321
      %s323 = smul.addr %s322, 4
      %s324 = scalar_lea.vmem %s2, %s323
      // Predicated region
      $region29: #{dgcnn_seg_feature_fwd.14} parent=27 // pred_check
        %p325 = pneg %p110
      $region30: #{dgcnn_seg_feature_fwd.14} parent=27 // pred_check_branch
        %327 = sbr.rel (%p325) target = $region32
      $region31: #{dgcnn_seg_feature_fwd.14} parent=27 // pred_region
        %s328 = smul.u32 2, %s19
      $region32: #{dgcnn_seg_feature_fwd.14} parent=27 // pred_fallthru
        _
    $region28: #{dgcnn_seg_feature_fwd.14} parent=5 // pred_fallthru
      _
    %p329 = scmp.le.s32.totalorder 2, %s8
    // Predicated region
    $region33: #{dgcnn_seg_feature_fwd.14} parent=5 // pred_check
      %p330 = pneg %p329
    $region34: #{dgcnn_seg_feature_fwd.14} parent=5 // pred_check_branch
      %332 = sbr.rel (%p330) target = $region36
    $region35: #{dgcnn_seg_feature_fwd.14} parent=5 // pred_region
      %s333 = ssub.s32 %s8, 2
      // Predicated region
      $region37: #{dgcnn_seg_feature_fwd.14} parent=35 // pred_check
        %p334 = pneg %p116
      $region38: #{dgcnn_seg_feature_fwd.14} parent=35 // pred_check_branch
        %336 = sbr.rel (%p334) target = $region40
      $region39: #{dgcnn_seg_feature_fwd.14} parent=35 // pred_region
        %s337 = smul.u32 2, %s22
        %p338 = scmp.lt.s32.totalorder %s21, 1
        %s339 = scalar_select %p338, %s21, 1
        %p340 = scmp.lt.s32.totalorder %s337, 1
        %s341 = scalar_select %p340, %s337, 1
        %p342 = scmp.lt.s32.totalorder %s23, 0
        %s343 = scalar_select %p342, %s23, 0
        %s344 = sadd.s32 %s343, %s341
        %s345 = smul.addr %s339, 2
        %s346 = sadd.s32 %s344, %s345
        %s347 = smul.addr %s346, 4
        %s348 = scalar_lea.vmem %s2, %s347
      $region40: #{dgcnn_seg_feature_fwd.14} parent=35 // pred_fallthru
        _
    $region36: #{dgcnn_seg_feature_fwd.14} parent=5 // pred_fallthru
      _
  $region6: #{dgcnn_seg_feature_fwd.14} parent=0 // loop_footer
    %s12 = sadd.s32 1, %s8
  $region7: #{dgcnn_seg_feature_fwd.14} parent=0 // loop_footer_branch
    %7 = sbr.rel target = $region3
  $region8: #{dgcnn_seg_feature_fwd.14} parent=0 // loop_exit
    _

// kernel: dgcnn_seg_feature_fwd.16
$region0: #{dgcnn_seg_feature_fwd.16}
  #allocation0 [shape = 'u32[]', space=smem, size = 0x4, offset = 0x4, fixed_abs, tag = 'smem constant byte address 0x4 - core index']
  #allocation1 [shape = 'u32[72,128]{1,0:T(1,128)}', space=vmem, size = 0x9000, scoped, tag = 'internal scratch']
  %s0 = inlined_call_operand.vmem [shape: bf16[32,64], index: 0, kind: input, shape index: {}]
  %s1 = inlined_call_operand.vmem [shape: bf16[32,4,64], index: 1, kind: input, shape index: {}]
  %s2 = inlined_call_operand.hbm [shape: f32[1,64], index: 2, kind: input, shape index: {}]
  %s3 = inlined_call_operand.hbm [shape: f32[1,64], index: 3, kind: input, shape index: {}]
  %s4 = inlined_call_operand.vmem [shape: bf16[64,128], index: 4, kind: input, shape index: {}]
  %s5 = inlined_call_operand.hbm [shape: f32[1,128], index: 5, kind: input, shape index: {}]
  %s6 = inlined_call_operand.hbm [shape: f32[1,128], index: 6, kind: input, shape index: {}]
  %s7 = inlined_call_operand.vmem [shape: bf16[32,128], index: 7, kind: output, shape index: {}]
  %s8 = sld [smem:[#allocation0]]
  $region54: #{dgcnn_seg_feature_fwd.16} parent=0
    _
  %s10 = ssub.s32 1, %s8
  %s11 = scalar_select 0, %s10, %s8
  $region1: #{dgcnn_seg_feature_fwd.16} parent=0
    #allocation2 [shape = 'u8[512]{0}', space=vmem, size = 0x400, scoped, tag = 'input window, operand 2, single buffered']
    #allocation3 [shape = 's32[1]{0}', space=sflag, size = 0x4, scoped, tag = 'scoped memory for dgcnn_seg_feature_fwd.16']
    #allocation4 [shape = 'u8[512]{0}', space=vmem, size = 0x400, scoped, tag = 'input window, operand 3, single buffered']
    #allocation5 [shape = 's32[1]{0}', space=sflag, size = 0x4, scoped, tag = 'scoped memory for dgcnn_seg_feature_fwd.16']
    #allocation6 [shape = 'u8[512]{0}', space=vmem, size = 0x400, scoped, tag = 'input window, operand 5, single buffered']
    #allocation7 [shape = 'u8[512]{0}', space=vmem, size = 0x400, scoped, tag = 'input window, operand 6, single buffered']
    #allocation8 [shape = 's32[1]{0}', space=sflag, size = 0x4, scoped, tag = 'scoped memory for dgcnn_seg_feature_fwd.16']
    %12 = vsyncpa [#allocation3], 0
    %13 = vsyncpa [#allocation5], 0
    %14 = vsyncpa [#allocation8], 0
    // Predicated region
    $region2: #{dgcnn_seg_feature_fwd.16} parent=1 // pred_check
      _
    $region3: #{dgcnn_seg_feature_fwd.16} parent=1 // pred_check_branch
      %16 = sbr.rel (0) target = $region5
    $region4: #{dgcnn_seg_feature_fwd.16} parent=1 // pred_region
      _
    $region5: #{dgcnn_seg_feature_fwd.16} parent=1 // pred_fallthru
      _
    // Predicated region
    $region6: #{dgcnn_seg_feature_fwd.16} parent=1 // pred_check
      _
    $region7: #{dgcnn_seg_feature_fwd.16} parent=1 // pred_check_branch
      %18 = sbr.rel (0) target = $region9
    $region8: #{dgcnn_seg_feature_fwd.16} parent=1 // pred_region
      _
    $region9: #{dgcnn_seg_feature_fwd.16} parent=1 // pred_fallthru
      _
    // Predicated region
    $region10: #{dgcnn_seg_feature_fwd.16} parent=1 // pred_check
      _
    $region11: #{dgcnn_seg_feature_fwd.16} parent=1 // pred_check_branch
      %20 = sbr.rel (0) target = $region13
    $region12: #{dgcnn_seg_feature_fwd.16} parent=1 // pred_region
      %22 = vsyncadd [#allocation3], 0
      %s24 = sshll.u32 %s2, 4
      %s25 = int_to_ptr.hbm [resolvable:$true] %s24
      %s26 = sshll.u32 [#allocation2], 4
      %s27 = int_to_ptr.vmem [resolvable:$true] %s26
      %29 = dma.hbm_to_vmem [thread:$0]  %s25, 16, %s27, [#allocation3]
    $region13: #{dgcnn_seg_feature_fwd.16} parent=1 // pred_fallthru
      _
    // Predicated region
    $region14: #{dgcnn_seg_feature_fwd.16} parent=1 // pred_check
      _
    $region15: #{dgcnn_seg_feature_fwd.16} parent=1 // pred_check_branch
      %31 = sbr.rel (0) target = $region17
    $region16: #{dgcnn_seg_feature_fwd.16} parent=1 // pred_region
      %33 = vsyncadd [#allocation5], 0
      %s35 = sshll.u32 %s3, 4
      %s36 = int_to_ptr.hbm [resolvable:$true] %s35
      %s37 = sshll.u32 [#allocation4], 4
      %s38 = int_to_ptr.vmem [resolvable:$true] %s37
      %40 = dma.hbm_to_vmem [thread:$0]  %s36, 16, %s38, [#allocation5]
    $region17: #{dgcnn_seg_feature_fwd.16} parent=1 // pred_fallthru
      _
    // Predicated region
    $region18: #{dgcnn_seg_feature_fwd.16} parent=1 // pred_check
      _
    $region19: #{dgcnn_seg_feature_fwd.16} parent=1 // pred_check_branch
      %42 = sbr.rel (0) target = $region21
    $region20: #{dgcnn_seg_feature_fwd.16} parent=1 // pred_region
      _
    $region21: #{dgcnn_seg_feature_fwd.16} parent=1 // pred_fallthru
      _
    // Predicated region
    $region22: #{dgcnn_seg_feature_fwd.16} parent=1 // pred_check
      _
    $region23: #{dgcnn_seg_feature_fwd.16} parent=1 // pred_check_branch
      %44 = sbr.rel (0) target = $region25
    $region24: #{dgcnn_seg_feature_fwd.16} parent=1 // pred_region
      %46 = vsyncadd [#allocation5], 0
      %s48 = sshll.u32 %s5, 4
      %s49 = int_to_ptr.hbm [resolvable:$true] %s48
      %s50 = sshll.u32 [#allocation6], 4
      %s51 = int_to_ptr.vmem [resolvable:$true] %s50
      %53 = dma.hbm_to_vmem [thread:$0]  %s49, 16, %s51, [#allocation5]
    $region25: #{dgcnn_seg_feature_fwd.16} parent=1 // pred_fallthru
      _
    // Predicated region
    $region26: #{dgcnn_seg_feature_fwd.16} parent=1 // pred_check
      _
    $region27: #{dgcnn_seg_feature_fwd.16} parent=1 // pred_check_branch
      %55 = sbr.rel (0) target = $region29
    $region28: #{dgcnn_seg_feature_fwd.16} parent=1 // pred_region
      %57 = vsyncadd [#allocation8], 0
      %s59 = sshll.u32 %s6, 4
      %s60 = int_to_ptr.hbm [resolvable:$true] %s59
      %s61 = sshll.u32 [#allocation7], 4
      %s62 = int_to_ptr.vmem [resolvable:$true] %s61
      %64 = dma.hbm_to_vmem [thread:$0]  %s60, 16, %s62, [#allocation8]
    $region29: #{dgcnn_seg_feature_fwd.16} parent=1 // pred_fallthru
      _
    // Predicated region
    $region30: #{dgcnn_seg_feature_fwd.16} parent=1 // pred_check
      _
    $region31: #{dgcnn_seg_feature_fwd.16} parent=1 // pred_check_branch
      %66 = sbr.rel (0) target = $region33
    $region32: #{dgcnn_seg_feature_fwd.16} parent=1 // pred_region
      %68 = dma.done [#allocation3], 16
    $region33: #{dgcnn_seg_feature_fwd.16} parent=1 // pred_fallthru
      _
    // Predicated region
    $region34: #{dgcnn_seg_feature_fwd.16} parent=1 // pred_check
      _
    $region35: #{dgcnn_seg_feature_fwd.16} parent=1 // pred_check_branch
      %70 = sbr.rel (0) target = $region37
    $region36: #{dgcnn_seg_feature_fwd.16} parent=1 // pred_region
      %72 = dma.done [#allocation5], 16
    $region37: #{dgcnn_seg_feature_fwd.16} parent=1 // pred_fallthru
      _
    // Predicated region
    $region38: #{dgcnn_seg_feature_fwd.16} parent=1 // pred_check
      _
    $region39: #{dgcnn_seg_feature_fwd.16} parent=1 // pred_check_branch
      %74 = sbr.rel (0) target = $region41
    $region40: #{dgcnn_seg_feature_fwd.16} parent=1 // pred_region
      %76 = dma.done [#allocation5], 16
    $region41: #{dgcnn_seg_feature_fwd.16} parent=1 // pred_fallthru
      _
    // Predicated region
    $region42: #{dgcnn_seg_feature_fwd.16} parent=1 // pred_check
      _
    $region43: #{dgcnn_seg_feature_fwd.16} parent=1 // pred_check_branch
      %78 = sbr.rel (0) target = $region45
    $region44: #{dgcnn_seg_feature_fwd.16} parent=1 // pred_region
      %80 = dma.done [#allocation8], 16
    $region45: #{dgcnn_seg_feature_fwd.16} parent=1 // pred_fallthru
      _
    %v82 = vld [vmem:[%s0] sm:$0xf]
    %v83 = vld [vmem:[%s0 + $0x4] sm:$0xf]
    %v84 = vld [vmem:[%s0 + $0x8] sm:$0xf]
    %v85 = vld [vmem:[%s0 + $0xc] sm:$0xf]
    %v86 = vunpack.c.l.bf16 %v82
    %v87 = vunpack.c.l.bf16 %v83
    %v88 = vunpack.c.l.bf16 %v84
    %v89 = vunpack.c.l.bf16 %v85
    %v90 = vld [vmem:[%s1] sm:$0x3]
    %v91 = vld [vmem:[%s1 + $0x2] sm:$0x3]
    %v92 = vld [vmem:[%s1 + $0x4] sm:$0x3]
    %v93 = vld [vmem:[%s1 + $0x6] sm:$0x3]
    %v94 = vld [vmem:[%s1 + $0x8] sm:$0x3]
    %v95 = vld [vmem:[%s1 + $0xa] sm:$0x3]
    %v96 = vld [vmem:[%s1 + $0xc] sm:$0x3]
    %v97 = vld [vmem:[%s1 + $0xe] sm:$0x3]
    %v98 = vld [vmem:[%s1 + $0x10] sm:$0x3]
    %v99 = vld [vmem:[%s1 + $0x12] sm:$0x3]
    %v100 = vld [vmem:[%s1 + $0x14] sm:$0x3]
    %v101 = vld [vmem:[%s1 + $0x16] sm:$0x3]
    %v102 = vld [vmem:[%s1 + $0x18] sm:$0x3]
    %v103 = vld [vmem:[%s1 + $0x1a] sm:$0x3]
    %v104 = vld [vmem:[%s1 + $0x1c] sm:$0x3]
    %v105 = vld [vmem:[%s1 + $0x1e] sm:$0x3]
    %v106 = vld [vmem:[%s1 + $0x20] sm:$0x3]
    %v107 = vld [vmem:[%s1 + $0x22] sm:$0x3]
    %v108 = vld [vmem:[%s1 + $0x24] sm:$0x3]
    %v109 = vld [vmem:[%s1 + $0x26] sm:$0x3]
    %v110 = vld [vmem:[%s1 + $0x28] sm:$0x3]
    %v111 = vld [vmem:[%s1 + $0x2a] sm:$0x3]
    %v112 = vld [vmem:[%s1 + $0x2c] sm:$0x3]
    %v113 = vld [vmem:[%s1 + $0x2e] sm:$0x3]
    %v114 = vld [vmem:[%s1 + $0x30] sm:$0x3]
    %v115 = vld [vmem:[%s1 + $0x32] sm:$0x3]
    %v116 = vld [vmem:[%s1 + $0x34] sm:$0x3]
    %v117 = vld [vmem:[%s1 + $0x36] sm:$0x3]
    %v118 = vld [vmem:[%s1 + $0x38] sm:$0x3]
    %v119 = vld [vmem:[%s1 + $0x3a] sm:$0x3]
    %v120 = vld [vmem:[%s1 + $0x3c] sm:$0x3]
    %v121 = vld [vmem:[%s1 + $0x3e] sm:$0x3]
    %v122 = vunpack.c.l.bf16 %v90
    %v123 = vunpack.c.l.bf16 %v91
    %v124 = vunpack.c.l.bf16 %v92
    %v125 = vunpack.c.l.bf16 %v93
    %v126 = vunpack.c.l.bf16 %v94
    %v127 = vunpack.c.l.bf16 %v95
    %v128 = vunpack.c.l.bf16 %v96
    %v129 = vunpack.c.l.bf16 %v97
    %v130 = vunpack.c.l.bf16 %v98
    %v131 = vunpack.c.l.bf16 %v99
    %v132 = vunpack.c.l.bf16 %v100
    %v133 = vunpack.c.l.bf16 %v101
    %v134 = vunpack.c.l.bf16 %v102
    %v135 = vunpack.c.l.bf16 %v103
    %v136 = vunpack.c.l.bf16 %v104
    %v137 = vunpack.c.l.bf16 %v105
    %v138 = vunpack.c.l.bf16 %v106
    %v139 = vunpack.c.l.bf16 %v107
    %v140 = vunpack.c.l.bf16 %v108
    %v141 = vunpack.c.l.bf16 %v109
    %v142 = vunpack.c.l.bf16 %v110
    %v143 = vunpack.c.l.bf16 %v111
    %v144 = vunpack.c.l.bf16 %v112
    %v145 = vunpack.c.l.bf16 %v113
    %v146 = vunpack.c.l.bf16 %v114
    %v147 = vunpack.c.l.bf16 %v115
    %v148 = vunpack.c.l.bf16 %v116
    %v149 = vunpack.c.l.bf16 %v117
    %v150 = vunpack.c.l.bf16 %v118
    %v151 = vunpack.c.l.bf16 %v119
    %v152 = vunpack.c.l.bf16 %v120
    %v153 = vunpack.c.l.bf16 %v121
    %v154 = vld [vmem:[#allocation2] sm:$0x1]
    %v155 = vld [vmem:[#allocation4] sm:$0x1]
    %v188 = vperm.slane %v122, 0
    %v189 = vperm.slane %v123, 0
    %v190 = vperm.slane %v124, 0
    %v191 = vperm.slane %v125, 0
    %v192 = vperm.slane %v126, 0
    %v193 = vperm.slane %v127, 0
    %v194 = vperm.slane %v128, 0
    %v195 = vperm.slane %v129, 0
    %v196 = vperm.slane %v130, 0
    %v197 = vperm.slane %v131, 0
    %v198 = vperm.slane %v132, 0
    %v199 = vperm.slane %v133, 0
    %v200 = vperm.slane %v134, 0
    %v201 = vperm.slane %v135, 0
    %v202 = vperm.slane %v136, 0
    %v203 = vperm.slane %v137, 0
    %v204 = vperm.slane %v138, 0
    %v205 = vperm.slane %v139, 0
    %v206 = vperm.slane %v140, 0
    %v207 = vperm.slane %v141, 0
    %v208 = vperm.slane %v142, 0
    %v209 = vperm.slane %v143, 0
    %v210 = vperm.slane %v144, 0
    %v211 = vperm.slane %v145, 0
    %v212 = vperm.slane %v146, 0
    %v213 = vperm.slane %v147, 0
    %v214 = vperm.slane %v148, 0
    %v215 = vperm.slane %v149, 0
    %v216 = vperm.slane %v150, 0
    %v217 = vperm.slane %v151, 0
    %v218 = vperm.slane %v152, 0
    %v219 = vperm.slane %v153, 0
    %vm220 = vcmask 1041409
    %v221 = vsel %vm220, %v189, %v188
    %vm222 = vcmask 1042434
    %v223 = vsel %vm222, %v190, %v221
    %vm224 = vcmask 1043459
    %v225 = vsel %vm224, %v191, %v223
    %vm226 = vcmask 1044484
    %v227 = vsel %vm226, %v192, %v225
    %vm228 = vcmask 1045509
    %v229 = vsel %vm228, %v193, %v227
    %vm230 = vcmask 1046534
    %v231 = vsel %vm230, %v194, %v229
    %vm232 = vcmask 1047559
    %v233 = vsel %vm232, %v195, %v231
    %v234 = vsel %vm220, %v197, %v196
    %v235 = vsel %vm222, %v198, %v234
    %v236 = vsel %vm224, %v199, %v235
    %v237 = vsel %vm226, %v200, %v236
    %v238 = vsel %vm228, %v201, %v237
    %v239 = vsel %vm230, %v202, %v238
    %v240 = vsel %vm232, %v203, %v239
    %v241 = vsel %vm220, %v205, %v204
    %v242 = vsel %vm222, %v206, %v241
    %v243 = vsel %vm224, %v207, %v242
    %v244 = vsel %vm226, %v208, %v243
    %v245 = vsel %vm228, %v209, %v244
    %v246 = vsel %vm230, %v210, %v245
    %v247 = vsel %vm232, %v211, %v246
    %v248 = vsel %vm220, %v213, %v212
    %v249 = vsel %vm222, %v214, %v248
    %v250 = vsel %vm224, %v215, %v249
    %v251 = vsel %vm226, %v216, %v250
    %v252 = vsel %vm228, %v217, %v251
    %v253 = vsel %vm230, %v218, %v252
    %v254 = vsel %vm232, %v219, %v253
    %v259 = vadd.f32 %v86, %v233
    %v260 = vadd.f32 %v87, %v240
    %v261 = vadd.f32 %v88, %v247
    %v262 = vadd.f32 %v89, %v254
    %v264 = vperm.slane %v154, 0
    %v266 = vmul.f32 %v259, %v264
    %v267 = vmul.f32 %v260, %v264
    %v268 = vmul.f32 %v261, %v264
    %v269 = vmul.f32 %v262, %v264
    %v271 = vperm.slane %v155, 0
    %v273 = vadd.f32 %v266, %v271
    %v274 = vadd.f32 %v267, %v271
    %v275 = vadd.f32 %v268, %v271
    %v276 = vadd.f32 %v269, %v271
    %v277 = vmax.f32 %v273, 0.0
    %v278 = vmax.f32 %v274, 0.0
    %v279 = vmax.f32 %v275, 0.0
    %v280 = vmax.f32 %v276, 0.0
    %v281 = vperm.slane %v122, 1
    %v282 = vperm.slane %v123, 1
    %v283 = vperm.slane %v124, 1
    %v284 = vperm.slane %v125, 1
    %v285 = vperm.slane %v126, 1
    %v286 = vperm.slane %v127, 1
    %v287 = vperm.slane %v128, 1
    %v288 = vperm.slane %v129, 1
    %v289 = vperm.slane %v130, 1
    %v290 = vperm.slane %v131, 1
    %v291 = vperm.slane %v132, 1
    %v292 = vperm.slane %v133, 1
    %v293 = vperm.slane %v134, 1
    %v294 = vperm.slane %v135, 1
    %v295 = vperm.slane %v136, 1
    %v296 = vperm.slane %v137, 1
    %v297 = vperm.slane %v138, 1
    %v298 = vperm.slane %v139, 1
    %v299 = vperm.slane %v140, 1
    %v300 = vperm.slane %v141, 1
    %v301 = vperm.slane %v142, 1
    %v302 = vperm.slane %v143, 1
    %v303 = vperm.slane %v144, 1
    %v304 = vperm.slane %v145, 1
    %v305 = vperm.slane %v146, 1
    %v306 = vperm.slane %v147, 1
    %v307 = vperm.slane %v148, 1
    %v308 = vperm.slane %v149, 1
    %v309 = vperm.slane %v150, 1
    %v310 = vperm.slane %v151, 1
    %v311 = vperm.slane %v152, 1
    %v312 = vperm.slane %v153, 1
    %v313 = vsel %vm220, %v282, %v281
    %v314 = vsel %vm222, %v283, %v313
    %v315 = vsel %vm224, %v284, %v314
    %v316 = vsel %vm226, %v285, %v315
    %v317 = vsel %vm228, %v286, %v316
    %v318 = vsel %vm230, %v287, %v317
    %v319 = vsel %vm232, %v288, %v318
    %v320 = vsel %vm220, %v290, %v289
    %v321 = vsel %vm222, %v291, %v320
    %v322 = vsel %vm224, %v292, %v321
    %v323 = vsel %vm226, %v293, %v322
    %v324 = vsel %vm228, %v294, %v323
    %v325 = vsel %vm230, %v295, %v324
    %v326 = vsel %vm232, %v296, %v325
    %v327 = vsel %vm220, %v298, %v297
    %v328 = vsel %vm222, %v299, %v327
    %v329 = vsel %vm224, %v300, %v328
    %v330 = vsel %vm226, %v301, %v329
    %v331 = vsel %vm228, %v302, %v330
    %v332 = vsel %vm230, %v303, %v331
    %v333 = vsel %vm232, %v304, %v332
    %v334 = vsel %vm220, %v306, %v305
    %v335 = vsel %vm222, %v307, %v334
    %v336 = vsel %vm224, %v308, %v335
    %v337 = vsel %vm226, %v309, %v336
    %v338 = vsel %vm228, %v310, %v337
    %v339 = vsel %vm230, %v311, %v338
    %v340 = vsel %vm232, %v312, %v339
    %v345 = vadd.f32 %v86, %v319
    %v346 = vadd.f32 %v87, %v326
    %v347 = vadd.f32 %v88, %v333
    %v348 = vadd.f32 %v89, %v340
    %v349 = vmul.f32 %v345, %v264
    %v350 = vmul.f32 %v346, %v264
    %v351 = vmul.f32 %v347, %v264
    %v352 = vmul.f32 %v348, %v264
    %v353 = vadd.f32 %v349, %v271
    %v354 = vadd.f32 %v350, %v271
    %v355 = vadd.f32 %v351, %v271
    %v356 = vadd.f32 %v352, %v271
    %v357 = vmax.f32 %v353, 0.0
    %v358 = vmax.f32 %v354, 0.0
    %v359 = vmax.f32 %v355, 0.0
    %v360 = vmax.f32 %v356, 0.0
    %v361 = vperm.slane %v122, 2
    %v362 = vperm.slane %v123, 2
    %v363 = vperm.slane %v124, 2
    %v364 = vperm.slane %v125, 2
    %v365 = vperm.slane %v126, 2
    %v366 = vperm.slane %v127, 2
    %v367 = vperm.slane %v128, 2
    %v368 = vperm.slane %v129, 2
    %v369 = vperm.slane %v130, 2
    %v370 = vperm.slane %v131, 2
    %v371 = vperm.slane %v132, 2
    %v372 = vperm.slane %v133, 2
    %v373 = vperm.slane %v134, 2
    %v374 = vperm.slane %v135, 2
    %v375 = vperm.slane %v136, 2
    %v376 = vperm.slane %v137, 2
    %v377 = vperm.slane %v138, 2
    %v378 = vperm.slane %v139, 2
    %v379 = vperm.slane %v140, 2
    %v380 = vperm.slane %v141, 2
    %v381 = vperm.slane %v142, 2
    %v382 = vperm.slane %v143, 2
    %v383 = vperm.slane %v144, 2
    %v384 = vperm.slane %v145, 2
    %v385 = vperm.slane %v146, 2
    %v386 = vperm.slane %v147, 2
    %v387 = vperm.slane %v148, 2
    %v388 = vperm.slane %v149, 2
    %v389 = vperm.slane %v150, 2
    %v390 = vperm.slane %v151, 2
    %v391 = vperm.slane %v152, 2
    %v392 = vperm.slane %v153, 2
    %v393 = vsel %vm220, %v362, %v361
    %v394 = vsel %vm222, %v363, %v393
    %v395 = vsel %vm224, %v364, %v394
    %v396 = vsel %vm226, %v365, %v395
    %v397 = vsel %vm228, %v366, %v396
    %v398 = vsel %vm230, %v367, %v397
    %v399 = vsel %vm232, %v368, %v398
    %v400 = vsel %vm220, %v370, %v369
    %v401 = vsel %vm222, %v371, %v400
    %v402 = vsel %vm224, %v372, %v401
    %v403 = vsel %vm226, %v373, %v402
    %v404 = vsel %vm228, %v374, %v403
    %v405 = vsel %vm230, %v375, %v404
    %v406 = vsel %vm232, %v376, %v405
    %v407 = vsel %vm220, %v378, %v377
    %v408 = vsel %vm222, %v379, %v407
    %v409 = vsel %vm224, %v380, %v408
    %v410 = vsel %vm226, %v381, %v409
    %v411 = vsel %vm228, %v382, %v410
    %v412 = vsel %vm230, %v383, %v411
    %v413 = vsel %vm232, %v384, %v412
    %v414 = vsel %vm220, %v386, %v385
    %v415 = vsel %vm222, %v387, %v414
    %v416 = vsel %vm224, %v388, %v415
    %v417 = vsel %vm226, %v389, %v416
    %v418 = vsel %vm228, %v390, %v417
    %v419 = vsel %vm230, %v391, %v418
    %v420 = vsel %vm232, %v392, %v419
    %v425 = vadd.f32 %v86, %v399
    %v426 = vadd.f32 %v87, %v406
    %v427 = vadd.f32 %v88, %v413
    %v428 = vadd.f32 %v89, %v420
    %v429 = vmul.f32 %v425, %v264
    %v430 = vmul.f32 %v426, %v264
    %v431 = vmul.f32 %v427, %v264
    %v432 = vmul.f32 %v428, %v264
    %v433 = vadd.f32 %v429, %v271
    %v434 = vadd.f32 %v430, %v271
    %v435 = vadd.f32 %v431, %v271
    %v436 = vadd.f32 %v432, %v271
    %v437 = vmax.f32 %v433, 0.0
    %v438 = vmax.f32 %v434, 0.0
    %v439 = vmax.f32 %v435, 0.0
    %v440 = vmax.f32 %v436, 0.0
    %v441 = vperm.slane %v122, 3
    %v442 = vperm.slane %v123, 3
    %v443 = vperm.slane %v124, 3
    %v444 = vperm.slane %v125, 3
    %v445 = vperm.slane %v126, 3
    %v446 = vperm.slane %v127, 3
    %v447 = vperm.slane %v128, 3
    %v448 = vperm.slane %v129, 3
    %v449 = vperm.slane %v130, 3
    %v450 = vperm.slane %v131, 3
    %v451 = vperm.slane %v132, 3
    %v452 = vperm.slane %v133, 3
    %v453 = vperm.slane %v134, 3
    %v454 = vperm.slane %v135, 3
    %v455 = vperm.slane %v136, 3
    %v456 = vperm.slane %v137, 3
    %v457 = vperm.slane %v138, 3
    %v458 = vperm.slane %v139, 3
    %v459 = vperm.slane %v140, 3
    %v460 = vperm.slane %v141, 3
    %v461 = vperm.slane %v142, 3
    %v462 = vperm.slane %v143, 3
    %v463 = vperm.slane %v144, 3
    %v464 = vperm.slane %v145, 3
    %v465 = vperm.slane %v146, 3
    %v466 = vperm.slane %v147, 3
    %v467 = vperm.slane %v148, 3
    %v468 = vperm.slane %v149, 3
    %v469 = vperm.slane %v150, 3
    %v470 = vperm.slane %v151, 3
    %v471 = vperm.slane %v152, 3
    %v472 = vperm.slane %v153, 3
    %v473 = vsel %vm220, %v442, %v441
    %v474 = vsel %vm222, %v443, %v473
    %v475 = vsel %vm224, %v444, %v474
    %v476 = vsel %vm226, %v445, %v475
    %v477 = vsel %vm228, %v446, %v476
    %v478 = vsel %vm230, %v447, %v477
    %v479 = vsel %vm232, %v448, %v478
    %v480 = vsel %vm220, %v450, %v449
    %v481 = vsel %vm222, %v451, %v480
    %v482 = vsel %vm224, %v452, %v481
    %v483 = vsel %vm226, %v453, %v482
    %v484 = vsel %vm228, %v454, %v483
    %v485 = vsel %vm230, %v455, %v484
    %v486 = vsel %vm232, %v456, %v485
    %v487 = vsel %vm220, %v458, %v457
    %v488 = vsel %vm222, %v459, %v487
    %v489 = vsel %vm224, %v460, %v488
    %v490 = vsel %vm226, %v461, %v489
    %v491 = vsel %vm228, %v462, %v490
    %v492 = vsel %vm230, %v463, %v491
    %v493 = vsel %vm232, %v464, %v492
    %v494 = vsel %vm220, %v466, %v465
    %v495 = vsel %vm222, %v467, %v494
    %v496 = vsel %vm224, %v468, %v495
    %v497 = vsel %vm226, %v469, %v496
    %v498 = vsel %vm228, %v470, %v497
    %v499 = vsel %vm230, %v471, %v498
    %v500 = vsel %vm232, %v472, %v499
    %v505 = vadd.f32 %v86, %v479
    %v506 = vadd.f32 %v87, %v486
    %v507 = vadd.f32 %v88, %v493
    %v508 = vadd.f32 %v89, %v500
    %v509 = vmul.f32 %v505, %v264
    %v510 = vmul.f32 %v506, %v264
    %v511 = vmul.f32 %v507, %v264
    %v512 = vmul.f32 %v508, %v264
    %v513 = vadd.f32 %v509, %v271
    %v514 = vadd.f32 %v510, %v271
    %v515 = vadd.f32 %v511, %v271
    %v516 = vadd.f32 %v512, %v271
    %v517 = vmax.f32 %v513, 0.0
    %v518 = vmax.f32 %v514, 0.0
    %v519 = vmax.f32 %v515, 0.0
    %v520 = vmax.f32 %v516, 0.0
    %v521 = vpack.c.bf16 %v278, %v277
    %v522 = vpack.c.bf16 %v280, %v279
    %v523 = vpack.c.bf16 %v358, %v357
    %v524 = vpack.c.bf16 %v360, %v359
    %v525 = vpack.c.bf16 %v438, %v437
    %v526 = vpack.c.bf16 %v440, %v439
    %v527 = vpack.c.bf16 %v518, %v517
    %v528 = vpack.c.bf16 %v520, %v519
    %v529 = vld [vmem:[%s4] sm:$0xf]
    %v530 = vld [vmem:[%s4 + $0x4] sm:$0xf]
    %v531 = vld [vmem:[%s4 + $0x8] sm:$0xf]
    %v532 = vld [vmem:[%s4 + $0xc] sm:$0xf]
    %v533 = vld [vmem:[%s4 + $0x10] sm:$0xf]
    %v534 = vld [vmem:[%s4 + $0x14] sm:$0xf]
    %v535 = vld [vmem:[%s4 + $0x18] sm:$0xf]
    %v536 = vld [vmem:[%s4 + $0x1c] sm:$0xf]
    %v545 = vunpack.c.l.b16 %v529
    %v546 = vunpack.c.l.b16 %v530
    %v547 = vunpack.c.l.b16 %v531
    %v548 = vunpack.c.l.b16 %v532
    %v549 = vunpack.c.l.b16 %v533
    %v550 = vunpack.c.l.b16 %v534
    %v551 = vunpack.c.l.b16 %v535
    %v552 = vunpack.c.l.b16 %v536
    %v553 = vpack.c.b16 %v546, %v545
    %v554 = vpack.c.b16 %v548, %v547
    %v555 = vpack.c.b16 %v550, %v549
    %v556 = vpack.c.b16 %v552, %v551
    %vm561 = vcmask 523264
    %v563 = vsel %vm561, %v521, 0
    %v566 = vsel %vm561, %v522, 0
    %v569 = vsel %vm561, %v523, 0
    %v572 = vsel %vm561, %v524, 0
    %v575 = vsel %vm561, %v525, 0
    %v578 = vsel %vm561, %v526, 0
    %v581 = vsel %vm561, %v527, 0
    %v584 = vsel %vm561, %v528, 0
    %586 = vmatpush.bf16.msra.mxu0 0
    %587 = vmatpush.bf16.msra.mxu0 0
    %588 = vmatpush.bf16.msra.mxu0 0
    %589 = vmatpush.bf16.msra.mxu0 0
    %590 = vmatpush.bf16.msra.mxu0 %v556
    %591 = vmatpush.bf16.msra.mxu0 %v555
    %592 = vmatpush.bf16.msra.mxu0 %v554
    %593 = vmatpush.bf16.msra.mxu0 %v553
    %594 = vmatmul.bf16.gmra.mxu0 %v563
    %v595 = vpop.f32.mrf.mxu0
    %v596 = vadd.f32 0.0, %v595
    %v597 = vpop.f32.mrf.mxu0
    %v598 = vadd.f32 0.0, %v597
    %599 = vmatmul.bf16.gmra.mxu0 %v566
    %v600 = vpop.f32.mrf.mxu0
    %v601 = vadd.f32 0.0, %v600
    %v602 = vpop.f32.mrf.mxu0
    %v603 = vadd.f32 0.0, %v602
    %604 = vmatmul.bf16.gmra.mxu0 %v569
    %v605 = vpop.f32.mrf.mxu0
    %v606 = vadd.f32 0.0, %v605
    %v607 = vpop.f32.mrf.mxu0
    %v608 = vadd.f32 0.0, %v607
    %609 = vmatmul.bf16.gmra.mxu0 %v572
    %v610 = vpop.f32.mrf.mxu0
    %v611 = vadd.f32 0.0, %v610
    %v612 = vpop.f32.mrf.mxu0
    %v613 = vadd.f32 0.0, %v612
    %614 = vmatmul.bf16.gmra.mxu0 %v575
    %v615 = vpop.f32.mrf.mxu0
    %v616 = vadd.f32 0.0, %v615
    %v617 = vpop.f32.mrf.mxu0
    %v618 = vadd.f32 0.0, %v617
    %619 = vmatmul.bf16.gmra.mxu0 %v578
    %v620 = vpop.f32.mrf.mxu0
    %v621 = vadd.f32 0.0, %v620
    %v622 = vpop.f32.mrf.mxu0
    %v623 = vadd.f32 0.0, %v622
    %624 = vmatmul.bf16.gmra.mxu0 %v581
    %v625 = vpop.f32.mrf.mxu0
    %v626 = vadd.f32 0.0, %v625
    %v627 = vpop.f32.mrf.mxu0
    %v628 = vadd.f32 0.0, %v627
    %629 = vmatmul.bf16.gmra.mxu0 %v584
    %v630 = vpop.f32.mrf.mxu0
    %v631 = vadd.f32 0.0, %v630
    %v632 = vpop.f32.mrf.mxu0
    %v633 = vadd.f32 0.0, %v632
    %634 = vdwg.mxu0
    %v635 = vld [vmem:[#allocation6] sm:$0x1]
    %v637 = vperm.slane %v635, 0
    %v639 = vmul.f32 %v596, %v637
    %v640 = vmul.f32 %v598, %v637
    %v641 = vmul.f32 %v601, %v637
    %v642 = vmul.f32 %v603, %v637
    %v643 = vmul.f32 %v606, %v637
    %v644 = vmul.f32 %v608, %v637
    %v645 = vmul.f32 %v611, %v637
    %v646 = vmul.f32 %v613, %v637
    %v647 = vmul.f32 %v616, %v637
    %v648 = vmul.f32 %v618, %v637
    %v649 = vmul.f32 %v621, %v637
    %v650 = vmul.f32 %v623, %v637
    %v651 = vmul.f32 %v626, %v637
    %v652 = vmul.f32 %v628, %v637
    %v653 = vmul.f32 %v631, %v637
    %v654 = vmul.f32 %v633, %v637
    %v655 = vld [vmem:[#allocation7] sm:$0x1]
    %v657 = vperm.slane %v655, 0
    %v659 = vadd.f32 %v639, %v657
    %v660 = vadd.f32 %v640, %v657
    %v661 = vadd.f32 %v641, %v657
    %v662 = vadd.f32 %v642, %v657
    %v663 = vadd.f32 %v643, %v657
    %v664 = vadd.f32 %v644, %v657
    %v665 = vadd.f32 %v645, %v657
    %v666 = vadd.f32 %v646, %v657
    %v667 = vadd.f32 %v647, %v657
    %v668 = vadd.f32 %v648, %v657
    %v669 = vadd.f32 %v649, %v657
    %v670 = vadd.f32 %v650, %v657
    %v671 = vadd.f32 %v651, %v657
    %v672 = vadd.f32 %v652, %v657
    %v673 = vadd.f32 %v653, %v657
    %v674 = vadd.f32 %v654, %v657
    %v675 = vmax.f32 %v659, 0.0
    %v676 = vmax.f32 %v660, 0.0
    %v677 = vmax.f32 %v661, 0.0
    %v678 = vmax.f32 %v662, 0.0
    %v679 = vmax.f32 %v663, 0.0
    %v680 = vmax.f32 %v664, 0.0
    %v681 = vmax.f32 %v665, 0.0
    %v682 = vmax.f32 %v666, 0.0
    %v683 = vmax.f32 %v667, 0.0
    %v684 = vmax.f32 %v668, 0.0
    %v685 = vmax.f32 %v669, 0.0
    %v686 = vmax.f32 %v670, 0.0
    %v687 = vmax.f32 %v671, 0.0
    %v688 = vmax.f32 %v672, 0.0
    %v689 = vmax.f32 %v673, 0.0
    %v690 = vmax.f32 %v674, 0.0
    %v691 = vmax.f32 %v675, %v679
    %v692 = vmax.f32 %v676, %v680
    %v693 = vmax.f32 %v677, %v681
    %v694 = vmax.f32 %v678, %v682
    %v695 = vmax.f32 %v691, %v683
    %v696 = vmax.f32 %v692, %v684
    %v697 = vmax.f32 %v693, %v685
    %v698 = vmax.f32 %v694, %v686
    %v699 = vmax.f32 %v695, %v687
    %v700 = vmax.f32 %v696, %v688
    %v701 = vmax.f32 %v697, %v689
    %v702 = vmax.f32 %v698, %v690
    %v703 = vpack.c.bf16 %v699, %v699
    %v704 = vpack.c.bf16 %v700, %v700
    %v705 = vpack.c.bf16 %v701, %v701
    %v706 = vpack.c.bf16 %v702, %v702
    %707 = vst [vmem:[%s7] sm:$0xf] %v703
    %708 = vst [vmem:[%s7 + $0x4] sm:$0xf] %v704
    %709 = vst [vmem:[%s7 + $0x8] sm:$0xf] %v705
    %710 = vst [vmem:[%s7 + $0xc] sm:$0xf] %v706
    // Predicated region
    $region46: #{dgcnn_seg_feature_fwd.16} parent=1 // pred_check
      _
    $region47: #{dgcnn_seg_feature_fwd.16} parent=1 // pred_check_branch
      %712 = sbr.rel (0) target = $region49
    $region48: #{dgcnn_seg_feature_fwd.16} parent=1 // pred_region
      _
    $region49: #{dgcnn_seg_feature_fwd.16} parent=1 // pred_fallthru
      _
    // Predicated region
    $region50: #{dgcnn_seg_feature_fwd.16} parent=1 // pred_check
      _
    $region51: #{dgcnn_seg_feature_fwd.16} parent=1 // pred_check_branch
      %714 = sbr.rel (0) target = $region53
    $region52: #{dgcnn_seg_feature_fwd.16} parent=1 // pred_region
      _
    $region53: #{dgcnn_seg_feature_fwd.16} parent=1 // pred_fallthru
      _
    %715 = vsyncpa [#allocation3], 1
    %716 = vsyncpa [#allocation5], 1
    %717 = vsyncpa [#allocation8], 1

// kernel: dgcnn_seg_feature_fwd.17
$region0: #{dgcnn_seg_feature_fwd.17}
  #allocation0 [shape = 'u32[]', space=smem, size = 0x4, offset = 0x4, fixed_abs, tag = 'smem constant byte address 0x4 - core index']
  #allocation1 [shape = 'u32[72,128]{1,0:T(1,128)}', space=vmem, size = 0x9000, scoped, tag = 'internal scratch']
  %s0 = inlined_call_operand.vmem [shape: bf16[2,16,128], index: 0, kind: input, shape index: {}]
  %s1 = inlined_call_operand.vmem [shape: bf16[128,1024], index: 1, kind: input, shape index: {}]
  %s2 = inlined_call_operand.vmem [shape: f32[1,1024], index: 2, kind: input, shape index: {}]
  %s3 = inlined_call_operand.vmem [shape: f32[1,1024], index: 3, kind: input, shape index: {}]
  %s4 = inlined_call_operand.vmem [shape: f32[2,1,1024], index: 4, kind: output, shape index: {}]
  %s5 = sld [smem:[#allocation0]]
  $region57: #{dgcnn_seg_feature_fwd.17} parent=0
    _
  %s7 = ssub.s32 1, %s5
  %s8 = scalar_select 0, %s7, %s5
  loop: start=0, step=1, limit=4
  $region2: #{dgcnn_seg_feature_fwd.17} parent=0 // loop_pre_header
    _
  $region3: #{dgcnn_seg_feature_fwd.17} parent=0 // loop_header
    %s10 = sphi 0, %s14
    %p11 = scmp.ge.s32.totalorder %s10, 4
    %s17 = sphi 0, %s29
    %s18 = sphi 0, %s25
    %s19 = sphi 0, %s17
    %s20 = sphi 0, %s18
    %s21 = sphi 0, %s19
    %s22 = sphi 0, %s20
    %s34 = sphi 0, %s36
    %s37 = sphi 0, %s34
    %s38 = sphi 0, %s37
    %s54 = sphi 0, %s38
    %s58 = sphi 0, %s58
    %s60 = sphi 0, %s58
    %s61 = sphi 0, %s60
    %s75 = sphi 0, %s61
    %s79 = sphi 0, %s79
    %s81 = sphi 0, %s79
    %s82 = sphi 0, %s81
    %s96 = sphi 0, %s82
    %s100 = sphi 0, %s100
    %s102 = sphi 0, %s100
    %s103 = sphi 0, %s102
    %s117 = sphi 0, %s103
    %s123 = sphi 0, %s125
    %s126 = sphi 0, %s123
    %s127 = sphi 0, %s126
    %s143 = sphi 0, %s127
  $region4: #{dgcnn_seg_feature_fwd.17} parent=0 // loop_header_branch
    %13 = sbr.rel (%p11) target = $region8
  $region5: #{dgcnn_seg_feature_fwd.17} parent=0 // loop_body
    %s15 = ssub.s32 %s10, 1
    %s16 = ssub.s32 %s10, 2
    %s23 = sadd.s32 1, %s18
    %p24 = scmp.ge.s32.totalorder %s23, 1
    %s25 = scalar_select %p24, 0, %s23
    %s26 = sadd.s32 1, %s17
    %s27 = scalar_select %p24, %s26, %s17
    %p28 = scmp.ge.s32.totalorder %s27, 2
    %s29 = scalar_select %p28, 0, %s27
    %s30 = ssub.s32 %s17, %s29
    %s31 = ssub.s32 %s18, %s25
    %s32 = sor.u32 %s30, %s31
    %p33 = scmp.eq.s32.totalorder %s32, 0
    %s35 = sadd.s32 %s34, 1
    %s36 = scalar_select %p33, %s34, %s35
    %p39 = pneg %p33
    %p40 = scmp.eq.s32.totalorder %s10, 1
    %p41 = por %p39, %p40
    %p42 = scmp.ne.s32.totalorder %s34, %s37
    %p43 = scmp.eq.s32.totalorder %s10, 0
    %p44 = por %p42, %p43
    %p45 = scmp.ne.s32.totalorder %s34, %s37
    %p46 = scmp.eq.s32.totalorder %s15, 1
    %p47 = por %p45, %p46
    %p48 = scmp.ne.s32.totalorder %s37, %s38
    %p49 = scmp.eq.s32.totalorder %s15, 0
    %p50 = por %p48, %p49
    %p51 = scmp.ne.s32.totalorder %s37, %s38
    %p52 = scmp.eq.s32.totalorder %s16, 1
    %p53 = por %p51, %p52
    %p55 = scmp.ne.s32.totalorder %s38, %s54
    %p56 = scmp.eq.s32.totalorder %s16, 0
    %p57 = por %p55, %p56
    %s59 = sadd.s32 %s58, 1
    %p62 = scmp.eq.s32.totalorder %s10, 1
    %p63 = scmp.ne.s32.totalorder %s58, %s60
    %p64 = scmp.eq.s32.totalorder %s10, 0
    %p65 = por %p63, %p64
    %p66 = scmp.ne.s32.totalorder %s58, %s60
    %p67 = scmp.eq.s32.totalorder %s15, 1
    %p68 = por %p66, %p67
    %p69 = scmp.ne.s32.totalorder %s60, %s61
    %p70 = scmp.eq.s32.totalorder %s15, 0
    %p71 = por %p69, %p70
    %p72 = scmp.ne.s32.totalorder %s60, %s61
    %p73 = scmp.eq.s32.totalorder %s16, 1
    %p74 = por %p72, %p73
    %p76 = scmp.ne.s32.totalorder %s61, %s75
    %p77 = scmp.eq.s32.totalorder %s16, 0
    %p78 = por %p76, %p77
    %s80 = sadd.s32 %s79, 1
    %p83 = scmp.eq.s32.totalorder %s10, 1
    %p84 = scmp.ne.s32.totalorder %s79, %s81
    %p85 = scmp.eq.s32.totalorder %s10, 0
    %p86 = por %p84, %p85
    %p87 = scmp.ne.s32.totalorder %s79, %s81
    %p88 = scmp.eq.s32.totalorder %s15, 1
    %p89 = por %p87, %p88
    %p90 = scmp.ne.s32.totalorder %s81, %s82
    %p91 = scmp.eq.s32.totalorder %s15, 0
    %p92 = por %p90, %p91
    %p93 = scmp.ne.s32.totalorder %s81, %s82
    %p94 = scmp.eq.s32.totalorder %s16, 1
    %p95 = por %p93, %p94
    %p97 = scmp.ne.s32.totalorder %s82, %s96
    %p98 = scmp.eq.s32.totalorder %s16, 0
    %p99 = por %p97, %p98
    %s101 = sadd.s32 %s100, 1
    %p104 = scmp.eq.s32.totalorder %s10, 1
    %p105 = scmp.ne.s32.totalorder %s100, %s102
    %p106 = scmp.eq.s32.totalorder %s10, 0
    %p107 = por %p105, %p106
    %p108 = scmp.ne.s32.totalorder %s100, %s102
    %p109 = scmp.eq.s32.totalorder %s15, 1
    %p110 = por %p108, %p109
    %p111 = scmp.ne.s32.totalorder %s102, %s103
    %p112 = scmp.eq.s32.totalorder %s15, 0
    %p113 = por %p111, %p112
    %p114 = scmp.ne.s32.totalorder %s102, %s103
    %p115 = scmp.eq.s32.totalorder %s16, 1
    %p116 = por %p114, %p115
    %p118 = scmp.ne.s32.totalorder %s103, %s117
    %p119 = scmp.eq.s32.totalorder %s16, 0
    %p120 = por %p118, %p119
    %s121 = ssub.s32 %s17, %s29
    %p122 = scmp.eq.s32.totalorder %s121, 0
    %s124 = sadd.s32 %s123, 1
    %s125 = scalar_select %p122, %s123, %s124
    %p128 = pneg %p122
    %p129 = scmp.eq.s32.totalorder %s10, 1
    %p130 = por %p128, %p129
    %p131 = scmp.ne.s32.totalorder %s123, %s126
    %p132 = scmp.eq.s32.totalorder %s10, 0
    %p133 = por %p131, %p132
    %p134 = scmp.ne.s32.totalorder %s123, %s126
    %p135 = scmp.eq.s32.totalorder %s15, 1
    %p136 = por %p134, %p135
    %p137 = scmp.ne.s32.totalorder %s126, %s127
    %p138 = scmp.eq.s32.totalorder %s15, 0
    %p139 = por %p137, %p138
    %p140 = scmp.ne.s32.totalorder %s126, %s127
    %p141 = scmp.eq.s32.totalorder %s16, 1
    %p142 = por %p140, %p141
    %p144 = scmp.ne.s32.totalorder %s127, %s143
    %p145 = scmp.eq.s32.totalorder %s16, 0
    %p146 = por %p144, %p145
    %p147 = scmp.le.s32.totalorder 1, %s10
    %p148 = scmp.lt.s32.totalorder %s10, 3
    %p149 = pnand %p147, %p148
    %p150 = pneg %p149
    // Predicated region
    $region9: #{dgcnn_seg_feature_fwd.17} parent=5 // pred_check
      _
    $region10: #{dgcnn_seg_feature_fwd.17} parent=5 // pred_check_branch
      %152 = sbr.rel (%p149) target = $region12
    $region11: #{dgcnn_seg_feature_fwd.17} parent=5 // pred_region
      %s153 = ssub.s32 %s10, 1
      // Predicated region
      $region13: #{dgcnn_seg_feature_fwd.17} parent=11 // pred_check
        %p154 = pneg %p71
      $region14: #{dgcnn_seg_feature_fwd.17} parent=11 // pred_check_branch
        %156 = sbr.rel (%p154) target = $region16
      $region15: #{dgcnn_seg_feature_fwd.17} parent=11 // pred_region
        _
      $region16: #{dgcnn_seg_feature_fwd.17} parent=11 // pred_fallthru
        _
      // Predicated region
      $region17: #{dgcnn_seg_feature_fwd.17} parent=11 // pred_check
        %p157 = pneg %p92
      $region18: #{dgcnn_seg_feature_fwd.17} parent=11 // pred_check_branch
        %159 = sbr.rel (%p157) target = $region20
      $region19: #{dgcnn_seg_feature_fwd.17} parent=11 // pred_region
        _
      $region20: #{dgcnn_seg_feature_fwd.17} parent=11 // pred_fallthru
        _
      // Predicated region
      $region21: #{dgcnn_seg_feature_fwd.17} parent=11 // pred_check
        %p160 = pneg %p113
      $region22: #{dgcnn_seg_feature_fwd.17} parent=11 // pred_check_branch
        %162 = sbr.rel (%p160) target = $region24
      $region23: #{dgcnn_seg_feature_fwd.17} parent=11 // pred_region
        _
      $region24: #{dgcnn_seg_feature_fwd.17} parent=11 // pred_fallthru
        _
    $region12: #{dgcnn_seg_feature_fwd.17} parent=5 // pred_fallthru
      _
    %p163 = scmp.lt.s32.totalorder %s10, 2
    // Predicated region
    $region25: #{dgcnn_seg_feature_fwd.17} parent=5 // pred_check
      %p164 = pneg %p163
    $region26: #{dgcnn_seg_feature_fwd.17} parent=5 // pred_check_branch
      %166 = sbr.rel (%p164) target = $region28
    $region27: #{dgcnn_seg_feature_fwd.17} parent=5 // pred_region
      // Predicated region
      $region29: #{dgcnn_seg_feature_fwd.17} parent=27 // pred_check
        %p167 = pneg %p44
      $region30: #{dgcnn_seg_feature_fwd.17} parent=27 // pred_check_branch
        %169 = sbr.rel (%p167) target = $region32
      $region31: #{dgcnn_seg_feature_fwd.17} parent=27 // pred_region
        %s170 = smul.u32 2, %s18
        %p171 = scmp.lt.s32.totalorder %s17, 1
        %s172 = scalar_select %p171, %s17, 1
        %p173 = scmp.lt.s32.totalorder %s170, 1
        %s174 = scalar_select %p173, %s170, 1
        %s175 = smul.addr %s172, 2
        %s176 = sadd.s32 %s174, %s175
        %s177 = smul.addr %s176, 4
        %s178 = scalar_lea.vmem %s0, %s177
        %s179 = smul.u32 2, %s18
      $region32: #{dgcnn_seg_feature_fwd.17} parent=27 // pred_fallthru
        _
    $region28: #{dgcnn_seg_feature_fwd.17} parent=5 // pred_fallthru
      _
    %p180 = scmp.le.s32.totalorder 1, %s10
    %p181 = scmp.lt.s32.totalorder %s10, 3
    %p182 = pnand %p180, %p181
    %p183 = pneg %p182
    // Predicated region
    $region33: #{dgcnn_seg_feature_fwd.17} parent=5 // pred_check
      _
    $region34: #{dgcnn_seg_feature_fwd.17} parent=5 // pred_check_branch
      %185 = sbr.rel (%p182) target = $region36
    $region35: #{dgcnn_seg_feature_fwd.17} parent=5 // pred_region
      %s186 = ssub.s32 %s10, 1
      %s187 = smul.u32 2, %s20
      %p188 = scmp.lt.s32.totalorder %s19, 1
      %s189 = scalar_select %p188, %s19, 1
      %p190 = scmp.lt.s32.totalorder %s187, 1
      %s191 = scalar_select %p190, %s187, 1
      %s192 = smul.addr %s189, 2
      %s193 = sadd.s32 %s191, %s192
      %s194 = smul.addr %s193, 4
      %s195 = scalar_lea.vmem %s0, %s194
      %p196 = pneg %p50
      %p197 = pneg %p47
      %p198 = pneg %p71
      %p199 = pneg %p68
      %p200 = pneg %p92
      %p201 = pneg %p89
      %p202 = pneg %p113
      %p203 = pneg %p110
      %p204 = pneg %p139
      %p205 = pneg %p136
      %p206 = scmp.lt.s32.totalorder %s19, 1
      %s207 = scalar_select %p206, %s19, 1
      %s208 = smul.addr %s207, 8
      %s209 = scalar_lea.vmem %s4, %s208
      %s210 = smul.u32 2, %s20
      %p211 = scmp.lt.s32.totalorder %s19, 1
      %s212 = scalar_select %p211, %s19, 1
      %p213 = scmp.lt.s32.totalorder %s210, 1
      %s214 = scalar_select %p213, %s210, 1
      %s215 = smul.addr %s212, 2
      %s216 = sadd.s32 %s214, %s215
      %s217 = smul.addr %s216, 4
      %s218 = scalar_lea.vmem %s0, %s217
      %s219 = smul.u32 2, %s20
      %p220 = scmp.lt.s32.totalorder %s19, 1
      %s221 = scalar_select %p220, %s19, 1
      %s222 = smul.addr %s221, 8
      %s223 = scalar_lea.vmem %s4, %s222
      %v224 = vld [vmem:[%s218] sm:$0xf]
      %v225 = vld [vmem:[%s218 + $0x4] sm:$0xf]
      %v226 = vld [vmem:[%s1] sm:$0xff]
      %v227 = vld [vmem:[%s1 + $0x8] sm:$0xff]
      %v228 = vld [vmem:[%s1 + $0x10] sm:$0xff]
      %v229 = vld [vmem:[%s1 + $0x18] sm:$0xff]
      %v230 = vld [vmem:[%s1 + $0x20] sm:$0xff]
      %v231 = vld [vmem:[%s1 + $0x28] sm:$0xff]
      %v232 = vld [vmem:[%s1 + $0x30] sm:$0xff]
      %v233 = vld [vmem:[%s1 + $0x38] sm:$0xff]
      %v234 = vld [vmem:[%s1 + $0x40] sm:$0xff]
      %v235 = vld [vmem:[%s1 + $0x48] sm:$0xff]
      %v236 = vld [vmem:[%s1 + $0x50] sm:$0xff]
      %v237 = vld [vmem:[%s1 + $0x58] sm:$0xff]
      %v238 = vld [vmem:[%s1 + $0x60] sm:$0xff]
      %v239 = vld [vmem:[%s1 + $0x68] sm:$0xff]
      %v240 = vld [vmem:[%s1 + $0x70] sm:$0xff]
      %v241 = vld [vmem:[%s1 + $0x78] sm:$0xff]
      %v242 = vld [vmem:[%s1 + $0x80] sm:$0xff]
      %v243 = vld [vmem:[%s1 + $0x88] sm:$0xff]
      %v244 = vld [vmem:[%s1 + $0x90] sm:$0xff]
      %v245 = vld [vmem:[%s1 + $0x98] sm:$0xff]
      %v246 = vld [vmem:[%s1 + $0xa0] sm:$0xff]
      %v247 = vld [vmem:[%s1 + $0xa8] sm:$0xff]
      %v248 = vld [vmem:[%s1 + $0xb0] sm:$0xff]
      %v249 = vld [vmem:[%s1 + $0xb8] sm:$0xff]
      %v250 = vld [vmem:[%s1 + $0xc0] sm:$0xff]
      %v251 = vld [vmem:[%s1 + $0xc8] sm:$0xff]
      %v252 = vld [vmem:[%s1 + $0xd0] sm:$0xff]
      %v253 = vld [vmem:[%s1 + $0xd8] sm:$0xff]
      %v254 = vld [vmem:[%s1 + $0xe0] sm:$0xff]
      %v255 = vld [vmem:[%s1 + $0xe8] sm:$0xff]
      %v256 = vld [vmem:[%s1 + $0xf0] sm:$0xff]
      %v257 = vld [vmem:[%s1 + $0xf8] sm:$0xff]
      %v258 = vld [vmem:[%s1 + $0x100] sm:$0xff]
      %v259 = vld [vmem:[%s1 + $0x108] sm:$0xff]
      %v260 = vld [vmem:[%s1 + $0x110] sm:$0xff]
      %v261 = vld [vmem:[%s1 + $0x118] sm:$0xff]
      %v262 = vld [vmem:[%s1 + $0x120] sm:$0xff]
      %v263 = vld [vmem:[%s1 + $0x128] sm:$0xff]
      %v264 = vld [vmem:[%s1 + $0x130] sm:$0xff]
      %v265 = vld [vmem:[%s1 + $0x138] sm:$0xff]
      %v266 = vld [vmem:[%s1 + $0x140] sm:$0xff]
      %v267 = vld [vmem:[%s1 + $0x148] sm:$0xff]
      %v268 = vld [vmem:[%s1 + $0x150] sm:$0xff]
      %v269 = vld [vmem:[%s1 + $0x158] sm:$0xff]
      %v270 = vld [vmem:[%s1 + $0x160] sm:$0xff]
      %v271 = vld [vmem:[%s1 + $0x168] sm:$0xff]
      %v272 = vld [vmem:[%s1 + $0x170] sm:$0xff]
      %v273 = vld [vmem:[%s1 + $0x178] sm:$0xff]
      %v274 = vld [vmem:[%s1 + $0x180] sm:$0xff]
      %v275 = vld [vmem:[%s1 + $0x188] sm:$0xff]
      %v276 = vld [vmem:[%s1 + $0x190] sm:$0xff]
      %v277 = vld [vmem:[%s1 + $0x198] sm:$0xff]
      %v278 = vld [vmem:[%s1 + $0x1a0] sm:$0xff]
      %v279 = vld [vmem:[%s1 + $0x1a8] sm:$0xff]
      %v280 = vld [vmem:[%s1 + $0x1b0] sm:$0xff]
      %v281 = vld [vmem:[%s1 + $0x1b8] sm:$0xff]
      %v282 = vld [vmem:[%s1 + $0x1c0] sm:$0xff]
      %v283 = vld [vmem:[%s1 + $0x1c8] sm:$0xff]
      %v284 = vld [vmem:[%s1 + $0x1d0] sm:$0xff]
      %v285 = vld [vmem:[%s1 + $0x1d8] sm:$0xff]
      %v286 = vld [vmem:[%s1 + $0x1e0] sm:$0xff]
      %v287 = vld [vmem:[%s1 + $0x1e8] sm:$0xff]
      %v288 = vld [vmem:[%s1 + $0x1f0] sm:$0xff]
      %v289 = vld [vmem:[%s1 + $0x1f8] sm:$0xff]
      %v292 = vunpack.c.l.b16 %v224
      %v293 = vunpack.c.l.b16 %v225
      %v294 = vpack.c.b16 %v293, %v292
      %v360 = vunpack.c.l.b16 %v226
      %v361 = vunpack.c.h.b16 %v226
      %v362 = vunpack.c.l.b16 %v227
      %v363 = vunpack.c.h.b16 %v227
      %v364 = vunpack.c.l.b16 %v228
      %v365 = vunpack.c.h.b16 %v228
      %v366 = vunpack.c.l.b16 %v229
      %v367 = vunpack.c.h.b16 %v229
      %v368 = vunpack.c.l.b16 %v230
      %v369 = vunpack.c.h.b16 %v230
      %v370 = vunpack.c.l.b16 %v231
      %v371 = vunpack.c.h.b16 %v231
      %v372 = vunpack.c.l.b16 %v232
      %v373 = vunpack.c.h.b16 %v232
      %v374 = vunpack.c.l.b16 %v233
      %v375 = vunpack.c.h.b16 %v233
      %v376 = vunpack.c.l.b16 %v234
      %v377 = vunpack.c.h.b16 %v234
      %v378 = vunpack.c.l.b16 %v235
      %v379 = vunpack.c.h.b16 %v235
      %v380 = vunpack.c.l.b16 %v236
      %v381 = vunpack.c.h.b16 %v236
      %v382 = vunpack.c.l.b16 %v237
      %v383 = vunpack.c.h.b16 %v237
      %v384 = vunpack.c.l.b16 %v238
      %v385 = vunpack.c.h.b16 %v238
      %v386 = vunpack.c.l.b16 %v239
      %v387 = vunpack.c.h.b16 %v239
      %v388 = vunpack.c.l.b16 %v240
      %v389 = vunpack.c.h.b16 %v240
      %v390 = vunpack.c.l.b16 %v241
      %v391 = vunpack.c.h.b16 %v241
      %v392 = vunpack.c.l.b16 %v242
      %v393 = vunpack.c.h.b16 %v242
      %v394 = vunpack.c.l.b16 %v243
      %v395 = vunpack.c.h.b16 %v243
      %v396 = vunpack.c.l.b16 %v244
      %v397 = vunpack.c.h.b16 %v244
      %v398 = vunpack.c.l.b16 %v245
      %v399 = vunpack.c.h.b16 %v245
      %v400 = vunpack.c.l.b16 %v246
      %v401 = vunpack.c.h.b16 %v246
      %v402 = vunpack.c.l.b16 %v247
      %v403 = vunpack.c.h.b16 %v247
      %v404 = vunpack.c.l.b16 %v248
      %v405 = vunpack.c.h.b16 %v248
      %v406 = vunpack.c.l.b16 %v249
      %v407 = vunpack.c.h.b16 %v249
      %v408 = vunpack.c.l.b16 %v250
      %v409 = vunpack.c.h.b16 %v250
      %v410 = vunpack.c.l.b16 %v251
      %v411 = vunpack.c.h.b16 %v251
      %v412 = vunpack.c.l.b16 %v252
      %v413 = vunpack.c.h.b16 %v252
      %v414 = vunpack.c.l.b16 %v253
      %v415 = vunpack.c.h.b16 %v253
      %v416 = vunpack.c.l.b16 %v254
      %v417 = vunpack.c.h.b16 %v254
      %v418 = vunpack.c.l.b16 %v255
      %v419 = vunpack.c.h.b16 %v255
      %v420 = vunpack.c.l.b16 %v256
      %v421 = vunpack.c.h.b16 %v256
      %v422 = vunpack.c.l.b16 %v257
      %v423 = vunpack.c.h.b16 %v257
      %v424 = vunpack.c.l.b16 %v258
      %v425 = vunpack.c.h.b16 %v258
      %v426 = vunpack.c.l.b16 %v259
      %v427 = vunpack.c.h.b16 %v259
      %v428 = vunpack.c.l.b16 %v260
      %v429 = vunpack.c.h.b16 %v260
      %v430 = vunpack.c.l.b16 %v261
      %v431 = vunpack.c.h.b16 %v261
      %v432 = vunpack.c.l.b16 %v262
      %v433 = vunpack.c.h.b16 %v262
      %v434 = vunpack.c.l.b16 %v263
      %v435 = vunpack.c.h.b16 %v263
      %v436 = vunpack.c.l.b16 %v264
      %v437 = vunpack.c.h.b16 %v264
      %v438 = vunpack.c.l.b16 %v265
      %v439 = vunpack.c.h.b16 %v265
      %v440 = vunpack.c.l.b16 %v266
      %v441 = vunpack.c.h.b16 %v266
      %v442 = vunpack.c.l.b16 %v267
      %v443 = vunpack.c.h.b16 %v267
      %v444 = vunpack.c.l.b16 %v268
      %v445 = vunpack.c.h.b16 %v268
      %v446 = vunpack.c.l.b16 %v269
      %v447 = vunpack.c.h.b16 %v269
      %v448 = vunpack.c.l.b16 %v270
      %v449 = vunpack.c.h.b16 %v270
      %v450 = vunpack.c.l.b16 %v271
      %v451 = vunpack.c.h.b16 %v271
      %v452 = vunpack.c.l.b16 %v272
      %v453 = vunpack.c.h.b16 %v272
      %v454 = vunpack.c.l.b16 %v273
      %v455 = vunpack.c.h.b16 %v273
      %v456 = vunpack.c.l.b16 %v274
      %v457 = vunpack.c.h.b16 %v274
      %v458 = vunpack.c.l.b16 %v275
      %v459 = vunpack.c.h.b16 %v275
      %v460 = vunpack.c.l.b16 %v276
      %v461 = vunpack.c.h.b16 %v276
      %v462 = vunpack.c.l.b16 %v277
      %v463 = vunpack.c.h.b16 %v277
      %v464 = vunpack.c.l.b16 %v278
      %v465 = vunpack.c.h.b16 %v278
      %v466 = vunpack.c.l.b16 %v279
      %v467 = vunpack.c.h.b16 %v279
      %v468 = vunpack.c.l.b16 %v280
      %v469 = vunpack.c.h.b16 %v280
      %v470 = vunpack.c.l.b16 %v281
      %v471 = vunpack.c.h.b16 %v281
      %v472 = vunpack.c.l.b16 %v282
      %v473 = vunpack.c.h.b16 %v282
      %v474 = vunpack.c.l.b16 %v283
      %v475 = vunpack.c.h.b16 %v283
      %v476 = vunpack.c.l.b16 %v284
      %v477 = vunpack.c.h.b16 %v284
      %v478 = vunpack.c.l.b16 %v285
      %v479 = vunpack.c.h.b16 %v285
      %v480 = vunpack.c.l.b16 %v286
      %v481 = vunpack.c.h.b16 %v286
      %v482 = vunpack.c.l.b16 %v287
      %v483 = vunpack.c.h.b16 %v287
      %v484 = vunpack.c.l.b16 %v288
      %v485 = vunpack.c.h.b16 %v288
      %v486 = vunpack.c.l.b16 %v289
      %v487 = vunpack.c.h.b16 %v289
      %v488 = vpack.c.b16 %v368, %v360
      %v489 = vpack.c.b16 %v369, %v361
      %v490 = vpack.c.b16 %v370, %v362
      %v491 = vpack.c.b16 %v371, %v363
      %v492 = vpack.c.b16 %v372, %v364
      %v493 = vpack.c.b16 %v373, %v365
      %v494 = vpack.c.b16 %v374, %v366
      %v495 = vpack.c.b16 %v375, %v367
      %v496 = vpack.c.b16 %v384, %v376
      %v497 = vpack.c.b16 %v385, %v377
      %v498 = vpack.c.b16 %v386, %v378
      %v499 = vpack.c.b16 %v387, %v379
      %v500 = vpack.c.b16 %v388, %v380
      %v501 = vpack.c.b16 %v389, %v381
      %v502 = vpack.c.b16 %v390, %v382
      %v503 = vpack.c.b16 %v391, %v383
      %v504 = vpack.c.b16 %v400, %v392
      %v505 = vpack.c.b16 %v401, %v393
      %v506 = vpack.c.b16 %v402, %v394
      %v507 = vpack.c.b16 %v403, %v395
      %v508 = vpack.c.b16 %v404, %v396
      %v509 = vpack.c.b16 %v405, %v397
      %v510 = vpack.c.b16 %v406, %v398
      %v511 = vpack.c.b16 %v407, %v399
      %v512 = vpack.c.b16 %v416, %v408
      %v513 = vpack.c.b16 %v417, %v409
      %v514 = vpack.c.b16 %v418, %v410
      %v515 = vpack.c.b16 %v419, %v411
      %v516 = vpack.c.b16 %v420, %v412
      %v517 = vpack.c.b16 %v421, %v413
      %v518 = vpack.c.b16 %v422, %v414
      %v519 = vpack.c.b16 %v423, %v415
      %v520 = vpack.c.b16 %v432, %v424
      %v521 = vpack.c.b16 %v433, %v425
      %v522 = vpack.c.b16 %v434, %v426
      %v523 = vpack.c.b16 %v435, %v427
      %v524 = vpack.c.b16 %v436, %v428
      %v525 = vpack.c.b16 %v437, %v429
      %v526 = vpack.c.b16 %v438, %v430
      %v527 = vpack.c.b16 %v439, %v431
      %v528 = vpack.c.b16 %v448, %v440
      %v529 = vpack.c.b16 %v449, %v441
      %v530 = vpack.c.b16 %v450, %v442
      %v531 = vpack.c.b16 %v451, %v443
      %v532 = vpack.c.b16 %v452, %v444
      %v533 = vpack.c.b16 %v453, %v445
      %v534 = vpack.c.b16 %v454, %v446
      %v535 = vpack.c.b16 %v455, %v447
      %v536 = vpack.c.b16 %v464, %v456
      %v537 = vpack.c.b16 %v465, %v457
      %v538 = vpack.c.b16 %v466, %v458
      %v539 = vpack.c.b16 %v467, %v459
      %v540 = vpack.c.b16 %v468, %v460
      %v541 = vpack.c.b16 %v469, %v461
      %v542 = vpack.c.b16 %v470, %v462
      %v543 = vpack.c.b16 %v471, %v463
      %v544 = vpack.c.b16 %v480, %v472
      %v545 = vpack.c.b16 %v481, %v473
      %v546 = vpack.c.b16 %v482, %v474
      %v547 = vpack.c.b16 %v483, %v475
      %v548 = vpack.c.b16 %v484, %v476
      %v549 = vpack.c.b16 %v485, %v477
      %v550 = vpack.c.b16 %v486, %v478
      %v551 = vpack.c.b16 %v487, %v479
      %616 = vmatpush.bf16.msra.mxu0 %v544
      %617 = vmatpush.bf16.msra.mxu0 %v536
      %618 = vmatpush.bf16.msra.mxu0 %v528
      %619 = vmatpush.bf16.msra.mxu0 %v520
      %620 = vmatpush.bf16.msra.mxu0 %v512
      %621 = vmatpush.bf16.msra.mxu0 %v504
      %622 = vmatpush.bf16.msra.mxu0 %v496
      %623 = vmatpush.bf16.msra.mxu0 %v488
      %624 = vmatmul.bf16.gmra.mxu0 %v294
      %v625 = vpop.f32.mrf.mxu0
      %v626 = vadd.f32 0.0, %v625
      %v627 = vpop.f32.mrf.mxu0
      %v628 = vadd.f32 0.0, %v627
      %629 = vdwg.mxu0
      %630 = vmatpush.bf16.msra.mxu0 %v545
      %631 = vmatpush.bf16.msra.mxu0 %v537
      %632 = vmatpush.bf16.msra.mxu0 %v529
      %633 = vmatpush.bf16.msra.mxu0 %v521
      %634 = vmatpush.bf16.msra.mxu0 %v513
      %635 = vmatpush.bf16.msra.mxu0 %v505
      %636 = vmatpush.bf16.msra.mxu0 %v497
      %637 = vmatpush.bf16.msra.mxu0 %v489
      %638 = vmatmul.bf16.gmra.mxu0 %v294
      %v639 = vpop.f32.mrf.mxu0
      %v640 = vadd.f32 0.0, %v639
      %v641 = vpop.f32.mrf.mxu0
      %v642 = vadd.f32 0.0, %v641
      %643 = vdwg.mxu0
      %644 = vmatpush.bf16.msra.mxu0 %v546
      %645 = vmatpush.bf16.msra.mxu0 %v538
      %646 = vmatpush.bf16.msra.mxu0 %v530
      %647 = vmatpush.bf16.msra.mxu0 %v522
      %648 = vmatpush.bf16.msra.mxu0 %v514
      %649 = vmatpush.bf16.msra.mxu0 %v506
      %650 = vmatpush.bf16.msra.mxu0 %v498
      %651 = vmatpush.bf16.msra.mxu0 %v490
      %652 = vmatmul.bf16.gmra.mxu0 %v294
      %v653 = vpop.f32.mrf.mxu0
      %v654 = vadd.f32 0.0, %v653
      %v655 = vpop.f32.mrf.mxu0
      %v656 = vadd.f32 0.0, %v655
      %657 = vdwg.mxu0
      %658 = vmatpush.bf16.msra.mxu0 %v547
      %659 = vmatpush.bf16.msra.mxu0 %v539
      %660 = vmatpush.bf16.msra.mxu0 %v531
      %661 = vmatpush.bf16.msra.mxu0 %v523
      %662 = vmatpush.bf16.msra.mxu0 %v515
      %663 = vmatpush.bf16.msra.mxu0 %v507
      %664 = vmatpush.bf16.msra.mxu0 %v499
      %665 = vmatpush.bf16.msra.mxu0 %v491
      %666 = vmatmul.bf16.gmra.mxu0 %v294
      %v667 = vpop.f32.mrf.mxu0
      %v668 = vadd.f32 0.0, %v667
      %v669 = vpop.f32.mrf.mxu0
      %v670 = vadd.f32 0.0, %v669
      %671 = vdwg.mxu0
      %672 = vmatpush.bf16.msra.mxu0 %v548
      %673 = vmatpush.bf16.msra.mxu0 %v540
      %674 = vmatpush.bf16.msra.mxu0 %v532
      %675 = vmatpush.bf16.msra.mxu0 %v524
      %676 = vmatpush.bf16.msra.mxu0 %v516
      %677 = vmatpush.bf16.msra.mxu0 %v508
      %678 = vmatpush.bf16.msra.mxu0 %v500
      %679 = vmatpush.bf16.msra.mxu0 %v492
      %680 = vmatmul.bf16.gmra.mxu0 %v294
      %v681 = vpop.f32.mrf.mxu0
      %v682 = vadd.f32 0.0, %v681
      %v683 = vpop.f32.mrf.mxu0
      %v684 = vadd.f32 0.0, %v683
      %685 = vdwg.mxu0
      %686 = vmatpush.bf16.msra.mxu0 %v549
      %687 = vmatpush.bf16.msra.mxu0 %v541
      %688 = vmatpush.bf16.msra.mxu0 %v533
      %689 = vmatpush.bf16.msra.mxu0 %v525
      %690 = vmatpush.bf16.msra.mxu0 %v517
      %691 = vmatpush.bf16.msra.mxu0 %v509
      %692 = vmatpush.bf16.msra.mxu0 %v501
      %693 = vmatpush.bf16.msra.mxu0 %v493
      %694 = vmatmul.bf16.gmra.mxu0 %v294
      %v695 = vpop.f32.mrf.mxu0
      %v696 = vadd.f32 0.0, %v695
      %v697 = vpop.f32.mrf.mxu0
      %v698 = vadd.f32 0.0, %v697
      %699 = vdwg.mxu0
      %700 = vmatpush.bf16.msra.mxu0 %v550
      %701 = vmatpush.bf16.msra.mxu0 %v542
      %702 = vmatpush.bf16.msra.mxu0 %v534
      %703 = vmatpush.bf16.msra.mxu0 %v526
      %704 = vmatpush.bf16.msra.mxu0 %v518
      %705 = vmatpush.bf16.msra.mxu0 %v510
      %706 = vmatpush.bf16.msra.mxu0 %v502
      %707 = vmatpush.bf16.msra.mxu0 %v494
      %708 = vmatmul.bf16.gmra.mxu0 %v294
      %v709 = vpop.f32.mrf.mxu0
      %v710 = vadd.f32 0.0, %v709
      %v711 = vpop.f32.mrf.mxu0
      %v712 = vadd.f32 0.0, %v711
      %713 = vdwg.mxu0
      %714 = vmatpush.bf16.msra.mxu0 %v551
      %715 = vmatpush.bf16.msra.mxu0 %v543
      %716 = vmatpush.bf16.msra.mxu0 %v535
      %717 = vmatpush.bf16.msra.mxu0 %v527
      %718 = vmatpush.bf16.msra.mxu0 %v519
      %719 = vmatpush.bf16.msra.mxu0 %v511
      %720 = vmatpush.bf16.msra.mxu0 %v503
      %721 = vmatpush.bf16.msra.mxu0 %v495
      %722 = vmatmul.bf16.gmra.mxu0 %v294
      %v723 = vpop.f32.mrf.mxu0
      %v724 = vadd.f32 0.0, %v723
      %v725 = vpop.f32.mrf.mxu0
      %v726 = vadd.f32 0.0, %v725
      %727 = vdwg.mxu0
      %v728 = vld [vmem:[%s2] sm:$0xff]
      %v730 = vperm.slane %v728, 0
      %v731 = vperm.slane %v728, 1
      %v732 = vperm.slane %v728, 2
      %v733 = vperm.slane %v728, 3
      %v734 = vperm.slane %v728, 4
      %v735 = vperm.slane %v728, 5
      %v736 = vperm.slane %v728, 6
      %v737 = vperm.slane %v728, 7
      %v746 = vmul.f32 %v626, %v730
      %v747 = vmul.f32 %v640, %v731
      %v748 = vmul.f32 %v654, %v732
      %v749 = vmul.f32 %v668, %v733
      %v750 = vmul.f32 %v682, %v734
      %v751 = vmul.f32 %v696, %v735
      %v752 = vmul.f32 %v710, %v736
      %v753 = vmul.f32 %v724, %v737
      %v754 = vmul.f32 %v628, %v730
      %v755 = vmul.f32 %v642, %v731
      %v756 = vmul.f32 %v656, %v732
      %v757 = vmul.f32 %v670, %v733
      %v758 = vmul.f32 %v684, %v734
      %v759 = vmul.f32 %v698, %v735
      %v760 = vmul.f32 %v712, %v736
      %v761 = vmul.f32 %v726, %v737
      %v762 = vld [vmem:[%s3] sm:$0xff]
      %v764 = vperm.slane %v762, 0
      %v765 = vperm.slane %v762, 1
      %v766 = vperm.slane %v762, 2
      %v767 = vperm.slane %v762, 3
      %v768 = vperm.slane %v762, 4
      %v769 = vperm.slane %v762, 5
      %v770 = vperm.slane %v762, 6
      %v771 = vperm.slane %v762, 7
      %v780 = vadd.f32 %v746, %v764
      %v781 = vadd.f32 %v747, %v765
      %v782 = vadd.f32 %v748, %v766
      %v783 = vadd.f32 %v749, %v767
      %v784 = vadd.f32 %v750, %v768
      %v785 = vadd.f32 %v751, %v769
      %v786 = vadd.f32 %v752, %v770
      %v787 = vadd.f32 %v753, %v771
      %v788 = vadd.f32 %v754, %v764
      %v789 = vadd.f32 %v755, %v765
      %v790 = vadd.f32 %v756, %v766
      %v791 = vadd.f32 %v757, %v767
      %v792 = vadd.f32 %v758, %v768
      %v793 = vadd.f32 %v759, %v769
      %v794 = vadd.f32 %v760, %v770
      %v795 = vadd.f32 %v761, %v771
      %v796 = vmax.f32 %v780, 0.0
      %v797 = vmax.f32 %v781, 0.0
      %v798 = vmax.f32 %v782, 0.0
      %v799 = vmax.f32 %v783, 0.0
      %v800 = vmax.f32 %v784, 0.0
      %v801 = vmax.f32 %v785, 0.0
      %v802 = vmax.f32 %v786, 0.0
      %v803 = vmax.f32 %v787, 0.0
      %v804 = vmax.f32 %v788, 0.0
      %v805 = vmax.f32 %v789, 0.0
      %v806 = vmax.f32 %v790, 0.0
      %v807 = vmax.f32 %v791, 0.0
      %v808 = vmax.f32 %v792, 0.0
      %v809 = vmax.f32 %v793, 0.0
      %v810 = vmax.f32 %v794, 0.0
      %v811 = vmax.f32 %v795, 0.0
      %v812 = vmax.f32 %v796, %v804
      %v813 = vrot.slane %v812, 4
      %v814 = vmax.f32 %v812, %v813
      %v815 = vrot.slane %v814, 2
      %v816 = vmax.f32 %v814, %v815
      %v817 = vrot.slane %v816, 1
      %v818 = vmax.f32 %v816, %v817
      %v819 = vmax.f32 %v797, %v805
      %v820 = vrot.slane %v819, 4
      %v821 = vmax.f32 %v819, %v820
      %v822 = vrot.slane %v821, 2
      %v823 = vmax.f32 %v821, %v822
      %v824 = vrot.slane %v823, 1
      %v825 = vmax.f32 %v823, %v824
      %v826 = vmax.f32 %v798, %v806
      %v827 = vrot.slane %v826, 4
      %v828 = vmax.f32 %v826, %v827
      %v829 = vrot.slane %v828, 2
      %v830 = vmax.f32 %v828, %v829
      %v831 = vrot.slane %v830, 1
      %v832 = vmax.f32 %v830, %v831
      %v833 = vmax.f32 %v799, %v807
      %v834 = vrot.slane %v833, 4
      %v835 = vmax.f32 %v833, %v834
      %v836 = vrot.slane %v835, 2
      %v837 = vmax.f32 %v835, %v836
      %v838 = vrot.slane %v837, 1
      %v839 = vmax.f32 %v837, %v838
      %v840 = vmax.f32 %v800, %v808
      %v841 = vrot.slane %v840, 4
      %v842 = vmax.f32 %v840, %v841
      %v843 = vrot.slane %v842, 2
      %v844 = vmax.f32 %v842, %v843
      %v845 = vrot.slane %v844, 1
      %v846 = vmax.f32 %v844, %v845
      %v847 = vmax.f32 %v801, %v809
      %v848 = vrot.slane %v847, 4
      %v849 = vmax.f32 %v847, %v848
      %v850 = vrot.slane %v849, 2
      %v851 = vmax.f32 %v849, %v850
      %v852 = vrot.slane %v851, 1
      %v853 = vmax.f32 %v851, %v852
      %v854 = vmax.f32 %v802, %v810
      %v855 = vrot.slane %v854, 4
      %v856 = vmax.f32 %v854, %v855
      %v857 = vrot.slane %v856, 2
      %v858 = vmax.f32 %v856, %v857
      %v859 = vrot.slane %v858, 1
      %v860 = vmax.f32 %v858, %v859
      %v861 = vmax.f32 %v803, %v811
      %v862 = vrot.slane %v861, 4
      %v863 = vmax.f32 %v861, %v862
      %v864 = vrot.slane %v863, 2
      %v865 = vmax.f32 %v863, %v864
      %v866 = vrot.slane %v865, 1
      %v867 = vmax.f32 %v865, %v866
      %p868 = scmp.eq.s32.totalorder %s20, 0
      // Predicated region
      $region37: #{dgcnn_seg_feature_fwd.17} parent=35 // pred_check
        %p869 = pneg %p868
      $region38: #{dgcnn_seg_feature_fwd.17} parent=35 // pred_check_branch
        %871 = sbr.rel (%p869) target = $region40
      $region39: #{dgcnn_seg_feature_fwd.17} parent=35 // pred_region
        %v880 = vrot.slane %v825, 7
        %v881 = vrot.slane %v832, 6
        %v882 = vrot.slane %v839, 5
        %v883 = vrot.slane %v846, 4
        %v884 = vrot.slane %v853, 3
        %v885 = vrot.slane %v860, 2
        %v886 = vrot.slane %v867, 1
        %vm887 = vcmask 1040384
        %v888 = vsel %vm887, %v818, %v880
        %vm889 = vcmask 1042434
        %v890 = vsel %vm889, %v881, %v882
        %vm891 = vcmask 1041408
        %v892 = vsel %vm891, %v888, %v890
        %vm893 = vcmask 1044484
        %v894 = vsel %vm893, %v883, %v884
        %vm895 = vcmask 1046534
        %v896 = vsel %vm895, %v885, %v886
        %vm897 = vcmask 1045508
        %v898 = vsel %vm897, %v894, %v896
        %vm899 = vcmask 1043456
        %v900 = vsel %vm899, %v892, %v898
        %902 = vst [vmem:[%s223] sm:$0xff] %v900
      $region40: #{dgcnn_seg_feature_fwd.17} parent=35 // pred_fallthru
        _
      %p903 = scmp.gt.s32.totalorder %s20, 0
      // Predicated region
      $region41: #{dgcnn_seg_feature_fwd.17} parent=35 // pred_check
        %p904 = pneg %p903
      $region42: #{dgcnn_seg_feature_fwd.17} parent=35 // pred_check_branch
        %906 = sbr.rel (%p904) target = $region44
      $region43: #{dgcnn_seg_feature_fwd.17} parent=35 // pred_region
        %v907 = vld [vmem:[%s223] sm:$0xff]
        %v916 = vrot.slane %v825, 7
        %v917 = vrot.slane %v832, 6
        %v918 = vrot.slane %v839, 5
        %v919 = vrot.slane %v846, 4
        %v920 = vrot.slane %v853, 3
        %v921 = vrot.slane %v860, 2
        %v922 = vrot.slane %v867, 1
        %vm923 = vcmask 1040384
        %v924 = vsel %vm923, %v818, %v916
        %vm925 = vcmask 1042434
        %v926 = vsel %vm925, %v917, %v918
        %vm927 = vcmask 1041408
        %v928 = vsel %vm927, %v924, %v926
        %vm929 = vcmask 1044484
        %v930 = vsel %vm929, %v919, %v920
        %vm931 = vcmask 1046534
        %v932 = vsel %vm931, %v921, %v922
        %vm933 = vcmask 1045508
        %v934 = vsel %vm933, %v930, %v932
        %vm935 = vcmask 1043456
        %v936 = vsel %vm935, %v928, %v934
        %v938 = vmax.f32 %v907, %v936
        %939 = vst [vmem:[%s223] sm:$0xff] %v938
      $region44: #{dgcnn_seg_feature_fwd.17} parent=35 // pred_fallthru
        _
      %p940 = scmp.lt.s32.totalorder %s19, 1
      %s941 = scalar_select %p940, %s19, 1
      %s942 = smul.addr %s941, 8
      %s943 = scalar_lea.vmem %s4, %s942
      // Predicated region
      $region45: #{dgcnn_seg_feature_fwd.17} parent=35 // pred_check
        %p944 = pneg %p136
      $region46: #{dgcnn_seg_feature_fwd.17} parent=35 // pred_check_branch
        %946 = sbr.rel (%p944) target = $region48
      $region47: #{dgcnn_seg_feature_fwd.17} parent=35 // pred_region
        _
      $region48: #{dgcnn_seg_feature_fwd.17} parent=35 // pred_fallthru
        _
    $region36: #{dgcnn_seg_feature_fwd.17} parent=5 // pred_fallthru
      _
    %p947 = scmp.le.s32.totalorder 2, %s10
    // Predicated region
    $region49: #{dgcnn_seg_feature_fwd.17} parent=5 // pred_check
      %p948 = pneg %p947
    $region50: #{dgcnn_seg_feature_fwd.17} parent=5 // pred_check_branch
      %950 = sbr.rel (%p948) target = $region52
    $region51: #{dgcnn_seg_feature_fwd.17} parent=5 // pred_region
      %s951 = ssub.s32 %s10, 2
      // Predicated region
      $region53: #{dgcnn_seg_feature_fwd.17} parent=51 // pred_check
        %p952 = pneg %p142
      $region54: #{dgcnn_seg_feature_fwd.17} parent=51 // pred_check_branch
        %954 = sbr.rel (%p952) target = $region56
      $region55: #{dgcnn_seg_feature_fwd.17} parent=51 // pred_region
        %p955 = scmp.lt.s32.totalorder %s21, 1
        %s956 = scalar_select %p955, %s21, 1
        %s957 = smul.addr %s956, 8
        %s958 = scalar_lea.vmem %s4, %s957
      $region56: #{dgcnn_seg_feature_fwd.17} parent=51 // pred_fallthru
        _
    $region52: #{dgcnn_seg_feature_fwd.17} parent=5 // pred_fallthru
      _
  $region6: #{dgcnn_seg_feature_fwd.17} parent=0 // loop_footer
    %s14 = sadd.s32 1, %s10
  $region7: #{dgcnn_seg_feature_fwd.17} parent=0 // loop_footer_branch
    %9 = sbr.rel target = $region3
  $region8: #{dgcnn_seg_feature_fwd.17} parent=0 // loop_exit
    _

// kernel: dgcnn_seg_feature_fwd.22
$region0: #{dgcnn_seg_feature_fwd.22}
  #allocation0 [shape = 'u32[]', space=smem, size = 0x4, offset = 0x4, fixed_abs, tag = 'smem constant byte address 0x4 - core index']
  #allocation1 [shape = 'u32[72,128]{1,0:T(1,128)}', space=vmem, size = 0x9000, scoped, tag = 'internal scratch']
  %s0 = inlined_call_operand.vmem [shape: f32[32,64], index: 0, kind: input, shape index: {}]
  %s1 = inlined_call_operand.vmem [shape: bf16[64,128], index: 1, kind: input, shape index: {}]
  %s2 = inlined_call_operand.vmem [shape: bf16[32,128], index: 2, kind: output, shape index: {}]
  %s3 = sld [smem:[#allocation0]]
  $region18: #{dgcnn_seg_feature_fwd.22} parent=0
    _
  %s5 = ssub.s32 1, %s3
  %s6 = scalar_select 0, %s5, %s3
  // Predicated region
  $region2: #{dgcnn_seg_feature_fwd.22} parent=0 // pred_check
    _
  $region3: #{dgcnn_seg_feature_fwd.22} parent=0 // pred_check_branch
    %8 = sbr.rel (0) target = $region5
  $region4: #{dgcnn_seg_feature_fwd.22} parent=0 // pred_region
    _
  $region5: #{dgcnn_seg_feature_fwd.22} parent=0 // pred_fallthru
    _
  // Predicated region
  $region6: #{dgcnn_seg_feature_fwd.22} parent=0 // pred_check
    _
  $region7: #{dgcnn_seg_feature_fwd.22} parent=0 // pred_check_branch
    %10 = sbr.rel (0) target = $region9
  $region8: #{dgcnn_seg_feature_fwd.22} parent=0 // pred_region
    _
  $region9: #{dgcnn_seg_feature_fwd.22} parent=0 // pred_fallthru
    _
  %v12 = vld [vmem:[%s0] sm:$0xff]
  %v13 = vld [vmem:[%s0 + $0x8] sm:$0xff]
  %v14 = vld [vmem:[%s0 + $0x10] sm:$0xff]
  %v15 = vld [vmem:[%s0 + $0x18] sm:$0xff]
  %v16 = vpack.c.bf16 %v13, %v12
  %v17 = vpack.c.bf16 %v15, %v14
  %v18 = vld [vmem:[%s1] sm:$0xf]
  %v19 = vld [vmem:[%s1 + $0x4] sm:$0xf]
  %v20 = vld [vmem:[%s1 + $0x8] sm:$0xf]
  %v21 = vld [vmem:[%s1 + $0xc] sm:$0xf]
  %v22 = vld [vmem:[%s1 + $0x10] sm:$0xf]
  %v23 = vld [vmem:[%s1 + $0x14] sm:$0xf]
  %v24 = vld [vmem:[%s1 + $0x18] sm:$0xf]
  %v25 = vld [vmem:[%s1 + $0x1c] sm:$0xf]
  %v34 = vunpack.c.l.b16 %v18
  %v35 = vunpack.c.l.b16 %v19
  %v36 = vunpack.c.l.b16 %v20
  %v37 = vunpack.c.l.b16 %v21
  %v38 = vunpack.c.l.b16 %v22
  %v39 = vunpack.c.l.b16 %v23
  %v40 = vunpack.c.l.b16 %v24
  %v41 = vunpack.c.l.b16 %v25
  %v42 = vpack.c.b16 %v35, %v34
  %v43 = vpack.c.b16 %v37, %v36
  %v44 = vpack.c.b16 %v39, %v38
  %v45 = vpack.c.b16 %v41, %v40
  %vm50 = vcmask 523264
  %v52 = vsel %vm50, %v16, 0
  %v55 = vsel %vm50, %v17, 0
  %57 = vmatpush.bf16.msra.mxu0 0
  %58 = vmatpush.bf16.msra.mxu0 0
  %59 = vmatpush.bf16.msra.mxu0 0
  %60 = vmatpush.bf16.msra.mxu0 0
  %61 = vmatpush.bf16.msra.mxu0 %v45
  %62 = vmatpush.bf16.msra.mxu0 %v44
  %63 = vmatpush.bf16.msra.mxu0 %v43
  %64 = vmatpush.bf16.msra.mxu0 %v42
  %65 = vmatmul.bf16.gmra.mxu0 %v52
  %v66 = vpop.f32.mrf.mxu0
  %v67 = vadd.f32 0.0, %v66
  %v68 = vpop.f32.mrf.mxu0
  %v69 = vadd.f32 0.0, %v68
  %70 = vmatmul.bf16.gmra.mxu0 %v55
  %v71 = vpop.f32.mrf.mxu0
  %v72 = vadd.f32 0.0, %v71
  %v73 = vpop.f32.mrf.mxu0
  %v74 = vadd.f32 0.0, %v73
  %75 = vdwg.mxu0
  %v76 = vpack.c.bf16 %v67, %v67
  %v77 = vpack.c.bf16 %v69, %v69
  %v78 = vpack.c.bf16 %v72, %v72
  %v79 = vpack.c.bf16 %v74, %v74
  %80 = vst [vmem:[%s2] sm:$0xf] %v76
  %81 = vst [vmem:[%s2 + $0x4] sm:$0xf] %v77
  %82 = vst [vmem:[%s2 + $0x8] sm:$0xf] %v78
  %83 = vst [vmem:[%s2 + $0xc] sm:$0xf] %v79
  // Predicated region
  $region10: #{dgcnn_seg_feature_fwd.22} parent=0 // pred_check
    _
  $region11: #{dgcnn_seg_feature_fwd.22} parent=0 // pred_check_branch
    %85 = sbr.rel (0) target = $region13
  $region12: #{dgcnn_seg_feature_fwd.22} parent=0 // pred_region
    _
  $region13: #{dgcnn_seg_feature_fwd.22} parent=0 // pred_fallthru
    _
  // Predicated region
  $region14: #{dgcnn_seg_feature_fwd.22} parent=0 // pred_check
    _
  $region15: #{dgcnn_seg_feature_fwd.22} parent=0 // pred_check_branch
    %87 = sbr.rel (0) target = $region17
  $region16: #{dgcnn_seg_feature_fwd.22} parent=0 // pred_region
    _
  $region17: #{dgcnn_seg_feature_fwd.22} parent=0 // pred_fallthru
    _

// kernel: dgcnn_seg_feature_fwd.21
$region0: #{dgcnn_seg_feature_fwd.21}
  #allocation0 [shape = 'u32[]', space=smem, size = 0x4, offset = 0x4, fixed_abs, tag = 'smem constant byte address 0x4 - core index']
  #allocation1 [shape = 'u32[72,128]{1,0:T(1,128)}', space=vmem, size = 0x9000, scoped, tag = 'internal scratch']
  %s0 = inlined_call_operand.vmem [shape: f32[2,16,64], index: 0, kind: input, shape index: {}, may-alias: {0,1}]
  %s1 = inlined_call_operand.vmem [shape: f32[2,16,64], index: 1, kind: input, shape index: {}, may-alias: {0,1}]
  %s2 = inlined_call_operand.vmem [shape: bf16[2,16,16], index: 2, kind: output, shape index: {}]
  %s3 = sld [smem:[#allocation0]]
  $region41: #{dgcnn_seg_feature_fwd.21} parent=0
    _
  %s5 = ssub.s32 1, %s3
  %s6 = scalar_select 0, %s5, %s3
  loop: start=0, step=1, limit=4
  $region2: #{dgcnn_seg_feature_fwd.21} parent=0 // loop_pre_header
    _
  $region3: #{dgcnn_seg_feature_fwd.21} parent=0 // loop_header
    %s8 = sphi 0, %s12
    %p9 = scmp.ge.s32.totalorder %s8, 4
    %s15 = sphi 0, %s34
    %s16 = sphi 0, %s30
    %s17 = sphi 0, %s26
    %s18 = sphi 0, %s15
    %s19 = sphi 0, %s16
    %s20 = sphi 0, %s17
    %s21 = sphi 0, %s18
    %s22 = sphi 0, %s19
    %s23 = sphi 0, %s20
    %s39 = sphi 0, %s41
    %s42 = sphi 0, %s39
    %s43 = sphi 0, %s42
    %s59 = sphi 0, %s43
    %s67 = sphi 0, %s69
    %s70 = sphi 0, %s67
    %s71 = sphi 0, %s70
    %s87 = sphi 0, %s71
    %s97 = sphi 0, %s99
    %s100 = sphi 0, %s97
    %s101 = sphi 0, %s100
    %s117 = sphi 0, %s101
  $region4: #{dgcnn_seg_feature_fwd.21} parent=0 // loop_header_branch
    %11 = sbr.rel (%p9) target = $region8
  $region5: #{dgcnn_seg_feature_fwd.21} parent=0 // loop_body
    %s13 = ssub.s32 %s8, 1
    %s14 = ssub.s32 %s8, 2
    %s24 = sadd.s32 1, %s17
    %p25 = scmp.ge.s32.totalorder %s24, 1
    %s26 = scalar_select %p25, 0, %s24
    %s27 = sadd.s32 1, %s16
    %s28 = scalar_select %p25, %s27, %s16
    %p29 = scmp.ge.s32.totalorder %s28, 1
    %s30 = scalar_select %p29, 0, %s28
    %s31 = sadd.s32 1, %s15
    %s32 = scalar_select %p29, %s31, %s15
    %p33 = scmp.ge.s32.totalorder %s32, 2
    %s34 = scalar_select %p33, 0, %s32
    %s35 = ssub.s32 %s15, %s34
    %s36 = ssub.s32 %s16, %s30
    %s37 = sor.u32 %s35, %s36
    %p38 = scmp.eq.s32.totalorder %s37, 0
    %s40 = sadd.s32 %s39, 1
    %s41 = scalar_select %p38, %s39, %s40
    %p44 = pneg %p38
    %p45 = scmp.eq.s32.totalorder %s8, 1
    %p46 = por %p44, %p45
    %p47 = scmp.ne.s32.totalorder %s39, %s42
    %p48 = scmp.eq.s32.totalorder %s8, 0
    %p49 = por %p47, %p48
    %p50 = scmp.ne.s32.totalorder %s39, %s42
    %p51 = scmp.eq.s32.totalorder %s13, 1
    %p52 = por %p50, %p51
    %p53 = scmp.ne.s32.totalorder %s42, %s43
    %p54 = scmp.eq.s32.totalorder %s13, 0
    %p55 = por %p53, %p54
    %p56 = scmp.ne.s32.totalorder %s42, %s43
    %p57 = scmp.eq.s32.totalorder %s14, 1
    %p58 = por %p56, %p57
    %p60 = scmp.ne.s32.totalorder %s43, %s59
    %p61 = scmp.eq.s32.totalorder %s14, 0
    %p62 = por %p60, %p61
    %s63 = ssub.s32 %s15, %s34
    %s64 = ssub.s32 %s17, %s26
    %s65 = sor.u32 %s63, %s64
    %p66 = scmp.eq.s32.totalorder %s65, 0
    %s68 = sadd.s32 %s67, 1
    %s69 = scalar_select %p66, %s67, %s68
    %p72 = pneg %p66
    %p73 = scmp.eq.s32.totalorder %s8, 1
    %p74 = por %p72, %p73
    %p75 = scmp.ne.s32.totalorder %s67, %s70
    %p76 = scmp.eq.s32.totalorder %s8, 0
    %p77 = por %p75, %p76
    %p78 = scmp.ne.s32.totalorder %s67, %s70
    %p79 = scmp.eq.s32.totalorder %s13, 1
    %p80 = por %p78, %p79
    %p81 = scmp.ne.s32.totalorder %s70, %s71
    %p82 = scmp.eq.s32.totalorder %s13, 0
    %p83 = por %p81, %p82
    %p84 = scmp.ne.s32.totalorder %s70, %s71
    %p85 = scmp.eq.s32.totalorder %s14, 1
    %p86 = por %p84, %p85
    %p88 = scmp.ne.s32.totalorder %s71, %s87
    %p89 = scmp.eq.s32.totalorder %s14, 0
    %p90 = por %p88, %p89
    %s91 = ssub.s32 %s15, %s34
    %s92 = ssub.s32 %s16, %s30
    %s93 = sor.u32 %s91, %s92
    %s94 = ssub.s32 %s17, %s26
    %s95 = sor.u32 %s93, %s94
    %p96 = scmp.eq.s32.totalorder %s95, 0
    %s98 = sadd.s32 %s97, 1
    %s99 = scalar_select %p96, %s97, %s98
    %p102 = pneg %p96
    %p103 = scmp.eq.s32.totalorder %s8, 1
    %p104 = por %p102, %p103
    %p105 = scmp.ne.s32.totalorder %s97, %s100
    %p106 = scmp.eq.s32.totalorder %s8, 0
    %p107 = por %p105, %p106
    %p108 = scmp.ne.s32.totalorder %s97, %s100
    %p109 = scmp.eq.s32.totalorder %s13, 1
    %p110 = por %p108, %p109
    %p111 = scmp.ne.s32.totalorder %s100, %s101
    %p112 = scmp.eq.s32.totalorder %s13, 0
    %p113 = por %p111, %p112
    %p114 = scmp.ne.s32.totalorder %s100, %s101
    %p115 = scmp.eq.s32.totalorder %s14, 1
    %p116 = por %p114, %p115
    %p118 = scmp.ne.s32.totalorder %s101, %s117
    %p119 = scmp.eq.s32.totalorder %s14, 0
    %p120 = por %p118, %p119
    %p121 = scmp.le.s32.totalorder 1, %s8
    %p122 = scmp.lt.s32.totalorder %s8, 3
    %p123 = pnand %p121, %p122
    %p124 = pneg %p123
    // Predicated region
    $region9: #{dgcnn_seg_feature_fwd.21} parent=5 // pred_check
      _
    $region10: #{dgcnn_seg_feature_fwd.21} parent=5 // pred_check_branch
      %126 = sbr.rel (%p123) target = $region12
    $region11: #{dgcnn_seg_feature_fwd.21} parent=5 // pred_region
      %s127 = ssub.s32 %s8, 1
    $region12: #{dgcnn_seg_feature_fwd.21} parent=5 // pred_fallthru
      _
    %p128 = scmp.lt.s32.totalorder %s8, 2
    // Predicated region
    $region13: #{dgcnn_seg_feature_fwd.21} parent=5 // pred_check
      %p129 = pneg %p128
    $region14: #{dgcnn_seg_feature_fwd.21} parent=5 // pred_check_branch
      %131 = sbr.rel (%p129) target = $region16
    $region15: #{dgcnn_seg_feature_fwd.21} parent=5 // pred_region
      // Predicated region
      $region17: #{dgcnn_seg_feature_fwd.21} parent=15 // pred_check
        %p132 = pneg %p49
      $region18: #{dgcnn_seg_feature_fwd.21} parent=15 // pred_check_branch
        %134 = sbr.rel (%p132) target = $region20
      $region19: #{dgcnn_seg_feature_fwd.21} parent=15 // pred_region
        %s135 = smul.u32 2, %s16
        %p136 = scmp.lt.s32.totalorder %s15, 1
        %s137 = scalar_select %p136, %s15, 1
        %p138 = scmp.lt.s32.totalorder %s135, 1
        %s139 = scalar_select %p138, %s135, 1
        %s140 = smul.addr %s137, 2
        %s141 = sadd.s32 %s139, %s140
        %s142 = smul.addr %s141, 8
        %s143 = scalar_lea.vmem %s0, %s142
        %s144 = smul.u32 2, %s16
      $region20: #{dgcnn_seg_feature_fwd.21} parent=15 // pred_fallthru
        _
      // Predicated region
      $region21: #{dgcnn_seg_feature_fwd.21} parent=15 // pred_check
        %p145 = pneg %p77
      $region22: #{dgcnn_seg_feature_fwd.21} parent=15 // pred_check_branch
        %147 = sbr.rel (%p145) target = $region24
      $region23: #{dgcnn_seg_feature_fwd.21} parent=15 // pred_region
        %s148 = smul.u32 2, %s17
        %p149 = scmp.lt.s32.totalorder %s15, 1
        %s150 = scalar_select %p149, %s15, 1
        %p151 = scmp.lt.s32.totalorder %s148, 1
        %s152 = scalar_select %p151, %s148, 1
        %s153 = smul.addr %s150, 2
        %s154 = sadd.s32 %s152, %s153
        %s155 = smul.addr %s154, 8
        %s156 = scalar_lea.vmem %s1, %s155
        %s157 = smul.u32 2, %s17
      $region24: #{dgcnn_seg_feature_fwd.21} parent=15 // pred_fallthru
        _
    $region16: #{dgcnn_seg_feature_fwd.21} parent=5 // pred_fallthru
      _
    %p158 = scmp.le.s32.totalorder 1, %s8
    %p159 = scmp.lt.s32.totalorder %s8, 3
    %p160 = pnand %p158, %p159
    %p161 = pneg %p160
    // Predicated region
    $region25: #{dgcnn_seg_feature_fwd.21} parent=5 // pred_check
      _
    $region26: #{dgcnn_seg_feature_fwd.21} parent=5 // pred_check_branch
      %163 = sbr.rel (%p160) target = $region28
    $region27: #{dgcnn_seg_feature_fwd.21} parent=5 // pred_region
      %s164 = ssub.s32 %s8, 1
      %s165 = smul.u32 2, %s19
      %p166 = scmp.lt.s32.totalorder %s18, 1
      %s167 = scalar_select %p166, %s18, 1
      %p168 = scmp.lt.s32.totalorder %s165, 1
      %s169 = scalar_select %p168, %s165, 1
      %s170 = smul.addr %s167, 2
      %s171 = sadd.s32 %s169, %s170
      %s172 = smul.addr %s171, 8
      %s173 = scalar_lea.vmem %s0, %s172
      %p174 = pneg %p55
      %p175 = pneg %p52
      %s176 = smul.u32 2, %s20
      %p177 = scmp.lt.s32.totalorder %s18, 1
      %s178 = scalar_select %p177, %s18, 1
      %p179 = scmp.lt.s32.totalorder %s176, 1
      %s180 = scalar_select %p179, %s176, 1
      %s181 = smul.addr %s178, 2
      %s182 = sadd.s32 %s180, %s181
      %s183 = smul.addr %s182, 8
      %s184 = scalar_lea.vmem %s1, %s183
      %p185 = pneg %p83
      %p186 = pneg %p80
      %p187 = pneg %p113
      %p188 = pneg %p110
      %s189 = smul.u32 2, %s19
      %p190 = scmp.lt.s32.totalorder %s18, 1
      %s191 = scalar_select %p190, %s18, 1
      %p192 = scmp.lt.s32.totalorder %s189, 1
      %s193 = scalar_select %p192, %s189, 1
      %p194 = scmp.lt.s32.totalorder %s20, 0
      %s195 = scalar_select %p194, %s20, 0
      %s196 = sadd.s32 %s195, %s193
      %s197 = smul.addr %s191, 2
      %s198 = sadd.s32 %s196, %s197
      %s199 = smul.addr %s198, 4
      %s200 = scalar_lea.vmem %s2, %s199
      %s201 = smul.u32 2, %s19
      %p202 = scmp.lt.s32.totalorder %s18, 1
      %s203 = scalar_select %p202, %s18, 1
      %p204 = scmp.lt.s32.totalorder %s201, 1
      %s205 = scalar_select %p204, %s201, 1
      %s206 = smul.addr %s203, 2
      %s207 = sadd.s32 %s205, %s206
      %s208 = smul.addr %s207, 8
      %s209 = scalar_lea.vmem %s0, %s208
      %s210 = smul.u32 2, %s19
      %s211 = smul.u32 2, %s20
      %p212 = scmp.lt.s32.totalorder %s18, 1
      %s213 = scalar_select %p212, %s18, 1
      %p214 = scmp.lt.s32.totalorder %s211, 1
      %s215 = scalar_select %p214, %s211, 1
      %s216 = smul.addr %s213, 2
      %s217 = sadd.s32 %s215, %s216
      %s218 = smul.addr %s217, 8
      %s219 = scalar_lea.vmem %s1, %s218
      %s220 = smul.u32 2, %s20
      %s221 = smul.u32 2, %s19
      %p222 = scmp.lt.s32.totalorder %s18, 1
      %s223 = scalar_select %p222, %s18, 1
      %p224 = scmp.lt.s32.totalorder %s221, 1
      %s225 = scalar_select %p224, %s221, 1
      %p226 = scmp.lt.s32.totalorder %s20, 0
      %s227 = scalar_select %p226, %s20, 0
      %s228 = sadd.s32 %s227, %s225
      %s229 = smul.addr %s223, 2
      %s230 = sadd.s32 %s228, %s229
      %s231 = smul.addr %s230, 4
      %s232 = scalar_lea.vmem %s2, %s231
      %s233 = smul.u32 2, %s19
      %v235 = vld [vmem:[%s209] sm:$0xff]
      %v236 = vld [vmem:[%s209 + $0x8] sm:$0xff]
      %v237 = vld [vmem:[%s219] sm:$0xff]
      %v238 = vld [vmem:[%s219 + $0x8] sm:$0xff]
      %v239 = vpack.c.bf16 %v236, %v235
      %v240 = vpack.c.bf16 %v238, %v237
      %vm241 = vcmask 523264
      %v243 = vsel %vm241, %v239, 0
      %v246 = vsel %vm241, %v240, 0
      %248 = vmatpush.bf16.xpose.msra.mxu0 0
      %249 = vmatpush.bf16.xpose.msra.mxu0 0
      %250 = vmatpush.bf16.xpose.msra.mxu0 0
      %251 = vmatpush.bf16.xpose.msra.mxu0 0
      %252 = vmatpush.bf16.xpose.msra.mxu0 0
      %253 = vmatpush.bf16.xpose.msra.mxu0 0
      %254 = vmatpush.bf16.xpose.msra.mxu0 0
      %255 = vmatpush.bf16.xpose.msra.mxu0 %v246
      %256 = vmatmul.bf16.gmra.mxu0 %v243
      %v257 = vpop.f32.mrf.mxu0
      %v258 = vadd.f32 0.0, %v257
      %v259 = vpop.f32.mrf.mxu0
      %v260 = vadd.f32 0.0, %v259
      %261 = vdwg.mxu0
      %v262 = vmul.f32 %v235, %v235
      %v263 = vmul.f32 %v236, %v236
      %v264 = vsel %vm241, %v262, 0.0
      %265 = vadd.xlane.f32.xlu0 %v264
      %v266 = vpop.xlane.xlu0 %265
      %v267 = vsel %vm241, %v263, 0.0
      %268 = vadd.xlane.f32.xlu0 %v267
      %v269 = vpop.xlane.xlu0 %268
      %v270 = vmul.f32 %v237, %v237
      %v271 = vmul.f32 %v238, %v238
      %v273 = vsel %vm241, 1.0, 0
      %v276 = vsel %vm241, %v270, 0
      %v279 = vsel %vm241, %v271, 0
      %281 = vmatpush.xpose.msra.mxu0 0.0
      %282 = vmatpush.xpose.msra.mxu0 0.0
      %283 = vmatpush.xpose.msra.mxu0 0.0
      %284 = vmatpush.xpose.msra.mxu0 0.0
      %285 = vmatpush.xpose.msra.mxu0 0.0
      %286 = vmatpush.xpose.msra.mxu0 0.0
      %287 = vmatpush.xpose.msra.mxu0 0.0
      %288 = vmatpush.xpose.msra.mxu0 0.0
      %289 = vmatpush.xpose.msra.mxu0 0.0
      %290 = vmatpush.xpose.msra.mxu0 0.0
      %291 = vmatpush.xpose.msra.mxu0 0.0
      %292 = vmatpush.xpose.msra.mxu0 0.0
      %293 = vmatpush.xpose.msra.mxu0 0.0
      %294 = vmatpush.xpose.msra.mxu0 0.0
      %295 = vmatpush.xpose.msra.mxu0 %v279
      %296 = vmatpush.xpose.msra.mxu0 %v276
      %297 = vmatmul.f32.gmra.mxu0 %v273
      %v298 = vpop.f32.mrf.mxu0
      %v299 = vadd.f32 0.0, %v298
      %300 = vdwg.mxu0
      %v301 = vmul.f32 %v258, 2.0
      %v302 = vmul.f32 %v260, 2.0
      %v303 = vsub.f32 %v301, %v266
      %v304 = vsub.f32 %v302, %v269
      %v305 = vperm.slane %v299, 0
      %v306 = vsub.f32 %v303, %v305
      %v307 = vsub.f32 %v304, %v305
      %v308 = vpack.c.bf16 %v306, %v306
      %v309 = vpack.c.bf16 %v307, %v307
      %vm310 = vcmask 125952
      %311 = vst.msk [vmem:[%s232] sm:$0xf] %vm310, %v308
      %312 = vst.msk [vmem:[%s232 + $0x4] sm:$0xf] %vm310, %v309
      %s313 = smul.u32 2, %s19
      %p314 = scmp.lt.s32.totalorder %s18, 1
      %s315 = scalar_select %p314, %s18, 1
      %p316 = scmp.lt.s32.totalorder %s313, 1
      %s317 = scalar_select %p316, %s313, 1
      %p318 = scmp.lt.s32.totalorder %s20, 0
      %s319 = scalar_select %p318, %s20, 0
      %s320 = sadd.s32 %s319, %s317
      %s321 = smul.addr %s315, 2
      %s322 = sadd.s32 %s320, %s321
      %s323 = smul.addr %s322, 4
      %s324 = scalar_lea.vmem %s2, %s323
      // Predicated region
      $region29: #{dgcnn_seg_feature_fwd.21} parent=27 // pred_check
        %p325 = pneg %p110
      $region30: #{dgcnn_seg_feature_fwd.21} parent=27 // pred_check_branch
        %327 = sbr.rel (%p325) target = $region32
      $region31: #{dgcnn_seg_feature_fwd.21} parent=27 // pred_region
        %s328 = smul.u32 2, %s19
      $region32: #{dgcnn_seg_feature_fwd.21} parent=27 // pred_fallthru
        _
    $region28: #{dgcnn_seg_feature_fwd.21} parent=5 // pred_fallthru
      _
    %p329 = scmp.le.s32.totalorder 2, %s8
    // Predicated region
    $region33: #{dgcnn_seg_feature_fwd.21} parent=5 // pred_check
      %p330 = pneg %p329
    $region34: #{dgcnn_seg_feature_fwd.21} parent=5 // pred_check_branch
      %332 = sbr.rel (%p330) target = $region36
    $region35: #{dgcnn_seg_feature_fwd.21} parent=5 // pred_region
      %s333 = ssub.s32 %s8, 2
      // Predicated region
      $region37: #{dgcnn_seg_feature_fwd.21} parent=35 // pred_check
        %p334 = pneg %p116
      $region38: #{dgcnn_seg_feature_fwd.21} parent=35 // pred_check_branch
        %336 = sbr.rel (%p334) target = $region40
      $region39: #{dgcnn_seg_feature_fwd.21} parent=35 // pred_region
        %s337 = smul.u32 2, %s22
        %p338 = scmp.lt.s32.totalorder %s21, 1
        %s339 = scalar_select %p338, %s21, 1
        %p340 = scmp.lt.s32.totalorder %s337, 1
        %s341 = scalar_select %p340, %s337, 1
        %p342 = scmp.lt.s32.totalorder %s23, 0
        %s343 = scalar_select %p342, %s23, 0
        %s344 = sadd.s32 %s343, %s341
        %s345 = smul.addr %s339, 2
        %s346 = sadd.s32 %s344, %s345
        %s347 = smul.addr %s346, 4
        %s348 = scalar_lea.vmem %s2, %s347
      $region40: #{dgcnn_seg_feature_fwd.21} parent=35 // pred_fallthru
        _
    $region36: #{dgcnn_seg_feature_fwd.21} parent=5 // pred_fallthru
      _
  $region6: #{dgcnn_seg_feature_fwd.21} parent=0 // loop_footer
    %s12 = sadd.s32 1, %s8
  $region7: #{dgcnn_seg_feature_fwd.21} parent=0 // loop_footer_branch
    %7 = sbr.rel target = $region3
  $region8: #{dgcnn_seg_feature_fwd.21} parent=0 // loop_exit
    _

// kernel: dgcnn_seg_feature_fwd.20
$region0: #{dgcnn_seg_feature_fwd.20}
  #allocation0 [shape = 'u32[]', space=smem, size = 0x4, offset = 0x4, fixed_abs, tag = 'smem constant byte address 0x4 - core index']
  #allocation1 [shape = 'u32[72,128]{1,0:T(1,128)}', space=vmem, size = 0x9000, scoped, tag = 'internal scratch']
  %s0 = inlined_call_operand.vmem [shape: bf16[32,64], index: 0, kind: input, shape index: {}]
  %s1 = inlined_call_operand.vmem [shape: bf16[32,4,64], index: 1, kind: input, shape index: {}]
  %s2 = inlined_call_operand.vmem [shape: f32[1,64], index: 2, kind: input, shape index: {}]
  %s3 = inlined_call_operand.vmem [shape: f32[1,64], index: 3, kind: input, shape index: {}]
  %s4 = inlined_call_operand.vmem [shape: bf16[64,64], index: 4, kind: input, shape index: {}]
  %s5 = inlined_call_operand.vmem [shape: f32[1,64], index: 5, kind: input, shape index: {}]
  %s6 = inlined_call_operand.vmem [shape: f32[1,64], index: 6, kind: input, shape index: {}]
  %s7 = inlined_call_operand.vmem [shape: bf16[128,64], index: 7, kind: input, shape index: {}]
  %s8 = inlined_call_operand.vmem [shape: f32[1,64], index: 8, kind: input, shape index: {}]
  %s9 = inlined_call_operand.vmem [shape: f32[1,64], index: 9, kind: input, shape index: {}]
  %s10 = inlined_call_operand.vmem [shape: f32[32,128], index: 10, kind: output, shape index: {0}]
  %s11 = inlined_call_operand.vmem [shape: f32[32,64], index: 11, kind: output, shape index: {1}]
  %12 = xla_tuple %s10, %s11
  %s13 = sld [smem:[#allocation0]]
  $region58: #{dgcnn_seg_feature_fwd.20} parent=0
    _
  %s15 = ssub.s32 1, %s13
  %s16 = scalar_select 0, %s15, %s13
  // Predicated region
  $region2: #{dgcnn_seg_feature_fwd.20} parent=0 // pred_check
    _
  $region3: #{dgcnn_seg_feature_fwd.20} parent=0 // pred_check_branch
    %18 = sbr.rel (0) target = $region5
  $region4: #{dgcnn_seg_feature_fwd.20} parent=0 // pred_region
    _
  $region5: #{dgcnn_seg_feature_fwd.20} parent=0 // pred_fallthru
    _
  // Predicated region
  $region6: #{dgcnn_seg_feature_fwd.20} parent=0 // pred_check
    _
  $region7: #{dgcnn_seg_feature_fwd.20} parent=0 // pred_check_branch
    %20 = sbr.rel (0) target = $region9
  $region8: #{dgcnn_seg_feature_fwd.20} parent=0 // pred_region
    _
  $region9: #{dgcnn_seg_feature_fwd.20} parent=0 // pred_fallthru
    _
  // Predicated region
  $region10: #{dgcnn_seg_feature_fwd.20} parent=0 // pred_check
    _
  $region11: #{dgcnn_seg_feature_fwd.20} parent=0 // pred_check_branch
    %22 = sbr.rel (0) target = $region13
  $region12: #{dgcnn_seg_feature_fwd.20} parent=0 // pred_region
    _
  $region13: #{dgcnn_seg_feature_fwd.20} parent=0 // pred_fallthru
    _
  // Predicated region
  $region14: #{dgcnn_seg_feature_fwd.20} parent=0 // pred_check
    _
  $region15: #{dgcnn_seg_feature_fwd.20} parent=0 // pred_check_branch
    %24 = sbr.rel (0) target = $region17
  $region16: #{dgcnn_seg_feature_fwd.20} parent=0 // pred_region
    _
  $region17: #{dgcnn_seg_feature_fwd.20} parent=0 // pred_fallthru
    _
  // Predicated region
  $region18: #{dgcnn_seg_feature_fwd.20} parent=0 // pred_check
    _
  $region19: #{dgcnn_seg_feature_fwd.20} parent=0 // pred_check_branch
    %26 = sbr.rel (0) target = $region21
  $region20: #{dgcnn_seg_feature_fwd.20} parent=0 // pred_region
    _
  $region21: #{dgcnn_seg_feature_fwd.20} parent=0 // pred_fallthru
    _
  // Predicated region
  $region22: #{dgcnn_seg_feature_fwd.20} parent=0 // pred_check
    _
  $region23: #{dgcnn_seg_feature_fwd.20} parent=0 // pred_check_branch
    %28 = sbr.rel (0) target = $region25
  $region24: #{dgcnn_seg_feature_fwd.20} parent=0 // pred_region
    _
  $region25: #{dgcnn_seg_feature_fwd.20} parent=0 // pred_fallthru
    _
  // Predicated region
  $region26: #{dgcnn_seg_feature_fwd.20} parent=0 // pred_check
    _
  $region27: #{dgcnn_seg_feature_fwd.20} parent=0 // pred_check_branch
    %30 = sbr.rel (0) target = $region29
  $region28: #{dgcnn_seg_feature_fwd.20} parent=0 // pred_region
    _
  $region29: #{dgcnn_seg_feature_fwd.20} parent=0 // pred_fallthru
    _
  // Predicated region
  $region30: #{dgcnn_seg_feature_fwd.20} parent=0 // pred_check
    _
  $region31: #{dgcnn_seg_feature_fwd.20} parent=0 // pred_check_branch
    %32 = sbr.rel (0) target = $region33
  $region32: #{dgcnn_seg_feature_fwd.20} parent=0 // pred_region
    _
  $region33: #{dgcnn_seg_feature_fwd.20} parent=0 // pred_fallthru
    _
  // Predicated region
  $region34: #{dgcnn_seg_feature_fwd.20} parent=0 // pred_check
    _
  $region35: #{dgcnn_seg_feature_fwd.20} parent=0 // pred_check_branch
    %34 = sbr.rel (0) target = $region37
  $region36: #{dgcnn_seg_feature_fwd.20} parent=0 // pred_region
    _
  $region37: #{dgcnn_seg_feature_fwd.20} parent=0 // pred_fallthru
    _
  // Predicated region
  $region38: #{dgcnn_seg_feature_fwd.20} parent=0 // pred_check
    _
  $region39: #{dgcnn_seg_feature_fwd.20} parent=0 // pred_check_branch
    %36 = sbr.rel (0) target = $region41
  $region40: #{dgcnn_seg_feature_fwd.20} parent=0 // pred_region
    _
  $region41: #{dgcnn_seg_feature_fwd.20} parent=0 // pred_fallthru
    _
  %v38 = vld [vmem:[%s0] sm:$0xf]
  %v39 = vld [vmem:[%s0 + $0x4] sm:$0xf]
  %v40 = vld [vmem:[%s0 + $0x8] sm:$0xf]
  %v41 = vld [vmem:[%s0 + $0xc] sm:$0xf]
  %v42 = vunpack.c.l.bf16 %v38
  %v43 = vunpack.c.l.bf16 %v39
  %v44 = vunpack.c.l.bf16 %v40
  %v45 = vunpack.c.l.bf16 %v41
  %v46 = vld [vmem:[%s1] sm:$0x3]
  %v47 = vld [vmem:[%s1 + $0x2] sm:$0x3]
  %v48 = vld [vmem:[%s1 + $0x4] sm:$0x3]
  %v49 = vld [vmem:[%s1 + $0x6] sm:$0x3]
  %v50 = vld [vmem:[%s1 + $0x8] sm:$0x3]
  %v51 = vld [vmem:[%s1 + $0xa] sm:$0x3]
  %v52 = vld [vmem:[%s1 + $0xc] sm:$0x3]
  %v53 = vld [vmem:[%s1 + $0xe] sm:$0x3]
  %v54 = vld [vmem:[%s1 + $0x10] sm:$0x3]
  %v55 = vld [vmem:[%s1 + $0x12] sm:$0x3]
  %v56 = vld [vmem:[%s1 + $0x14] sm:$0x3]
  %v57 = vld [vmem:[%s1 + $0x16] sm:$0x3]
  %v58 = vld [vmem:[%s1 + $0x18] sm:$0x3]
  %v59 = vld [vmem:[%s1 + $0x1a] sm:$0x3]
  %v60 = vld [vmem:[%s1 + $0x1c] sm:$0x3]
  %v61 = vld [vmem:[%s1 + $0x1e] sm:$0x3]
  %v62 = vld [vmem:[%s1 + $0x20] sm:$0x3]
  %v63 = vld [vmem:[%s1 + $0x22] sm:$0x3]
  %v64 = vld [vmem:[%s1 + $0x24] sm:$0x3]
  %v65 = vld [vmem:[%s1 + $0x26] sm:$0x3]
  %v66 = vld [vmem:[%s1 + $0x28] sm:$0x3]
  %v67 = vld [vmem:[%s1 + $0x2a] sm:$0x3]
  %v68 = vld [vmem:[%s1 + $0x2c] sm:$0x3]
  %v69 = vld [vmem:[%s1 + $0x2e] sm:$0x3]
  %v70 = vld [vmem:[%s1 + $0x30] sm:$0x3]
  %v71 = vld [vmem:[%s1 + $0x32] sm:$0x3]
  %v72 = vld [vmem:[%s1 + $0x34] sm:$0x3]
  %v73 = vld [vmem:[%s1 + $0x36] sm:$0x3]
  %v74 = vld [vmem:[%s1 + $0x38] sm:$0x3]
  %v75 = vld [vmem:[%s1 + $0x3a] sm:$0x3]
  %v76 = vld [vmem:[%s1 + $0x3c] sm:$0x3]
  %v77 = vld [vmem:[%s1 + $0x3e] sm:$0x3]
  %v78 = vunpack.c.l.bf16 %v46
  %v79 = vunpack.c.l.bf16 %v47
  %v80 = vunpack.c.l.bf16 %v48
  %v81 = vunpack.c.l.bf16 %v49
  %v82 = vunpack.c.l.bf16 %v50
  %v83 = vunpack.c.l.bf16 %v51
  %v84 = vunpack.c.l.bf16 %v52
  %v85 = vunpack.c.l.bf16 %v53
  %v86 = vunpack.c.l.bf16 %v54
  %v87 = vunpack.c.l.bf16 %v55
  %v88 = vunpack.c.l.bf16 %v56
  %v89 = vunpack.c.l.bf16 %v57
  %v90 = vunpack.c.l.bf16 %v58
  %v91 = vunpack.c.l.bf16 %v59
  %v92 = vunpack.c.l.bf16 %v60
  %v93 = vunpack.c.l.bf16 %v61
  %v94 = vunpack.c.l.bf16 %v62
  %v95 = vunpack.c.l.bf16 %v63
  %v96 = vunpack.c.l.bf16 %v64
  %v97 = vunpack.c.l.bf16 %v65
  %v98 = vunpack.c.l.bf16 %v66
  %v99 = vunpack.c.l.bf16 %v67
  %v100 = vunpack.c.l.bf16 %v68
  %v101 = vunpack.c.l.bf16 %v69
  %v102 = vunpack.c.l.bf16 %v70
  %v103 = vunpack.c.l.bf16 %v71
  %v104 = vunpack.c.l.bf16 %v72
  %v105 = vunpack.c.l.bf16 %v73
  %v106 = vunpack.c.l.bf16 %v74
  %v107 = vunpack.c.l.bf16 %v75
  %v108 = vunpack.c.l.bf16 %v76
  %v109 = vunpack.c.l.bf16 %v77
  %v110 = vld [vmem:[%s2] sm:$0x1]
  %v111 = vld [vmem:[%s3] sm:$0x1]
  %v144 = vperm.slane %v78, 0
  %v145 = vperm.slane %v79, 0
  %v146 = vperm.slane %v80, 0
  %v147 = vperm.slane %v81, 0
  %v148 = vperm.slane %v82, 0
  %v149 = vperm.slane %v83, 0
  %v150 = vperm.slane %v84, 0
  %v151 = vperm.slane %v85, 0
  %v152 = vperm.slane %v86, 0
  %v153 = vperm.slane %v87, 0
  %v154 = vperm.slane %v88, 0
  %v155 = vperm.slane %v89, 0
  %v156 = vperm.slane %v90, 0
  %v157 = vperm.slane %v91, 0
  %v158 = vperm.slane %v92, 0
  %v159 = vperm.slane %v93, 0
  %v160 = vperm.slane %v94, 0
  %v161 = vperm.slane %v95, 0
  %v162 = vperm.slane %v96, 0
  %v163 = vperm.slane %v97, 0
  %v164 = vperm.slane %v98, 0
  %v165 = vperm.slane %v99, 0
  %v166 = vperm.slane %v100, 0
  %v167 = vperm.slane %v101, 0
  %v168 = vperm.slane %v102, 0
  %v169 = vperm.slane %v103, 0
  %v170 = vperm.slane %v104, 0
  %v171 = vperm.slane %v105, 0
  %v172 = vperm.slane %v106, 0
  %v173 = vperm.slane %v107, 0
  %v174 = vperm.slane %v108, 0
  %v175 = vperm.slane %v109, 0
  %vm176 = vcmask 1041409
  %v177 = vsel %vm176, %v145, %v144
  %vm178 = vcmask 1042434
  %v179 = vsel %vm178, %v146, %v177
  %vm180 = vcmask 1043459
  %v181 = vsel %vm180, %v147, %v179
  %vm182 = vcmask 1044484
  %v183 = vsel %vm182, %v148, %v181
  %vm184 = vcmask 1045509
  %v185 = vsel %vm184, %v149, %v183
  %vm186 = vcmask 1046534
  %v187 = vsel %vm186, %v150, %v185
  %vm188 = vcmask 1047559
  %v189 = vsel %vm188, %v151, %v187
  %v190 = vsel %vm176, %v153, %v152
  %v191 = vsel %vm178, %v154, %v190
  %v192 = vsel %vm180, %v155, %v191
  %v193 = vsel %vm182, %v156, %v192
  %v194 = vsel %vm184, %v157, %v193
  %v195 = vsel %vm186, %v158, %v194
  %v196 = vsel %vm188, %v159, %v195
  %v197 = vsel %vm176, %v161, %v160
  %v198 = vsel %vm178, %v162, %v197
  %v199 = vsel %vm180, %v163, %v198
  %v200 = vsel %vm182, %v164, %v199
  %v201 = vsel %vm184, %v165, %v200
  %v202 = vsel %vm186, %v166, %v201
  %v203 = vsel %vm188, %v167, %v202
  %v204 = vsel %vm176, %v169, %v168
  %v205 = vsel %vm178, %v170, %v204
  %v206 = vsel %vm180, %v171, %v205
  %v207 = vsel %vm182, %v172, %v206
  %v208 = vsel %vm184, %v173, %v207
  %v209 = vsel %vm186, %v174, %v208
  %v210 = vsel %vm188, %v175, %v209
  %v215 = vadd.f32 %v42, %v189
  %v216 = vadd.f32 %v43, %v196
  %v217 = vadd.f32 %v44, %v203
  %v218 = vadd.f32 %v45, %v210
  %v220 = vperm.slane %v110, 0
  %v222 = vmul.f32 %v215, %v220
  %v223 = vmul.f32 %v216, %v220
  %v224 = vmul.f32 %v217, %v220
  %v225 = vmul.f32 %v218, %v220
  %v227 = vperm.slane %v111, 0
  %v229 = vadd.f32 %v222, %v227
  %v230 = vadd.f32 %v223, %v227
  %v231 = vadd.f32 %v224, %v227
  %v232 = vadd.f32 %v225, %v227
  %v233 = vmax.f32 %v229, 0.0
  %v234 = vmax.f32 %v230, 0.0
  %v235 = vmax.f32 %v231, 0.0
  %v236 = vmax.f32 %v232, 0.0
  %v237 = vperm.slane %v78, 1
  %v238 = vperm.slane %v79, 1
  %v239 = vperm.slane %v80, 1
  %v240 = vperm.slane %v81, 1
  %v241 = vperm.slane %v82, 1
  %v242 = vperm.slane %v83, 1
  %v243 = vperm.slane %v84, 1
  %v244 = vperm.slane %v85, 1
  %v245 = vperm.slane %v86, 1
  %v246 = vperm.slane %v87, 1
  %v247 = vperm.slane %v88, 1
  %v248 = vperm.slane %v89, 1
  %v249 = vperm.slane %v90, 1
  %v250 = vperm.slane %v91, 1
  %v251 = vperm.slane %v92, 1
  %v252 = vperm.slane %v93, 1
  %v253 = vperm.slane %v94, 1
  %v254 = vperm.slane %v95, 1
  %v255 = vperm.slane %v96, 1
  %v256 = vperm.slane %v97, 1
  %v257 = vperm.slane %v98, 1
  %v258 = vperm.slane %v99, 1
  %v259 = vperm.slane %v100, 1
  %v260 = vperm.slane %v101, 1
  %v261 = vperm.slane %v102, 1
  %v262 = vperm.slane %v103, 1
  %v263 = vperm.slane %v104, 1
  %v264 = vperm.slane %v105, 1
  %v265 = vperm.slane %v106, 1
  %v266 = vperm.slane %v107, 1
  %v267 = vperm.slane %v108, 1
  %v268 = vperm.slane %v109, 1
  %v269 = vsel %vm176, %v238, %v237
  %v270 = vsel %vm178, %v239, %v269
  %v271 = vsel %vm180, %v240, %v270
  %v272 = vsel %vm182, %v241, %v271
  %v273 = vsel %vm184, %v242, %v272
  %v274 = vsel %vm186, %v243, %v273
  %v275 = vsel %vm188, %v244, %v274
  %v276 = vsel %vm176, %v246, %v245
  %v277 = vsel %vm178, %v247, %v276
  %v278 = vsel %vm180, %v248, %v277
  %v279 = vsel %vm182, %v249, %v278
  %v280 = vsel %vm184, %v250, %v279
  %v281 = vsel %vm186, %v251, %v280
  %v282 = vsel %vm188, %v252, %v281
  %v283 = vsel %vm176, %v254, %v253
  %v284 = vsel %vm178, %v255, %v283
  %v285 = vsel %vm180, %v256, %v284
  %v286 = vsel %vm182, %v257, %v285
  %v287 = vsel %vm184, %v258, %v286
  %v288 = vsel %vm186, %v259, %v287
  %v289 = vsel %vm188, %v260, %v288
  %v290 = vsel %vm176, %v262, %v261
  %v291 = vsel %vm178, %v263, %v290
  %v292 = vsel %vm180, %v264, %v291
  %v293 = vsel %vm182, %v265, %v292
  %v294 = vsel %vm184, %v266, %v293
  %v295 = vsel %vm186, %v267, %v294
  %v296 = vsel %vm188, %v268, %v295
  %v301 = vadd.f32 %v42, %v275
  %v302 = vadd.f32 %v43, %v282
  %v303 = vadd.f32 %v44, %v289
  %v304 = vadd.f32 %v45, %v296
  %v305 = vmul.f32 %v301, %v220
  %v306 = vmul.f32 %v302, %v220
  %v307 = vmul.f32 %v303, %v220
  %v308 = vmul.f32 %v304, %v220
  %v309 = vadd.f32 %v305, %v227
  %v310 = vadd.f32 %v306, %v227
  %v311 = vadd.f32 %v307, %v227
  %v312 = vadd.f32 %v308, %v227
  %v313 = vmax.f32 %v309, 0.0
  %v314 = vmax.f32 %v310, 0.0
  %v315 = vmax.f32 %v311, 0.0
  %v316 = vmax.f32 %v312, 0.0
  %v317 = vperm.slane %v78, 2
  %v318 = vperm.slane %v79, 2
  %v319 = vperm.slane %v80, 2
  %v320 = vperm.slane %v81, 2
  %v321 = vperm.slane %v82, 2
  %v322 = vperm.slane %v83, 2
  %v323 = vperm.slane %v84, 2
  %v324 = vperm.slane %v85, 2
  %v325 = vperm.slane %v86, 2
  %v326 = vperm.slane %v87, 2
  %v327 = vperm.slane %v88, 2
  %v328 = vperm.slane %v89, 2
  %v329 = vperm.slane %v90, 2
  %v330 = vperm.slane %v91, 2
  %v331 = vperm.slane %v92, 2
  %v332 = vperm.slane %v93, 2
  %v333 = vperm.slane %v94, 2
  %v334 = vperm.slane %v95, 2
  %v335 = vperm.slane %v96, 2
  %v336 = vperm.slane %v97, 2
  %v337 = vperm.slane %v98, 2
  %v338 = vperm.slane %v99, 2
  %v339 = vperm.slane %v100, 2
  %v340 = vperm.slane %v101, 2
  %v341 = vperm.slane %v102, 2
  %v342 = vperm.slane %v103, 2
  %v343 = vperm.slane %v104, 2
  %v344 = vperm.slane %v105, 2
  %v345 = vperm.slane %v106, 2
  %v346 = vperm.slane %v107, 2
  %v347 = vperm.slane %v108, 2
  %v348 = vperm.slane %v109, 2
  %v349 = vsel %vm176, %v318, %v317
  %v350 = vsel %vm178, %v319, %v349
  %v351 = vsel %vm180, %v320, %v350
  %v352 = vsel %vm182, %v321, %v351
  %v353 = vsel %vm184, %v322, %v352
  %v354 = vsel %vm186, %v323, %v353
  %v355 = vsel %vm188, %v324, %v354
  %v356 = vsel %vm176, %v326, %v325
  %v357 = vsel %vm178, %v327, %v356
  %v358 = vsel %vm180, %v328, %v357
  %v359 = vsel %vm182, %v329, %v358
  %v360 = vsel %vm184, %v330, %v359
  %v361 = vsel %vm186, %v331, %v360
  %v362 = vsel %vm188, %v332, %v361
  %v363 = vsel %vm176, %v334, %v333
  %v364 = vsel %vm178, %v335, %v363
  %v365 = vsel %vm180, %v336, %v364
  %v366 = vsel %vm182, %v337, %v365
  %v367 = vsel %vm184, %v338, %v366
  %v368 = vsel %vm186, %v339, %v367
  %v369 = vsel %vm188, %v340, %v368
  %v370 = vsel %vm176, %v342, %v341
  %v371 = vsel %vm178, %v343, %v370
  %v372 = vsel %vm180, %v344, %v371
  %v373 = vsel %vm182, %v345, %v372
  %v374 = vsel %vm184, %v346, %v373
  %v375 = vsel %vm186, %v347, %v374
  %v376 = vsel %vm188, %v348, %v375
  %v381 = vadd.f32 %v42, %v355
  %v382 = vadd.f32 %v43, %v362
  %v383 = vadd.f32 %v44, %v369
  %v384 = vadd.f32 %v45, %v376
  %v385 = vmul.f32 %v381, %v220
  %v386 = vmul.f32 %v382, %v220
  %v387 = vmul.f32 %v383, %v220
  %v388 = vmul.f32 %v384, %v220
  %v389 = vadd.f32 %v385, %v227
  %v390 = vadd.f32 %v386, %v227
  %v391 = vadd.f32 %v387, %v227
  %v392 = vadd.f32 %v388, %v227
  %v393 = vmax.f32 %v389, 0.0
  %v394 = vmax.f32 %v390, 0.0
  %v395 = vmax.f32 %v391, 0.0
  %v396 = vmax.f32 %v392, 0.0
  %v397 = vperm.slane %v78, 3
  %v398 = vperm.slane %v79, 3
  %v399 = vperm.slane %v80, 3
  %v400 = vperm.slane %v81, 3
  %v401 = vperm.slane %v82, 3
  %v402 = vperm.slane %v83, 3
  %v403 = vperm.slane %v84, 3
  %v404 = vperm.slane %v85, 3
  %v405 = vperm.slane %v86, 3
  %v406 = vperm.slane %v87, 3
  %v407 = vperm.slane %v88, 3
  %v408 = vperm.slane %v89, 3
  %v409 = vperm.slane %v90, 3
  %v410 = vperm.slane %v91, 3
  %v411 = vperm.slane %v92, 3
  %v412 = vperm.slane %v93, 3
  %v413 = vperm.slane %v94, 3
  %v414 = vperm.slane %v95, 3
  %v415 = vperm.slane %v96, 3
  %v416 = vperm.slane %v97, 3
  %v417 = vperm.slane %v98, 3
  %v418 = vperm.slane %v99, 3
  %v419 = vperm.slane %v100, 3
  %v420 = vperm.slane %v101, 3
  %v421 = vperm.slane %v102, 3
  %v422 = vperm.slane %v103, 3
  %v423 = vperm.slane %v104, 3
  %v424 = vperm.slane %v105, 3
  %v425 = vperm.slane %v106, 3
  %v426 = vperm.slane %v107, 3
  %v427 = vperm.slane %v108, 3
  %v428 = vperm.slane %v109, 3
  %v429 = vsel %vm176, %v398, %v397
  %v430 = vsel %vm178, %v399, %v429
  %v431 = vsel %vm180, %v400, %v430
  %v432 = vsel %vm182, %v401, %v431
  %v433 = vsel %vm184, %v402, %v432
  %v434 = vsel %vm186, %v403, %v433
  %v435 = vsel %vm188, %v404, %v434
  %v436 = vsel %vm176, %v406, %v405
  %v437 = vsel %vm178, %v407, %v436
  %v438 = vsel %vm180, %v408, %v437
  %v439 = vsel %vm182, %v409, %v438
  %v440 = vsel %vm184, %v410, %v439
  %v441 = vsel %vm186, %v411, %v440
  %v442 = vsel %vm188, %v412, %v441
  %v443 = vsel %vm176, %v414, %v413
  %v444 = vsel %vm178, %v415, %v443
  %v445 = vsel %vm180, %v416, %v444
  %v446 = vsel %vm182, %v417, %v445
  %v447 = vsel %vm184, %v418, %v446
  %v448 = vsel %vm186, %v419, %v447
  %v449 = vsel %vm188, %v420, %v448
  %v450 = vsel %vm176, %v422, %v421
  %v451 = vsel %vm178, %v423, %v450
  %v452 = vsel %vm180, %v424, %v451
  %v453 = vsel %vm182, %v425, %v452
  %v454 = vsel %vm184, %v426, %v453
  %v455 = vsel %vm186, %v427, %v454
  %v456 = vsel %vm188, %v428, %v455
  %v461 = vadd.f32 %v42, %v435
  %v462 = vadd.f32 %v43, %v442
  %v463 = vadd.f32 %v44, %v449
  %v464 = vadd.f32 %v45, %v456
  %v465 = vmul.f32 %v461, %v220
  %v466 = vmul.f32 %v462, %v220
  %v467 = vmul.f32 %v463, %v220
  %v468 = vmul.f32 %v464, %v220
  %v469 = vadd.f32 %v465, %v227
  %v470 = vadd.f32 %v466, %v227
  %v471 = vadd.f32 %v467, %v227
  %v472 = vadd.f32 %v468, %v227
  %v473 = vmax.f32 %v469, 0.0
  %v474 = vmax.f32 %v470, 0.0
  %v475 = vmax.f32 %v471, 0.0
  %v476 = vmax.f32 %v472, 0.0
  %v477 = vpack.c.bf16 %v234, %v233
  %v478 = vpack.c.bf16 %v236, %v235
  %v479 = vpack.c.bf16 %v314, %v313
  %v480 = vpack.c.bf16 %v316, %v315
  %v481 = vpack.c.bf16 %v394, %v393
  %v482 = vpack.c.bf16 %v396, %v395
  %v483 = vpack.c.bf16 %v474, %v473
  %v484 = vpack.c.bf16 %v476, %v475
  %v485 = vld [vmem:[%s4] sm:$0xf]
  %v486 = vld [vmem:[%s4 + $0x4] sm:$0xf]
  %v487 = vld [vmem:[%s4 + $0x8] sm:$0xf]
  %v488 = vld [vmem:[%s4 + $0xc] sm:$0xf]
  %v489 = vld [vmem:[%s4 + $0x10] sm:$0xf]
  %v490 = vld [vmem:[%s4 + $0x14] sm:$0xf]
  %v491 = vld [vmem:[%s4 + $0x18] sm:$0xf]
  %v492 = vld [vmem:[%s4 + $0x1c] sm:$0xf]
  %v501 = vunpack.c.l.b16 %v485
  %v502 = vunpack.c.l.b16 %v486
  %v503 = vunpack.c.l.b16 %v487
  %v504 = vunpack.c.l.b16 %v488
  %v505 = vunpack.c.l.b16 %v489
  %v506 = vunpack.c.l.b16 %v490
  %v507 = vunpack.c.l.b16 %v491
  %v508 = vunpack.c.l.b16 %v492
  %v509 = vpack.c.b16 %v502, %v501
  %v510 = vpack.c.b16 %v504, %v503
  %v511 = vpack.c.b16 %v506, %v505
  %v512 = vpack.c.b16 %v508, %v507
  %vm517 = vcmask 523264
  %v519 = vsel %vm517, %v477, 0
  %v522 = vsel %vm517, %v478, 0
  %v525 = vsel %vm517, %v479, 0
  %v528 = vsel %vm517, %v480, 0
  %v531 = vsel %vm517, %v481, 0
  %v534 = vsel %vm517, %v482, 0
  %v537 = vsel %vm517, %v483, 0
  %v540 = vsel %vm517, %v484, 0
  %542 = vmatpush.bf16.msra.mxu0 0
  %543 = vmatpush.bf16.msra.mxu0 0
  %544 = vmatpush.bf16.msra.mxu0 0
  %545 = vmatpush.bf16.msra.mxu0 0
  %546 = vmatpush.bf16.msra.mxu0 %v512
  %547 = vmatpush.bf16.msra.mxu0 %v511
  %548 = vmatpush.bf16.msra.mxu0 %v510
  %549 = vmatpush.bf16.msra.mxu0 %v509
  %550 = vmatmul.bf16.gmra.mxu0 %v519
  %v551 = vpop.f32.mrf.mxu0
  %v552 = vadd.f32 0.0, %v551
  %v553 = vpop.f32.mrf.mxu0
  %v554 = vadd.f32 0.0, %v553
  %555 = vmatmul.bf16.gmra.mxu0 %v522
  %v556 = vpop.f32.mrf.mxu0
  %v557 = vadd.f32 0.0, %v556
  %v558 = vpop.f32.mrf.mxu0
  %v559 = vadd.f32 0.0, %v558
  %560 = vmatmul.bf16.gmra.mxu0 %v525
  %v561 = vpop.f32.mrf.mxu0
  %v562 = vadd.f32 0.0, %v561
  %v563 = vpop.f32.mrf.mxu0
  %v564 = vadd.f32 0.0, %v563
  %565 = vmatmul.bf16.gmra.mxu0 %v528
  %v566 = vpop.f32.mrf.mxu0
  %v567 = vadd.f32 0.0, %v566
  %v568 = vpop.f32.mrf.mxu0
  %v569 = vadd.f32 0.0, %v568
  %570 = vmatmul.bf16.gmra.mxu0 %v531
  %v571 = vpop.f32.mrf.mxu0
  %v572 = vadd.f32 0.0, %v571
  %v573 = vpop.f32.mrf.mxu0
  %v574 = vadd.f32 0.0, %v573
  %575 = vmatmul.bf16.gmra.mxu0 %v534
  %v576 = vpop.f32.mrf.mxu0
  %v577 = vadd.f32 0.0, %v576
  %v578 = vpop.f32.mrf.mxu0
  %v579 = vadd.f32 0.0, %v578
  %580 = vmatmul.bf16.gmra.mxu0 %v537
  %v581 = vpop.f32.mrf.mxu0
  %v582 = vadd.f32 0.0, %v581
  %v583 = vpop.f32.mrf.mxu0
  %v584 = vadd.f32 0.0, %v583
  %585 = vmatmul.bf16.gmra.mxu0 %v540
  %v586 = vpop.f32.mrf.mxu0
  %v587 = vadd.f32 0.0, %v586
  %v588 = vpop.f32.mrf.mxu0
  %v589 = vadd.f32 0.0, %v588
  %590 = vdwg.mxu0
  %v591 = vld [vmem:[%s5] sm:$0x1]
  %v593 = vperm.slane %v591, 0
  %v595 = vmul.f32 %v552, %v593
  %v596 = vmul.f32 %v554, %v593
  %v597 = vmul.f32 %v557, %v593
  %v598 = vmul.f32 %v559, %v593
  %v599 = vmul.f32 %v562, %v593
  %v600 = vmul.f32 %v564, %v593
  %v601 = vmul.f32 %v567, %v593
  %v602 = vmul.f32 %v569, %v593
  %v603 = vmul.f32 %v572, %v593
  %v604 = vmul.f32 %v574, %v593
  %v605 = vmul.f32 %v577, %v593
  %v606 = vmul.f32 %v579, %v593
  %v607 = vmul.f32 %v582, %v593
  %v608 = vmul.f32 %v584, %v593
  %v609 = vmul.f32 %v587, %v593
  %v610 = vmul.f32 %v589, %v593
  %v611 = vld [vmem:[%s6] sm:$0x1]
  %v613 = vperm.slane %v611, 0
  %v615 = vadd.f32 %v595, %v613
  %v616 = vadd.f32 %v596, %v613
  %v617 = vadd.f32 %v597, %v613
  %v618 = vadd.f32 %v598, %v613
  %v619 = vadd.f32 %v599, %v613
  %v620 = vadd.f32 %v600, %v613
  %v621 = vadd.f32 %v601, %v613
  %v622 = vadd.f32 %v602, %v613
  %v623 = vadd.f32 %v603, %v613
  %v624 = vadd.f32 %v604, %v613
  %v625 = vadd.f32 %v605, %v613
  %v626 = vadd.f32 %v606, %v613
  %v627 = vadd.f32 %v607, %v613
  %v628 = vadd.f32 %v608, %v613
  %v629 = vadd.f32 %v609, %v613
  %v630 = vadd.f32 %v610, %v613
  %v631 = vmax.f32 %v615, 0.0
  %v632 = vmax.f32 %v616, 0.0
  %v633 = vmax.f32 %v617, 0.0
  %v634 = vmax.f32 %v618, 0.0
  %v635 = vmax.f32 %v619, 0.0
  %v636 = vmax.f32 %v620, 0.0
  %v637 = vmax.f32 %v621, 0.0
  %v638 = vmax.f32 %v622, 0.0
  %v639 = vmax.f32 %v623, 0.0
  %v640 = vmax.f32 %v624, 0.0
  %v641 = vmax.f32 %v625, 0.0
  %v642 = vmax.f32 %v626, 0.0
  %v643 = vmax.f32 %v627, 0.0
  %v644 = vmax.f32 %v628, 0.0
  %v645 = vmax.f32 %v629, 0.0
  %v646 = vmax.f32 %v630, 0.0
  %v647 = vmax.f32 %v631, %v635
  %v648 = vmax.f32 %v632, %v636
  %v649 = vmax.f32 %v633, %v637
  %v650 = vmax.f32 %v634, %v638
  %v651 = vadd.f32 %v631, %v635
  %v652 = vadd.f32 %v632, %v636
  %v653 = vadd.f32 %v633, %v637
  %v654 = vadd.f32 %v634, %v638
  %v655 = vmax.f32 %v647, %v639
  %v656 = vmax.f32 %v648, %v640
  %v657 = vmax.f32 %v649, %v641
  %v658 = vmax.f32 %v650, %v642
  %v659 = vadd.f32 %v651, %v639
  %v660 = vadd.f32 %v652, %v640
  %v661 = vadd.f32 %v653, %v641
  %v662 = vadd.f32 %v654, %v642
  %v663 = vmax.f32 %v655, %v643
  %v664 = vmax.f32 %v656, %v644
  %v665 = vmax.f32 %v657, %v645
  %v666 = vmax.f32 %v658, %v646
  %v667 = vadd.f32 %v659, %v643
  %v668 = vadd.f32 %v660, %v644
  %v669 = vadd.f32 %v661, %v645
  %v670 = vadd.f32 %v662, %v646
  %v671 = vmul.f32 %v667, 0.25
  %v672 = vmul.f32 %v668, 0.25
  %v673 = vmul.f32 %v669, 0.25
  %v674 = vmul.f32 %v670, 0.25
  %679 = vrot.lane.b32.xlu0 %v671, 64
  %v680 = vpop.permute.xlu0 %679
  %681 = vrot.lane.b32.xlu0 %v672, 64
  %v682 = vpop.permute.xlu0 %681
  %683 = vrot.lane.b32.xlu0 %v673, 64
  %v684 = vpop.permute.xlu0 %683
  %685 = vrot.lane.b32.xlu0 %v674, 64
  %v686 = vpop.permute.xlu0 %685
  %v691 = vsel %vm517, %v663, %v680
  %v692 = vsel %vm517, %v664, %v682
  %v693 = vsel %vm517, %v665, %v684
  %v694 = vsel %vm517, %v666, %v686
  %695 = vst [vmem:[%s10] sm:$0xff] %v691
  %696 = vst [vmem:[%s10 + $0x8] sm:$0xff] %v692
  %697 = vst [vmem:[%s10 + $0x10] sm:$0xff] %v693
  %698 = vst [vmem:[%s10 + $0x18] sm:$0xff] %v694
  %v699 = vpack.c.bf16 %v692, %v691
  %v700 = vpack.c.bf16 %v694, %v693
  %v701 = vld [vmem:[%s7] sm:$0xf]
  %v702 = vld [vmem:[%s7 + $0x4] sm:$0xf]
  %v703 = vld [vmem:[%s7 + $0x8] sm:$0xf]
  %v704 = vld [vmem:[%s7 + $0xc] sm:$0xf]
  %v705 = vld [vmem:[%s7 + $0x10] sm:$0xf]
  %v706 = vld [vmem:[%s7 + $0x14] sm:$0xf]
  %v707 = vld [vmem:[%s7 + $0x18] sm:$0xf]
  %v708 = vld [vmem:[%s7 + $0x1c] sm:$0xf]
  %v709 = vld [vmem:[%s7 + $0x20] sm:$0xf]
  %v710 = vld [vmem:[%s7 + $0x24] sm:$0xf]
  %v711 = vld [vmem:[%s7 + $0x28] sm:$0xf]
  %v712 = vld [vmem:[%s7 + $0x2c] sm:$0xf]
  %v713 = vld [vmem:[%s7 + $0x30] sm:$0xf]
  %v714 = vld [vmem:[%s7 + $0x34] sm:$0xf]
  %v715 = vld [vmem:[%s7 + $0x38] sm:$0xf]
  %v716 = vld [vmem:[%s7 + $0x3c] sm:$0xf]
  %v733 = vunpack.c.l.b16 %v701
  %v734 = vunpack.c.l.b16 %v702
  %v735 = vunpack.c.l.b16 %v703
  %v736 = vunpack.c.l.b16 %v704
  %v737 = vunpack.c.l.b16 %v705
  %v738 = vunpack.c.l.b16 %v706
  %v739 = vunpack.c.l.b16 %v707
  %v740 = vunpack.c.l.b16 %v708
  %v741 = vunpack.c.l.b16 %v709
  %v742 = vunpack.c.l.b16 %v710
  %v743 = vunpack.c.l.b16 %v711
  %v744 = vunpack.c.l.b16 %v712
  %v745 = vunpack.c.l.b16 %v713
  %v746 = vunpack.c.l.b16 %v714
  %v747 = vunpack.c.l.b16 %v715
  %v748 = vunpack.c.l.b16 %v716
  %v749 = vpack.c.b16 %v734, %v733
  %v750 = vpack.c.b16 %v736, %v735
  %v751 = vpack.c.b16 %v738, %v737
  %v752 = vpack.c.b16 %v740, %v739
  %v753 = vpack.c.b16 %v742, %v741
  %v754 = vpack.c.b16 %v744, %v743
  %v755 = vpack.c.b16 %v746, %v745
  %v756 = vpack.c.b16 %v748, %v747
  %765 = vmatpush.bf16.msra.mxu0 %v756
  %766 = vmatpush.bf16.msra.mxu0 %v755
  %767 = vmatpush.bf16.msra.mxu0 %v754
  %768 = vmatpush.bf16.msra.mxu0 %v753
  %769 = vmatpush.bf16.msra.mxu0 %v752
  %770 = vmatpush.bf16.msra.mxu0 %v751
  %771 = vmatpush.bf16.msra.mxu0 %v750
  %772 = vmatpush.bf16.msra.mxu0 %v749
  %773 = vmatmul.bf16.gmra.mxu0 %v699
  %v774 = vpop.f32.mrf.mxu0
  %v775 = vadd.f32 0.0, %v774
  %v776 = vpop.f32.mrf.mxu0
  %v777 = vadd.f32 0.0, %v776
  %778 = vmatmul.bf16.gmra.mxu0 %v700
  %v779 = vpop.f32.mrf.mxu0
  %v780 = vadd.f32 0.0, %v779
  %v781 = vpop.f32.mrf.mxu0
  %v782 = vadd.f32 0.0, %v781
  %783 = vdwg.mxu0
  %v784 = vld [vmem:[%s8] sm:$0x1]
  %v786 = vperm.slane %v784, 0
  %v788 = vmul.f32 %v775, %v786
  %v789 = vmul.f32 %v777, %v786
  %v790 = vmul.f32 %v780, %v786
  %v791 = vmul.f32 %v782, %v786
  %v792 = vld [vmem:[%s9] sm:$0x1]
  %v794 = vperm.slane %v792, 0
  %v796 = vadd.f32 %v788, %v794
  %v797 = vadd.f32 %v789, %v794
  %v798 = vadd.f32 %v790, %v794
  %v799 = vadd.f32 %v791, %v794
  %v800 = vmax.f32 %v796, 0.0
  %v801 = vmax.f32 %v797, 0.0
  %v802 = vmax.f32 %v798, 0.0
  %v803 = vmax.f32 %v799, 0.0
  %804 = vst.msk [vmem:[%s11] sm:$0xff] %vm517, %v800
  %805 = vst.msk [vmem:[%s11 + $0x8] sm:$0xff] %vm517, %v801
  %806 = vst.msk [vmem:[%s11 + $0x10] sm:$0xff] %vm517, %v802
  %807 = vst.msk [vmem:[%s11 + $0x18] sm:$0xff] %vm517, %v803
  // Predicated region
  $region42: #{dgcnn_seg_feature_fwd.20} parent=0 // pred_check
    _
  $region43: #{dgcnn_seg_feature_fwd.20} parent=0 // pred_check_branch
    %809 = sbr.rel (0) target = $region45
  $region44: #{dgcnn_seg_feature_fwd.20} parent=0 // pred_region
    _
  $region45: #{dgcnn_seg_feature_fwd.20} parent=0 // pred_fallthru
    _
  // Predicated region
  $region46: #{dgcnn_seg_feature_fwd.20} parent=0 // pred_check
    _
  $region47: #{dgcnn_seg_feature_fwd.20} parent=0 // pred_check_branch
    %811 = sbr.rel (0) target = $region49
  $region48: #{dgcnn_seg_feature_fwd.20} parent=0 // pred_region
    _
  $region49: #{dgcnn_seg_feature_fwd.20} parent=0 // pred_fallthru
    _
  // Predicated region
  $region50: #{dgcnn_seg_feature_fwd.20} parent=0 // pred_check
    _
  $region51: #{dgcnn_seg_feature_fwd.20} parent=0 // pred_check_branch
    %813 = sbr.rel (0) target = $region53
  $region52: #{dgcnn_seg_feature_fwd.20} parent=0 // pred_region
    _
  $region53: #{dgcnn_seg_feature_fwd.20} parent=0 // pred_fallthru
    _
  // Predicated region
  $region54: #{dgcnn_seg_feature_fwd.20} parent=0 // pred_check
    _
  $region55: #{dgcnn_seg_feature_fwd.20} parent=0 // pred_check_branch
    %815 = sbr.rel (0) target = $region57
  $region56: #{dgcnn_seg_feature_fwd.20} parent=0 // pred_region
    _
  $region57: #{dgcnn_seg_feature_fwd.20} parent=0 // pred_fallthru
    _

// kernel: dgcnn_seg_feature_fwd.23
$region0: #{dgcnn_seg_feature_fwd.23}
  #allocation0 [shape = 'u32[]', space=smem, size = 0x4, offset = 0x4, fixed_abs, tag = 'smem constant byte address 0x4 - core index']
  #allocation1 [shape = 'u32[72,128]{1,0:T(1,128)}', space=vmem, size = 0x9000, scoped, tag = 'internal scratch']
  %s0 = inlined_call_operand.vmem [shape: bf16[32,64], index: 0, kind: input, shape index: {}]
  %s1 = inlined_call_operand.vmem [shape: bf16[32,4,64], index: 1, kind: input, shape index: {}]
  %s2 = inlined_call_operand.vmem [shape: f32[1,64], index: 2, kind: input, shape index: {}]
  %s3 = inlined_call_operand.vmem [shape: f32[1,64], index: 3, kind: input, shape index: {}]
  %s4 = inlined_call_operand.vmem [shape: bf16[128,64], index: 4, kind: input, shape index: {}]
  %s5 = inlined_call_operand.vmem [shape: f32[1,64], index: 5, kind: input, shape index: {}]
  %s6 = inlined_call_operand.vmem [shape: f32[1,64], index: 6, kind: input, shape index: {}]
  %s7 = inlined_call_operand.vmem [shape: f32[32,128], index: 7, kind: output, shape index: {0}]
  %s8 = inlined_call_operand.vmem [shape: f32[32,64], index: 8, kind: output, shape index: {1}]
  %9 = xla_tuple %s7, %s8
  %s10 = sld [smem:[#allocation0]]
  $region46: #{dgcnn_seg_feature_fwd.23} parent=0
    _
  %s12 = ssub.s32 1, %s10
  %s13 = scalar_select 0, %s12, %s10
  // Predicated region
  $region2: #{dgcnn_seg_feature_fwd.23} parent=0 // pred_check
    _
  $region3: #{dgcnn_seg_feature_fwd.23} parent=0 // pred_check_branch
    %15 = sbr.rel (0) target = $region5
  $region4: #{dgcnn_seg_feature_fwd.23} parent=0 // pred_region
    _
  $region5: #{dgcnn_seg_feature_fwd.23} parent=0 // pred_fallthru
    _
  // Predicated region
  $region6: #{dgcnn_seg_feature_fwd.23} parent=0 // pred_check
    _
  $region7: #{dgcnn_seg_feature_fwd.23} parent=0 // pred_check_branch
    %17 = sbr.rel (0) target = $region9
  $region8: #{dgcnn_seg_feature_fwd.23} parent=0 // pred_region
    _
  $region9: #{dgcnn_seg_feature_fwd.23} parent=0 // pred_fallthru
    _
  // Predicated region
  $region10: #{dgcnn_seg_feature_fwd.23} parent=0 // pred_check
    _
  $region11: #{dgcnn_seg_feature_fwd.23} parent=0 // pred_check_branch
    %19 = sbr.rel (0) target = $region13
  $region12: #{dgcnn_seg_feature_fwd.23} parent=0 // pred_region
    _
  $region13: #{dgcnn_seg_feature_fwd.23} parent=0 // pred_fallthru
    _
  // Predicated region
  $region14: #{dgcnn_seg_feature_fwd.23} parent=0 // pred_check
    _
  $region15: #{dgcnn_seg_feature_fwd.23} parent=0 // pred_check_branch
    %21 = sbr.rel (0) target = $region17
  $region16: #{dgcnn_seg_feature_fwd.23} parent=0 // pred_region
    _
  $region17: #{dgcnn_seg_feature_fwd.23} parent=0 // pred_fallthru
    _
  // Predicated region
  $region18: #{dgcnn_seg_feature_fwd.23} parent=0 // pred_check
    _
  $region19: #{dgcnn_seg_feature_fwd.23} parent=0 // pred_check_branch
    %23 = sbr.rel (0) target = $region21
  $region20: #{dgcnn_seg_feature_fwd.23} parent=0 // pred_region
    _
  $region21: #{dgcnn_seg_feature_fwd.23} parent=0 // pred_fallthru
    _
  // Predicated region
  $region22: #{dgcnn_seg_feature_fwd.23} parent=0 // pred_check
    _
  $region23: #{dgcnn_seg_feature_fwd.23} parent=0 // pred_check_branch
    %25 = sbr.rel (0) target = $region25
  $region24: #{dgcnn_seg_feature_fwd.23} parent=0 // pred_region
    _
  $region25: #{dgcnn_seg_feature_fwd.23} parent=0 // pred_fallthru
    _
  // Predicated region
  $region26: #{dgcnn_seg_feature_fwd.23} parent=0 // pred_check
    _
  $region27: #{dgcnn_seg_feature_fwd.23} parent=0 // pred_check_branch
    %27 = sbr.rel (0) target = $region29
  $region28: #{dgcnn_seg_feature_fwd.23} parent=0 // pred_region
    _
  $region29: #{dgcnn_seg_feature_fwd.23} parent=0 // pred_fallthru
    _
  %v28 = vld [vmem:[%s0] sm:$0xf]
  %v29 = vld [vmem:[%s0 + $0x4] sm:$0xf]
  %v30 = vld [vmem:[%s0 + $0x8] sm:$0xf]
  %v31 = vld [vmem:[%s0 + $0xc] sm:$0xf]
  %v32 = vunpack.c.l.bf16 %v28
  %v33 = vunpack.c.l.bf16 %v29
  %v34 = vunpack.c.l.bf16 %v30
  %v35 = vunpack.c.l.bf16 %v31
  %v36 = vld [vmem:[%s1] sm:$0x3]
  %v37 = vld [vmem:[%s1 + $0x2] sm:$0x3]
  %v38 = vld [vmem:[%s1 + $0x4] sm:$0x3]
  %v39 = vld [vmem:[%s1 + $0x6] sm:$0x3]
  %v40 = vld [vmem:[%s1 + $0x8] sm:$0x3]
  %v41 = vld [vmem:[%s1 + $0xa] sm:$0x3]
  %v42 = vld [vmem:[%s1 + $0xc] sm:$0x3]
  %v43 = vld [vmem:[%s1 + $0xe] sm:$0x3]
  %v44 = vld [vmem:[%s1 + $0x10] sm:$0x3]
  %v45 = vld [vmem:[%s1 + $0x12] sm:$0x3]
  %v46 = vld [vmem:[%s1 + $0x14] sm:$0x3]
  %v47 = vld [vmem:[%s1 + $0x16] sm:$0x3]
  %v48 = vld [vmem:[%s1 + $0x18] sm:$0x3]
  %v49 = vld [vmem:[%s1 + $0x1a] sm:$0x3]
  %v50 = vld [vmem:[%s1 + $0x1c] sm:$0x3]
  %v51 = vld [vmem:[%s1 + $0x1e] sm:$0x3]
  %v52 = vld [vmem:[%s1 + $0x20] sm:$0x3]
  %v53 = vld [vmem:[%s1 + $0x22] sm:$0x3]
  %v54 = vld [vmem:[%s1 + $0x24] sm:$0x3]
  %v55 = vld [vmem:[%s1 + $0x26] sm:$0x3]
  %v56 = vld [vmem:[%s1 + $0x28] sm:$0x3]
  %v57 = vld [vmem:[%s1 + $0x2a] sm:$0x3]
  %v58 = vld [vmem:[%s1 + $0x2c] sm:$0x3]
  %v59 = vld [vmem:[%s1 + $0x2e] sm:$0x3]
  %v60 = vld [vmem:[%s1 + $0x30] sm:$0x3]
  %v61 = vld [vmem:[%s1 + $0x32] sm:$0x3]
  %v62 = vld [vmem:[%s1 + $0x34] sm:$0x3]
  %v63 = vld [vmem:[%s1 + $0x36] sm:$0x3]
  %v64 = vld [vmem:[%s1 + $0x38] sm:$0x3]
  %v65 = vld [vmem:[%s1 + $0x3a] sm:$0x3]
  %v66 = vld [vmem:[%s1 + $0x3c] sm:$0x3]
  %v67 = vld [vmem:[%s1 + $0x3e] sm:$0x3]
  %v68 = vunpack.c.l.bf16 %v36
  %v69 = vunpack.c.l.bf16 %v37
  %v70 = vunpack.c.l.bf16 %v38
  %v71 = vunpack.c.l.bf16 %v39
  %v72 = vunpack.c.l.bf16 %v40
  %v73 = vunpack.c.l.bf16 %v41
  %v74 = vunpack.c.l.bf16 %v42
  %v75 = vunpack.c.l.bf16 %v43
  %v76 = vunpack.c.l.bf16 %v44
  %v77 = vunpack.c.l.bf16 %v45
  %v78 = vunpack.c.l.bf16 %v46
  %v79 = vunpack.c.l.bf16 %v47
  %v80 = vunpack.c.l.bf16 %v48
  %v81 = vunpack.c.l.bf16 %v49
  %v82 = vunpack.c.l.bf16 %v50
  %v83 = vunpack.c.l.bf16 %v51
  %v84 = vunpack.c.l.bf16 %v52
  %v85 = vunpack.c.l.bf16 %v53
  %v86 = vunpack.c.l.bf16 %v54
  %v87 = vunpack.c.l.bf16 %v55
  %v88 = vunpack.c.l.bf16 %v56
  %v89 = vunpack.c.l.bf16 %v57
  %v90 = vunpack.c.l.bf16 %v58
  %v91 = vunpack.c.l.bf16 %v59
  %v92 = vunpack.c.l.bf16 %v60
  %v93 = vunpack.c.l.bf16 %v61
  %v94 = vunpack.c.l.bf16 %v62
  %v95 = vunpack.c.l.bf16 %v63
  %v96 = vunpack.c.l.bf16 %v64
  %v97 = vunpack.c.l.bf16 %v65
  %v98 = vunpack.c.l.bf16 %v66
  %v99 = vunpack.c.l.bf16 %v67
  %v100 = vld [vmem:[%s2] sm:$0x1]
  %v101 = vld [vmem:[%s3] sm:$0x1]
  %v134 = vperm.slane %v68, 0
  %v135 = vperm.slane %v69, 0
  %v136 = vperm.slane %v70, 0
  %v137 = vperm.slane %v71, 0
  %v138 = vperm.slane %v72, 0
  %v139 = vperm.slane %v73, 0
  %v140 = vperm.slane %v74, 0
  %v141 = vperm.slane %v75, 0
  %v142 = vperm.slane %v76, 0
  %v143 = vperm.slane %v77, 0
  %v144 = vperm.slane %v78, 0
  %v145 = vperm.slane %v79, 0
  %v146 = vperm.slane %v80, 0
  %v147 = vperm.slane %v81, 0
  %v148 = vperm.slane %v82, 0
  %v149 = vperm.slane %v83, 0
  %v150 = vperm.slane %v84, 0
  %v151 = vperm.slane %v85, 0
  %v152 = vperm.slane %v86, 0
  %v153 = vperm.slane %v87, 0
  %v154 = vperm.slane %v88, 0
  %v155 = vperm.slane %v89, 0
  %v156 = vperm.slane %v90, 0
  %v157 = vperm.slane %v91, 0
  %v158 = vperm.slane %v92, 0
  %v159 = vperm.slane %v93, 0
  %v160 = vperm.slane %v94, 0
  %v161 = vperm.slane %v95, 0
  %v162 = vperm.slane %v96, 0
  %v163 = vperm.slane %v97, 0
  %v164 = vperm.slane %v98, 0
  %v165 = vperm.slane %v99, 0
  %vm166 = vcmask 1041409
  %v167 = vsel %vm166, %v135, %v134
  %vm168 = vcmask 1042434
  %v169 = vsel %vm168, %v136, %v167
  %vm170 = vcmask 1043459
  %v171 = vsel %vm170, %v137, %v169
  %vm172 = vcmask 1044484
  %v173 = vsel %vm172, %v138, %v171
  %vm174 = vcmask 1045509
  %v175 = vsel %vm174, %v139, %v173
  %vm176 = vcmask 1046534
  %v177 = vsel %vm176, %v140, %v175
  %vm178 = vcmask 1047559
  %v179 = vsel %vm178, %v141, %v177
  %v180 = vsel %vm166, %v143, %v142
  %v181 = vsel %vm168, %v144, %v180
  %v182 = vsel %vm170, %v145, %v181
  %v183 = vsel %vm172, %v146, %v182
  %v184 = vsel %vm174, %v147, %v183
  %v185 = vsel %vm176, %v148, %v184
  %v186 = vsel %vm178, %v149, %v185
  %v187 = vsel %vm166, %v151, %v150
  %v188 = vsel %vm168, %v152, %v187
  %v189 = vsel %vm170, %v153, %v188
  %v190 = vsel %vm172, %v154, %v189
  %v191 = vsel %vm174, %v155, %v190
  %v192 = vsel %vm176, %v156, %v191
  %v193 = vsel %vm178, %v157, %v192
  %v194 = vsel %vm166, %v159, %v158
  %v195 = vsel %vm168, %v160, %v194
  %v196 = vsel %vm170, %v161, %v195
  %v197 = vsel %vm172, %v162, %v196
  %v198 = vsel %vm174, %v163, %v197
  %v199 = vsel %vm176, %v164, %v198
  %v200 = vsel %vm178, %v165, %v199
  %v205 = vadd.f32 %v32, %v179
  %v206 = vadd.f32 %v33, %v186
  %v207 = vadd.f32 %v34, %v193
  %v208 = vadd.f32 %v35, %v200
  %v210 = vperm.slane %v100, 0
  %v212 = vmul.f32 %v205, %v210
  %v213 = vmul.f32 %v206, %v210
  %v214 = vmul.f32 %v207, %v210
  %v215 = vmul.f32 %v208, %v210
  %v217 = vperm.slane %v101, 0
  %v219 = vadd.f32 %v212, %v217
  %v220 = vadd.f32 %v213, %v217
  %v221 = vadd.f32 %v214, %v217
  %v222 = vadd.f32 %v215, %v217
  %v223 = vmax.f32 %v219, 0.0
  %v224 = vmax.f32 %v220, 0.0
  %v225 = vmax.f32 %v221, 0.0
  %v226 = vmax.f32 %v222, 0.0
  %v227 = vperm.slane %v68, 1
  %v228 = vperm.slane %v69, 1
  %v229 = vperm.slane %v70, 1
  %v230 = vperm.slane %v71, 1
  %v231 = vperm.slane %v72, 1
  %v232 = vperm.slane %v73, 1
  %v233 = vperm.slane %v74, 1
  %v234 = vperm.slane %v75, 1
  %v235 = vperm.slane %v76, 1
  %v236 = vperm.slane %v77, 1
  %v237 = vperm.slane %v78, 1
  %v238 = vperm.slane %v79, 1
  %v239 = vperm.slane %v80, 1
  %v240 = vperm.slane %v81, 1
  %v241 = vperm.slane %v82, 1
  %v242 = vperm.slane %v83, 1
  %v243 = vperm.slane %v84, 1
  %v244 = vperm.slane %v85, 1
  %v245 = vperm.slane %v86, 1
  %v246 = vperm.slane %v87, 1
  %v247 = vperm.slane %v88, 1
  %v248 = vperm.slane %v89, 1
  %v249 = vperm.slane %v90, 1
  %v250 = vperm.slane %v91, 1
  %v251 = vperm.slane %v92, 1
  %v252 = vperm.slane %v93, 1
  %v253 = vperm.slane %v94, 1
  %v254 = vperm.slane %v95, 1
  %v255 = vperm.slane %v96, 1
  %v256 = vperm.slane %v97, 1
  %v257 = vperm.slane %v98, 1
  %v258 = vperm.slane %v99, 1
  %v259 = vsel %vm166, %v228, %v227
  %v260 = vsel %vm168, %v229, %v259
  %v261 = vsel %vm170, %v230, %v260
  %v262 = vsel %vm172, %v231, %v261
  %v263 = vsel %vm174, %v232, %v262
  %v264 = vsel %vm176, %v233, %v263
  %v265 = vsel %vm178, %v234, %v264
  %v266 = vsel %vm166, %v236, %v235
  %v267 = vsel %vm168, %v237, %v266
  %v268 = vsel %vm170, %v238, %v267
  %v269 = vsel %vm172, %v239, %v268
  %v270 = vsel %vm174, %v240, %v269
  %v271 = vsel %vm176, %v241, %v270
  %v272 = vsel %vm178, %v242, %v271
  %v273 = vsel %vm166, %v244, %v243
  %v274 = vsel %vm168, %v245, %v273
  %v275 = vsel %vm170, %v246, %v274
  %v276 = vsel %vm172, %v247, %v275
  %v277 = vsel %vm174, %v248, %v276
  %v278 = vsel %vm176, %v249, %v277
  %v279 = vsel %vm178, %v250, %v278
  %v280 = vsel %vm166, %v252, %v251
  %v281 = vsel %vm168, %v253, %v280
  %v282 = vsel %vm170, %v254, %v281
  %v283 = vsel %vm172, %v255, %v282
  %v284 = vsel %vm174, %v256, %v283
  %v285 = vsel %vm176, %v257, %v284
  %v286 = vsel %vm178, %v258, %v285
  %v291 = vadd.f32 %v32, %v265
  %v292 = vadd.f32 %v33, %v272
  %v293 = vadd.f32 %v34, %v279
  %v294 = vadd.f32 %v35, %v286
  %v295 = vmul.f32 %v291, %v210
  %v296 = vmul.f32 %v292, %v210
  %v297 = vmul.f32 %v293, %v210
  %v298 = vmul.f32 %v294, %v210
  %v299 = vadd.f32 %v295, %v217
  %v300 = vadd.f32 %v296, %v217
  %v301 = vadd.f32 %v297, %v217
  %v302 = vadd.f32 %v298, %v217
  %v303 = vmax.f32 %v299, 0.0
  %v304 = vmax.f32 %v300, 0.0
  %v305 = vmax.f32 %v301, 0.0
  %v306 = vmax.f32 %v302, 0.0
  %v307 = vmax.f32 %v223, %v303
  %v308 = vmax.f32 %v224, %v304
  %v309 = vmax.f32 %v225, %v305
  %v310 = vmax.f32 %v226, %v306
  %v311 = vadd.f32 %v223, %v303
  %v312 = vadd.f32 %v224, %v304
  %v313 = vadd.f32 %v225, %v305
  %v314 = vadd.f32 %v226, %v306
  %v315 = vperm.slane %v68, 2
  %v316 = vperm.slane %v69, 2
  %v317 = vperm.slane %v70, 2
  %v318 = vperm.slane %v71, 2
  %v319 = vperm.slane %v72, 2
  %v320 = vperm.slane %v73, 2
  %v321 = vperm.slane %v74, 2
  %v322 = vperm.slane %v75, 2
  %v323 = vperm.slane %v76, 2
  %v324 = vperm.slane %v77, 2
  %v325 = vperm.slane %v78, 2
  %v326 = vperm.slane %v79, 2
  %v327 = vperm.slane %v80, 2
  %v328 = vperm.slane %v81, 2
  %v329 = vperm.slane %v82, 2
  %v330 = vperm.slane %v83, 2
  %v331 = vperm.slane %v84, 2
  %v332 = vperm.slane %v85, 2
  %v333 = vperm.slane %v86, 2
  %v334 = vperm.slane %v87, 2
  %v335 = vperm.slane %v88, 2
  %v336 = vperm.slane %v89, 2
  %v337 = vperm.slane %v90, 2
  %v338 = vperm.slane %v91, 2
  %v339 = vperm.slane %v92, 2
  %v340 = vperm.slane %v93, 2
  %v341 = vperm.slane %v94, 2
  %v342 = vperm.slane %v95, 2
  %v343 = vperm.slane %v96, 2
  %v344 = vperm.slane %v97, 2
  %v345 = vperm.slane %v98, 2
  %v346 = vperm.slane %v99, 2
  %v347 = vsel %vm166, %v316, %v315
  %v348 = vsel %vm168, %v317, %v347
  %v349 = vsel %vm170, %v318, %v348
  %v350 = vsel %vm172, %v319, %v349
  %v351 = vsel %vm174, %v320, %v350
  %v352 = vsel %vm176, %v321, %v351
  %v353 = vsel %vm178, %v322, %v352
  %v354 = vsel %vm166, %v324, %v323
  %v355 = vsel %vm168, %v325, %v354
  %v356 = vsel %vm170, %v326, %v355
  %v357 = vsel %vm172, %v327, %v356
  %v358 = vsel %vm174, %v328, %v357
  %v359 = vsel %vm176, %v329, %v358
  %v360 = vsel %vm178, %v330, %v359
  %v361 = vsel %vm166, %v332, %v331
  %v362 = vsel %vm168, %v333, %v361
  %v363 = vsel %vm170, %v334, %v362
  %v364 = vsel %vm172, %v335, %v363
  %v365 = vsel %vm174, %v336, %v364
  %v366 = vsel %vm176, %v337, %v365
  %v367 = vsel %vm178, %v338, %v366
  %v368 = vsel %vm166, %v340, %v339
  %v369 = vsel %vm168, %v341, %v368
  %v370 = vsel %vm170, %v342, %v369
  %v371 = vsel %vm172, %v343, %v370
  %v372 = vsel %vm174, %v344, %v371
  %v373 = vsel %vm176, %v345, %v372
  %v374 = vsel %vm178, %v346, %v373
  %v379 = vadd.f32 %v32, %v353
  %v380 = vadd.f32 %v33, %v360
  %v381 = vadd.f32 %v34, %v367
  %v382 = vadd.f32 %v35, %v374
  %v383 = vmul.f32 %v379, %v210
  %v384 = vmul.f32 %v380, %v210
  %v385 = vmul.f32 %v381, %v210
  %v386 = vmul.f32 %v382, %v210
  %v387 = vadd.f32 %v383, %v217
  %v388 = vadd.f32 %v384, %v217
  %v389 = vadd.f32 %v385, %v217
  %v390 = vadd.f32 %v386, %v217
  %v391 = vmax.f32 %v387, 0.0
  %v392 = vmax.f32 %v388, 0.0
  %v393 = vmax.f32 %v389, 0.0
  %v394 = vmax.f32 %v390, 0.0
  %v395 = vmax.f32 %v307, %v391
  %v396 = vmax.f32 %v308, %v392
  %v397 = vmax.f32 %v309, %v393
  %v398 = vmax.f32 %v310, %v394
  %v399 = vadd.f32 %v311, %v391
  %v400 = vadd.f32 %v312, %v392
  %v401 = vadd.f32 %v313, %v393
  %v402 = vadd.f32 %v314, %v394
  %v403 = vperm.slane %v68, 3
  %v404 = vperm.slane %v69, 3
  %v405 = vperm.slane %v70, 3
  %v406 = vperm.slane %v71, 3
  %v407 = vperm.slane %v72, 3
  %v408 = vperm.slane %v73, 3
  %v409 = vperm.slane %v74, 3
  %v410 = vperm.slane %v75, 3
  %v411 = vperm.slane %v76, 3
  %v412 = vperm.slane %v77, 3
  %v413 = vperm.slane %v78, 3
  %v414 = vperm.slane %v79, 3
  %v415 = vperm.slane %v80, 3
  %v416 = vperm.slane %v81, 3
  %v417 = vperm.slane %v82, 3
  %v418 = vperm.slane %v83, 3
  %v419 = vperm.slane %v84, 3
  %v420 = vperm.slane %v85, 3
  %v421 = vperm.slane %v86, 3
  %v422 = vperm.slane %v87, 3
  %v423 = vperm.slane %v88, 3
  %v424 = vperm.slane %v89, 3
  %v425 = vperm.slane %v90, 3
  %v426 = vperm.slane %v91, 3
  %v427 = vperm.slane %v92, 3
  %v428 = vperm.slane %v93, 3
  %v429 = vperm.slane %v94, 3
  %v430 = vperm.slane %v95, 3
  %v431 = vperm.slane %v96, 3
  %v432 = vperm.slane %v97, 3
  %v433 = vperm.slane %v98, 3
  %v434 = vperm.slane %v99, 3
  %v435 = vsel %vm166, %v404, %v403
  %v436 = vsel %vm168, %v405, %v435
  %v437 = vsel %vm170, %v406, %v436
  %v438 = vsel %vm172, %v407, %v437
  %v439 = vsel %vm174, %v408, %v438
  %v440 = vsel %vm176, %v409, %v439
  %v441 = vsel %vm178, %v410, %v440
  %v442 = vsel %vm166, %v412, %v411
  %v443 = vsel %vm168, %v413, %v442
  %v444 = vsel %vm170, %v414, %v443
  %v445 = vsel %vm172, %v415, %v444
  %v446 = vsel %vm174, %v416, %v445
  %v447 = vsel %vm176, %v417, %v446
  %v448 = vsel %vm178, %v418, %v447
  %v449 = vsel %vm166, %v420, %v419
  %v450 = vsel %vm168, %v421, %v449
  %v451 = vsel %vm170, %v422, %v450
  %v452 = vsel %vm172, %v423, %v451
  %v453 = vsel %vm174, %v424, %v452
  %v454 = vsel %vm176, %v425, %v453
  %v455 = vsel %vm178, %v426, %v454
  %v456 = vsel %vm166, %v428, %v427
  %v457 = vsel %vm168, %v429, %v456
  %v458 = vsel %vm170, %v430, %v457
  %v459 = vsel %vm172, %v431, %v458
  %v460 = vsel %vm174, %v432, %v459
  %v461 = vsel %vm176, %v433, %v460
  %v462 = vsel %vm178, %v434, %v461
  %v467 = vadd.f32 %v32, %v441
  %v468 = vadd.f32 %v33, %v448
  %v469 = vadd.f32 %v34, %v455
  %v470 = vadd.f32 %v35, %v462
  %v471 = vmul.f32 %v467, %v210
  %v472 = vmul.f32 %v468, %v210
  %v473 = vmul.f32 %v469, %v210
  %v474 = vmul.f32 %v470, %v210
  %v475 = vadd.f32 %v471, %v217
  %v476 = vadd.f32 %v472, %v217
  %v477 = vadd.f32 %v473, %v217
  %v478 = vadd.f32 %v474, %v217
  %v479 = vmax.f32 %v475, 0.0
  %v480 = vmax.f32 %v476, 0.0
  %v481 = vmax.f32 %v477, 0.0
  %v482 = vmax.f32 %v478, 0.0
  %v483 = vmax.f32 %v395, %v479
  %v484 = vmax.f32 %v396, %v480
  %v485 = vmax.f32 %v397, %v481
  %v486 = vmax.f32 %v398, %v482
  %v487 = vadd.f32 %v399, %v479
  %v488 = vadd.f32 %v400, %v480
  %v489 = vadd.f32 %v401, %v481
  %v490 = vadd.f32 %v402, %v482
  %v491 = vmul.f32 %v487, 0.25
  %v492 = vmul.f32 %v488, 0.25
  %v493 = vmul.f32 %v489, 0.25
  %v494 = vmul.f32 %v490, 0.25
  %499 = vrot.lane.b32.xlu0 %v491, 64
  %v500 = vpop.permute.xlu0 %499
  %501 = vrot.lane.b32.xlu0 %v492, 64
  %v502 = vpop.permute.xlu0 %501
  %503 = vrot.lane.b32.xlu0 %v493, 64
  %v504 = vpop.permute.xlu0 %503
  %505 = vrot.lane.b32.xlu0 %v494, 64
  %v506 = vpop.permute.xlu0 %505
  %vm511 = vcmask 523264
  %v512 = vsel %vm511, %v483, %v500
  %v513 = vsel %vm511, %v484, %v502
  %v514 = vsel %vm511, %v485, %v504
  %v515 = vsel %vm511, %v486, %v506
  %516 = vst [vmem:[%s7] sm:$0xff] %v512
  %517 = vst [vmem:[%s7 + $0x8] sm:$0xff] %v513
  %518 = vst [vmem:[%s7 + $0x10] sm:$0xff] %v514
  %519 = vst [vmem:[%s7 + $0x18] sm:$0xff] %v515
  %v520 = vpack.c.bf16 %v513, %v512
  %v521 = vpack.c.bf16 %v515, %v514
  %v522 = vld [vmem:[%s4] sm:$0xf]
  %v523 = vld [vmem:[%s4 + $0x4] sm:$0xf]
  %v524 = vld [vmem:[%s4 + $0x8] sm:$0xf]
  %v525 = vld [vmem:[%s4 + $0xc] sm:$0xf]
  %v526 = vld [vmem:[%s4 + $0x10] sm:$0xf]
  %v527 = vld [vmem:[%s4 + $0x14] sm:$0xf]
  %v528 = vld [vmem:[%s4 + $0x18] sm:$0xf]
  %v529 = vld [vmem:[%s4 + $0x1c] sm:$0xf]
  %v530 = vld [vmem:[%s4 + $0x20] sm:$0xf]
  %v531 = vld [vmem:[%s4 + $0x24] sm:$0xf]
  %v532 = vld [vmem:[%s4 + $0x28] sm:$0xf]
  %v533 = vld [vmem:[%s4 + $0x2c] sm:$0xf]
  %v534 = vld [vmem:[%s4 + $0x30] sm:$0xf]
  %v535 = vld [vmem:[%s4 + $0x34] sm:$0xf]
  %v536 = vld [vmem:[%s4 + $0x38] sm:$0xf]
  %v537 = vld [vmem:[%s4 + $0x3c] sm:$0xf]
  %v554 = vunpack.c.l.b16 %v522
  %v555 = vunpack.c.l.b16 %v523
  %v556 = vunpack.c.l.b16 %v524
  %v557 = vunpack.c.l.b16 %v525
  %v558 = vunpack.c.l.b16 %v526
  %v559 = vunpack.c.l.b16 %v527
  %v560 = vunpack.c.l.b16 %v528
  %v561 = vunpack.c.l.b16 %v529
  %v562 = vunpack.c.l.b16 %v530
  %v563 = vunpack.c.l.b16 %v531
  %v564 = vunpack.c.l.b16 %v532
  %v565 = vunpack.c.l.b16 %v533
  %v566 = vunpack.c.l.b16 %v534
  %v567 = vunpack.c.l.b16 %v535
  %v568 = vunpack.c.l.b16 %v536
  %v569 = vunpack.c.l.b16 %v537
  %v570 = vpack.c.b16 %v555, %v554
  %v571 = vpack.c.b16 %v557, %v556
  %v572 = vpack.c.b16 %v559, %v558
  %v573 = vpack.c.b16 %v561, %v560
  %v574 = vpack.c.b16 %v563, %v562
  %v575 = vpack.c.b16 %v565, %v564
  %v576 = vpack.c.b16 %v567, %v566
  %v577 = vpack.c.b16 %v569, %v568
  %586 = vmatpush.bf16.msra.mxu0 %v577
  %587 = vmatpush.bf16.msra.mxu0 %v576
  %588 = vmatpush.bf16.msra.mxu0 %v575
  %589 = vmatpush.bf16.msra.mxu0 %v574
  %590 = vmatpush.bf16.msra.mxu0 %v573
  %591 = vmatpush.bf16.msra.mxu0 %v572
  %592 = vmatpush.bf16.msra.mxu0 %v571
  %593 = vmatpush.bf16.msra.mxu0 %v570
  %594 = vmatmul.bf16.gmra.mxu0 %v520
  %v595 = vpop.f32.mrf.mxu0
  %v596 = vadd.f32 0.0, %v595
  %v597 = vpop.f32.mrf.mxu0
  %v598 = vadd.f32 0.0, %v597
  %599 = vmatmul.bf16.gmra.mxu0 %v521
  %v600 = vpop.f32.mrf.mxu0
  %v601 = vadd.f32 0.0, %v600
  %v602 = vpop.f32.mrf.mxu0
  %v603 = vadd.f32 0.0, %v602
  %604 = vdwg.mxu0
  %v605 = vld [vmem:[%s5] sm:$0x1]
  %v607 = vperm.slane %v605, 0
  %v609 = vmul.f32 %v596, %v607
  %v610 = vmul.f32 %v598, %v607
  %v611 = vmul.f32 %v601, %v607
  %v612 = vmul.f32 %v603, %v607
  %v613 = vld [vmem:[%s6] sm:$0x1]
  %v615 = vperm.slane %v613, 0
  %v617 = vadd.f32 %v609, %v615
  %v618 = vadd.f32 %v610, %v615
  %v619 = vadd.f32 %v611, %v615
  %v620 = vadd.f32 %v612, %v615
  %v621 = vmax.f32 %v617, 0.0
  %v622 = vmax.f32 %v618, 0.0
  %v623 = vmax.f32 %v619, 0.0
  %v624 = vmax.f32 %v620, 0.0
  %625 = vst.msk [vmem:[%s8] sm:$0xff] %vm511, %v621
  %626 = vst.msk [vmem:[%s8 + $0x8] sm:$0xff] %vm511, %v622
  %627 = vst.msk [vmem:[%s8 + $0x10] sm:$0xff] %vm511, %v623
  %628 = vst.msk [vmem:[%s8 + $0x18] sm:$0xff] %vm511, %v624
  // Predicated region
  $region30: #{dgcnn_seg_feature_fwd.23} parent=0 // pred_check
    _
  $region31: #{dgcnn_seg_feature_fwd.23} parent=0 // pred_check_branch
    %630 = sbr.rel (0) target = $region33
  $region32: #{dgcnn_seg_feature_fwd.23} parent=0 // pred_region
    _
  $region33: #{dgcnn_seg_feature_fwd.23} parent=0 // pred_fallthru
    _
  // Predicated region
  $region34: #{dgcnn_seg_feature_fwd.23} parent=0 // pred_check
    _
  $region35: #{dgcnn_seg_feature_fwd.23} parent=0 // pred_check_branch
    %632 = sbr.rel (0) target = $region37
  $region36: #{dgcnn_seg_feature_fwd.23} parent=0 // pred_region
    _
  $region37: #{dgcnn_seg_feature_fwd.23} parent=0 // pred_fallthru
    _
  // Predicated region
  $region38: #{dgcnn_seg_feature_fwd.23} parent=0 // pred_check
    _
  $region39: #{dgcnn_seg_feature_fwd.23} parent=0 // pred_check_branch
    %634 = sbr.rel (0) target = $region41
  $region40: #{dgcnn_seg_feature_fwd.23} parent=0 // pred_region
    _
  $region41: #{dgcnn_seg_feature_fwd.23} parent=0 // pred_fallthru
    _
  // Predicated region
  $region42: #{dgcnn_seg_feature_fwd.23} parent=0 // pred_check
    _
  $region43: #{dgcnn_seg_feature_fwd.23} parent=0 // pred_check_branch
    %636 = sbr.rel (0) target = $region45
  $region44: #{dgcnn_seg_feature_fwd.23} parent=0 // pred_region
    _
  $region45: #{dgcnn_seg_feature_fwd.23} parent=0 // pred_fallthru
    _

// kernel: dgcnn_seg_feature_fwd.27
$region0: #{dgcnn_seg_feature_fwd.27}
  #allocation0 [shape = 'u32[]', space=smem, size = 0x4, offset = 0x4, fixed_abs, tag = 'smem constant byte address 0x4 - core index']
  #allocation1 [shape = 'u32[72,128]{1,0:T(1,128)}', space=vmem, size = 0x9000, scoped, tag = 'internal scratch']
  %s0 = inlined_call_operand.vmem [shape: f32[2,16,192], index: 0, kind: input, shape index: {}]
  %s1 = inlined_call_operand.vmem [shape: bf16[192,1024], index: 1, kind: input, shape index: {}]
  %s2 = inlined_call_operand.vmem [shape: f32[1,1024], index: 2, kind: input, shape index: {}]
  %s3 = inlined_call_operand.vmem [shape: f32[1,1024], index: 3, kind: input, shape index: {}]
  %s4 = inlined_call_operand.vmem [shape: f32[2,16,1024], index: 4, kind: output, shape index: {0}]
  %s5 = inlined_call_operand.vmem [shape: f32[2,1,1024], index: 5, kind: output, shape index: {1}]
  %6 = xla_tuple %s4, %s5
  %s7 = sld [smem:[#allocation0]]
  $region65: #{dgcnn_seg_feature_fwd.27} parent=0
    _
  %s9 = ssub.s32 1, %s7
  %s10 = scalar_select 0, %s9, %s7
  loop: start=0, step=1, limit=4
  $region2: #{dgcnn_seg_feature_fwd.27} parent=0 // loop_pre_header
    _
  $region3: #{dgcnn_seg_feature_fwd.27} parent=0 // loop_header
    %s12 = sphi 0, %s16
    %p13 = scmp.ge.s32.totalorder %s12, 4
    %s19 = sphi 0, %s31
    %s20 = sphi 0, %s27
    %s21 = sphi 0, %s19
    %s22 = sphi 0, %s20
    %s23 = sphi 0, %s21
    %s24 = sphi 0, %s22
    %s36 = sphi 0, %s38
    %s39 = sphi 0, %s36
    %s40 = sphi 0, %s39
    %s56 = sphi 0, %s40
    %s60 = sphi 0, %s60
    %s62 = sphi 0, %s60
    %s63 = sphi 0, %s62
    %s77 = sphi 0, %s63
    %s81 = sphi 0, %s81
    %s83 = sphi 0, %s81
    %s84 = sphi 0, %s83
    %s98 = sphi 0, %s84
    %s102 = sphi 0, %s102
    %s104 = sphi 0, %s102
    %s105 = sphi 0, %s104
    %s119 = sphi 0, %s105
    %s127 = sphi 0, %s129
    %s130 = sphi 0, %s127
    %s131 = sphi 0, %s130
    %s147 = sphi 0, %s131
    %s153 = sphi 0, %s155
    %s156 = sphi 0, %s153
    %s157 = sphi 0, %s156
    %s173 = sphi 0, %s157
  $region4: #{dgcnn_seg_feature_fwd.27} parent=0 // loop_header_branch
    %15 = sbr.rel (%p13) target = $region8
  $region5: #{dgcnn_seg_feature_fwd.27} parent=0 // loop_body
    %s17 = ssub.s32 %s12, 1
    %s18 = ssub.s32 %s12, 2
    %s25 = sadd.s32 1, %s20
    %p26 = scmp.ge.s32.totalorder %s25, 1
    %s27 = scalar_select %p26, 0, %s25
    %s28 = sadd.s32 1, %s19
    %s29 = scalar_select %p26, %s28, %s19
    %p30 = scmp.ge.s32.totalorder %s29, 2
    %s31 = scalar_select %p30, 0, %s29
    %s32 = ssub.s32 %s19, %s31
    %s33 = ssub.s32 %s20, %s27
    %s34 = sor.u32 %s32, %s33
    %p35 = scmp.eq.s32.totalorder %s34, 0
    %s37 = sadd.s32 %s36, 1
    %s38 = scalar_select %p35, %s36, %s37
    %p41 = pneg %p35
    %p42 = scmp.eq.s32.totalorder %s12, 1
    %p43 = por %p41, %p42
    %p44 = scmp.ne.s32.totalorder %s36, %s39
    %p45 = scmp.eq.s32.totalorder %s12, 0
    %p46 = por %p44, %p45
    %p47 = scmp.ne.s32.totalorder %s36, %s39
    %p48 = scmp.eq.s32.totalorder %s17, 1
    %p49 = por %p47, %p48
    %p50 = scmp.ne.s32.totalorder %s39, %s40
    %p51 = scmp.eq.s32.totalorder %s17, 0
    %p52 = por %p50, %p51
    %p53 = scmp.ne.s32.totalorder %s39, %s40
    %p54 = scmp.eq.s32.totalorder %s18, 1
    %p55 = por %p53, %p54
    %p57 = scmp.ne.s32.totalorder %s40, %s56
    %p58 = scmp.eq.s32.totalorder %s18, 0
    %p59 = por %p57, %p58
    %s61 = sadd.s32 %s60, 1
    %p64 = scmp.eq.s32.totalorder %s12, 1
    %p65 = scmp.ne.s32.totalorder %s60, %s62
    %p66 = scmp.eq.s32.totalorder %s12, 0
    %p67 = por %p65, %p66
    %p68 = scmp.ne.s32.totalorder %s60, %s62
    %p69 = scmp.eq.s32.totalorder %s17, 1
    %p70 = por %p68, %p69
    %p71 = scmp.ne.s32.totalorder %s62, %s63
    %p72 = scmp.eq.s32.totalorder %s17, 0
    %p73 = por %p71, %p72
    %p74 = scmp.ne.s32.totalorder %s62, %s63
    %p75 = scmp.eq.s32.totalorder %s18, 1
    %p76 = por %p74, %p75
    %p78 = scmp.ne.s32.totalorder %s63, %s77
    %p79 = scmp.eq.s32.totalorder %s18, 0
    %p80 = por %p78, %p79
    %s82 = sadd.s32 %s81, 1
    %p85 = scmp.eq.s32.totalorder %s12, 1
    %p86 = scmp.ne.s32.totalorder %s81, %s83
    %p87 = scmp.eq.s32.totalorder %s12, 0
    %p88 = por %p86, %p87
    %p89 = scmp.ne.s32.totalorder %s81, %s83
    %p90 = scmp.eq.s32.totalorder %s17, 1
    %p91 = por %p89, %p90
    %p92 = scmp.ne.s32.totalorder %s83, %s84
    %p93 = scmp.eq.s32.totalorder %s17, 0
    %p94 = por %p92, %p93
    %p95 = scmp.ne.s32.totalorder %s83, %s84
    %p96 = scmp.eq.s32.totalorder %s18, 1
    %p97 = por %p95, %p96
    %p99 = scmp.ne.s32.totalorder %s84, %s98
    %p100 = scmp.eq.s32.totalorder %s18, 0
    %p101 = por %p99, %p100
    %s103 = sadd.s32 %s102, 1
    %p106 = scmp.eq.s32.totalorder %s12, 1
    %p107 = scmp.ne.s32.totalorder %s102, %s104
    %p108 = scmp.eq.s32.totalorder %s12, 0
    %p109 = por %p107, %p108
    %p110 = scmp.ne.s32.totalorder %s102, %s104
    %p111 = scmp.eq.s32.totalorder %s17, 1
    %p112 = por %p110, %p111
    %p113 = scmp.ne.s32.totalorder %s104, %s105
    %p114 = scmp.eq.s32.totalorder %s17, 0
    %p115 = por %p113, %p114
    %p116 = scmp.ne.s32.totalorder %s104, %s105
    %p117 = scmp.eq.s32.totalorder %s18, 1
    %p118 = por %p116, %p117
    %p120 = scmp.ne.s32.totalorder %s105, %s119
    %p121 = scmp.eq.s32.totalorder %s18, 0
    %p122 = por %p120, %p121
    %s123 = ssub.s32 %s19, %s31
    %s124 = ssub.s32 %s20, %s27
    %s125 = sor.u32 %s123, %s124
    %p126 = scmp.eq.s32.totalorder %s125, 0
    %s128 = sadd.s32 %s127, 1
    %s129 = scalar_select %p126, %s127, %s128
    %p132 = pneg %p126
    %p133 = scmp.eq.s32.totalorder %s12, 1
    %p134 = por %p132, %p133
    %p135 = scmp.ne.s32.totalorder %s127, %s130
    %p136 = scmp.eq.s32.totalorder %s12, 0
    %p137 = por %p135, %p136
    %p138 = scmp.ne.s32.totalorder %s127, %s130
    %p139 = scmp.eq.s32.totalorder %s17, 1
    %p140 = por %p138, %p139
    %p141 = scmp.ne.s32.totalorder %s130, %s131
    %p142 = scmp.eq.s32.totalorder %s17, 0
    %p143 = por %p141, %p142
    %p144 = scmp.ne.s32.totalorder %s130, %s131
    %p145 = scmp.eq.s32.totalorder %s18, 1
    %p146 = por %p144, %p145
    %p148 = scmp.ne.s32.totalorder %s131, %s147
    %p149 = scmp.eq.s32.totalorder %s18, 0
    %p150 = por %p148, %p149
    %s151 = ssub.s32 %s19, %s31
    %p152 = scmp.eq.s32.totalorder %s151, 0
    %s154 = sadd.s32 %s153, 1
    %s155 = scalar_select %p152, %s153, %s154
    %p158 = pneg %p152
    %p159 = scmp.eq.s32.totalorder %s12, 1
    %p160 = por %p158, %p159
    %p161 = scmp.ne.s32.totalorder %s153, %s156
    %p162 = scmp.eq.s32.totalorder %s12, 0
    %p163 = por %p161, %p162
    %p164 = scmp.ne.s32.totalorder %s153, %s156
    %p165 = scmp.eq.s32.totalorder %s17, 1
    %p166 = por %p164, %p165
    %p167 = scmp.ne.s32.totalorder %s156, %s157
    %p168 = scmp.eq.s32.totalorder %s17, 0
    %p169 = por %p167, %p168
    %p170 = scmp.ne.s32.totalorder %s156, %s157
    %p171 = scmp.eq.s32.totalorder %s18, 1
    %p172 = por %p170, %p171
    %p174 = scmp.ne.s32.totalorder %s157, %s173
    %p175 = scmp.eq.s32.totalorder %s18, 0
    %p176 = por %p174, %p175
    %p177 = scmp.le.s32.totalorder 1, %s12
    %p178 = scmp.lt.s32.totalorder %s12, 3
    %p179 = pnand %p177, %p178
    %p180 = pneg %p179
    // Predicated region
    $region9: #{dgcnn_seg_feature_fwd.27} parent=5 // pred_check
      _
    $region10: #{dgcnn_seg_feature_fwd.27} parent=5 // pred_check_branch
      %182 = sbr.rel (%p179) target = $region12
    $region11: #{dgcnn_seg_feature_fwd.27} parent=5 // pred_region
      %s183 = ssub.s32 %s12, 1
      // Predicated region
      $region13: #{dgcnn_seg_feature_fwd.27} parent=11 // pred_check
        %p184 = pneg %p73
      $region14: #{dgcnn_seg_feature_fwd.27} parent=11 // pred_check_branch
        %186 = sbr.rel (%p184) target = $region16
      $region15: #{dgcnn_seg_feature_fwd.27} parent=11 // pred_region
        _
      $region16: #{dgcnn_seg_feature_fwd.27} parent=11 // pred_fallthru
        _
      // Predicated region
      $region17: #{dgcnn_seg_feature_fwd.27} parent=11 // pred_check
        %p187 = pneg %p94
      $region18: #{dgcnn_seg_feature_fwd.27} parent=11 // pred_check_branch
        %189 = sbr.rel (%p187) target = $region20
      $region19: #{dgcnn_seg_feature_fwd.27} parent=11 // pred_region
        _
      $region20: #{dgcnn_seg_feature_fwd.27} parent=11 // pred_fallthru
        _
      // Predicated region
      $region21: #{dgcnn_seg_feature_fwd.27} parent=11 // pred_check
        %p190 = pneg %p115
      $region22: #{dgcnn_seg_feature_fwd.27} parent=11 // pred_check_branch
        %192 = sbr.rel (%p190) target = $region24
      $region23: #{dgcnn_seg_feature_fwd.27} parent=11 // pred_region
        _
      $region24: #{dgcnn_seg_feature_fwd.27} parent=11 // pred_fallthru
        _
    $region12: #{dgcnn_seg_feature_fwd.27} parent=5 // pred_fallthru
      _
    %p193 = scmp.lt.s32.totalorder %s12, 2
    // Predicated region
    $region25: #{dgcnn_seg_feature_fwd.27} parent=5 // pred_check
      %p194 = pneg %p193
    $region26: #{dgcnn_seg_feature_fwd.27} parent=5 // pred_check_branch
      %196 = sbr.rel (%p194) target = $region28
    $region27: #{dgcnn_seg_feature_fwd.27} parent=5 // pred_region
      // Predicated region
      $region29: #{dgcnn_seg_feature_fwd.27} parent=27 // pred_check
        %p197 = pneg %p46
      $region30: #{dgcnn_seg_feature_fwd.27} parent=27 // pred_check_branch
        %199 = sbr.rel (%p197) target = $region32
      $region31: #{dgcnn_seg_feature_fwd.27} parent=27 // pred_region
        %s200 = smul.u32 2, %s20
        %p201 = scmp.lt.s32.totalorder %s19, 1
        %s202 = scalar_select %p201, %s19, 1
        %p203 = scmp.lt.s32.totalorder %s200, 1
        %s204 = scalar_select %p203, %s200, 1
        %s205 = smul.addr %s204, 2
        %s206 = smul.addr %s202, 4
        %s207 = sadd.s32 %s205, %s206
        %s208 = smul.addr %s207, 8
        %s209 = scalar_lea.vmem %s0, %s208
        %s210 = smul.u32 2, %s20
      $region32: #{dgcnn_seg_feature_fwd.27} parent=27 // pred_fallthru
        _
    $region28: #{dgcnn_seg_feature_fwd.27} parent=5 // pred_fallthru
      _
    %p211 = scmp.le.s32.totalorder 1, %s12
    %p212 = scmp.lt.s32.totalorder %s12, 3
    %p213 = pnand %p211, %p212
    %p214 = pneg %p213
    // Predicated region
    $region33: #{dgcnn_seg_feature_fwd.27} parent=5 // pred_check
      _
    $region34: #{dgcnn_seg_feature_fwd.27} parent=5 // pred_check_branch
      %216 = sbr.rel (%p213) target = $region36
    $region35: #{dgcnn_seg_feature_fwd.27} parent=5 // pred_region
      %s217 = ssub.s32 %s12, 1
      %s218 = smul.u32 2, %s22
      %p219 = scmp.lt.s32.totalorder %s21, 1
      %s220 = scalar_select %p219, %s21, 1
      %p221 = scmp.lt.s32.totalorder %s218, 1
      %s222 = scalar_select %p221, %s218, 1
      %s223 = smul.addr %s222, 2
      %s224 = smul.addr %s220, 4
      %s225 = sadd.s32 %s223, %s224
      %s226 = smul.addr %s225, 8
      %s227 = scalar_lea.vmem %s0, %s226
      %p228 = pneg %p52
      %p229 = pneg %p49
      %p230 = pneg %p73
      %p231 = pneg %p70
      %p232 = pneg %p94
      %p233 = pneg %p91
      %p234 = pneg %p115
      %p235 = pneg %p112
      %p236 = pneg %p143
      %p237 = pneg %p140
      %s238 = smul.u32 2, %s22
      %p239 = scmp.lt.s32.totalorder %s21, 1
      %s240 = scalar_select %p239, %s21, 1
      %p241 = scmp.lt.s32.totalorder %s238, 1
      %s242 = scalar_select %p241, %s238, 1
      %s243 = smul.addr %s242, 8
      %s244 = smul.addr %s240, 16
      %s245 = sadd.s32 %s243, %s244
      %s246 = smul.addr %s245, 8
      %s247 = scalar_lea.vmem %s4, %s246
      %p248 = pneg %p169
      %p249 = pneg %p166
      %p250 = scmp.lt.s32.totalorder %s21, 1
      %s251 = scalar_select %p250, %s21, 1
      %s252 = smul.addr %s251, 8
      %s253 = scalar_lea.vmem %s5, %s252
      %s254 = smul.u32 2, %s22
      %p255 = scmp.lt.s32.totalorder %s21, 1
      %s256 = scalar_select %p255, %s21, 1
      %p257 = scmp.lt.s32.totalorder %s254, 1
      %s258 = scalar_select %p257, %s254, 1
      %s259 = smul.addr %s258, 2
      %s260 = smul.addr %s256, 4
      %s261 = sadd.s32 %s259, %s260
      %s262 = smul.addr %s261, 8
      %s263 = scalar_lea.vmem %s0, %s262
      %s264 = smul.u32 2, %s22
      %s265 = smul.u32 2, %s22
      %p266 = scmp.lt.s32.totalorder %s21, 1
      %s267 = scalar_select %p266, %s21, 1
      %p268 = scmp.lt.s32.totalorder %s265, 1
      %s269 = scalar_select %p268, %s265, 1
      %s270 = smul.addr %s269, 8
      %s271 = smul.addr %s267, 16
      %s272 = sadd.s32 %s270, %s271
      %s273 = smul.addr %s272, 8
      %s274 = scalar_lea.vmem %s4, %s273
      %s275 = smul.u32 2, %s22
      %p276 = scmp.lt.s32.totalorder %s21, 1
      %s277 = scalar_select %p276, %s21, 1
      %s278 = smul.addr %s277, 8
      %s279 = scalar_lea.vmem %s5, %s278
      %v281 = vld [vmem:[%s263] sm:$0xff]
      %v282 = vld [vmem:[%s263 + $0x8] sm:$0xff]
      %v283 = vld [vmem:[%s263 + $0x10] sm:$0xff]
      %v284 = vld [vmem:[%s263 + $0x18] sm:$0xff]
      %v285 = vpack.c.bf16 %v283, %v281
      %v286 = vpack.c.bf16 %v284, %v282
      %v287 = vld [vmem:[%s1] sm:$0xff]
      %v288 = vld [vmem:[%s1 + $0x8] sm:$0xff]
      %v289 = vld [vmem:[%s1 + $0x10] sm:$0xff]
      %v290 = vld [vmem:[%s1 + $0x18] sm:$0xff]
      %v291 = vld [vmem:[%s1 + $0x20] sm:$0xff]
      %v292 = vld [vmem:[%s1 + $0x28] sm:$0xff]
      %v293 = vld [vmem:[%s1 + $0x30] sm:$0xff]
      %v294 = vld [vmem:[%s1 + $0x38] sm:$0xff]
      %v295 = vld [vmem:[%s1 + $0x40] sm:$0xff]
      %v296 = vld [vmem:[%s1 + $0x48] sm:$0xff]
      %v297 = vld [vmem:[%s1 + $0x50] sm:$0xff]
      %v298 = vld [vmem:[%s1 + $0x58] sm:$0xff]
      %v299 = vld [vmem:[%s1 + $0x60] sm:$0xff]
      %v300 = vld [vmem:[%s1 + $0x68] sm:$0xff]
      %v301 = vld [vmem:[%s1 + $0x70] sm:$0xff]
      %v302 = vld [vmem:[%s1 + $0x78] sm:$0xff]
      %v303 = vld [vmem:[%s1 + $0x80] sm:$0xff]
      %v304 = vld [vmem:[%s1 + $0x88] sm:$0xff]
      %v305 = vld [vmem:[%s1 + $0x90] sm:$0xff]
      %v306 = vld [vmem:[%s1 + $0x98] sm:$0xff]
      %v307 = vld [vmem:[%s1 + $0xa0] sm:$0xff]
      %v308 = vld [vmem:[%s1 + $0xa8] sm:$0xff]
      %v309 = vld [vmem:[%s1 + $0xb0] sm:$0xff]
      %v310 = vld [vmem:[%s1 + $0xb8] sm:$0xff]
      %v311 = vld [vmem:[%s1 + $0xc0] sm:$0xff]
      %v312 = vld [vmem:[%s1 + $0xc8] sm:$0xff]
      %v313 = vld [vmem:[%s1 + $0xd0] sm:$0xff]
      %v314 = vld [vmem:[%s1 + $0xd8] sm:$0xff]
      %v315 = vld [vmem:[%s1 + $0xe0] sm:$0xff]
      %v316 = vld [vmem:[%s1 + $0xe8] sm:$0xff]
      %v317 = vld [vmem:[%s1 + $0xf0] sm:$0xff]
      %v318 = vld [vmem:[%s1 + $0xf8] sm:$0xff]
      %v319 = vld [vmem:[%s1 + $0x100] sm:$0xff]
      %v320 = vld [vmem:[%s1 + $0x108] sm:$0xff]
      %v321 = vld [vmem:[%s1 + $0x110] sm:$0xff]
      %v322 = vld [vmem:[%s1 + $0x118] sm:$0xff]
      %v323 = vld [vmem:[%s1 + $0x120] sm:$0xff]
      %v324 = vld [vmem:[%s1 + $0x128] sm:$0xff]
      %v325 = vld [vmem:[%s1 + $0x130] sm:$0xff]
      %v326 = vld [vmem:[%s1 + $0x138] sm:$0xff]
      %v327 = vld [vmem:[%s1 + $0x140] sm:$0xff]
      %v328 = vld [vmem:[%s1 + $0x148] sm:$0xff]
      %v329 = vld [vmem:[%s1 + $0x150] sm:$0xff]
      %v330 = vld [vmem:[%s1 + $0x158] sm:$0xff]
      %v331 = vld [vmem:[%s1 + $0x160] sm:$0xff]
      %v332 = vld [vmem:[%s1 + $0x168] sm:$0xff]
      %v333 = vld [vmem:[%s1 + $0x170] sm:$0xff]
      %v334 = vld [vmem:[%s1 + $0x178] sm:$0xff]
      %v335 = vld [vmem:[%s1 + $0x180] sm:$0xff]
      %v336 = vld [vmem:[%s1 + $0x188] sm:$0xff]
      %v337 = vld [vmem:[%s1 + $0x190] sm:$0xff]
      %v338 = vld [vmem:[%s1 + $0x198] sm:$0xff]
      %v339 = vld [vmem:[%s1 + $0x1a0] sm:$0xff]
      %v340 = vld [vmem:[%s1 + $0x1a8] sm:$0xff]
      %v341 = vld [vmem:[%s1 + $0x1b0] sm:$0xff]
      %v342 = vld [vmem:[%s1 + $0x1b8] sm:$0xff]
      %v343 = vld [vmem:[%s1 + $0x1c0] sm:$0xff]
      %v344 = vld [vmem:[%s1 + $0x1c8] sm:$0xff]
      %v345 = vld [vmem:[%s1 + $0x1d0] sm:$0xff]
      %v346 = vld [vmem:[%s1 + $0x1d8] sm:$0xff]
      %v347 = vld [vmem:[%s1 + $0x1e0] sm:$0xff]
      %v348 = vld [vmem:[%s1 + $0x1e8] sm:$0xff]
      %v349 = vld [vmem:[%s1 + $0x1f0] sm:$0xff]
      %v350 = vld [vmem:[%s1 + $0x1f8] sm:$0xff]
      %v351 = vld [vmem:[%s1 + $0x200] sm:$0xff]
      %v352 = vld [vmem:[%s1 + $0x208] sm:$0xff]
      %v353 = vld [vmem:[%s1 + $0x210] sm:$0xff]
      %v354 = vld [vmem:[%s1 + $0x218] sm:$0xff]
      %v355 = vld [vmem:[%s1 + $0x220] sm:$0xff]
      %v356 = vld [vmem:[%s1 + $0x228] sm:$0xff]
      %v357 = vld [vmem:[%s1 + $0x230] sm:$0xff]
      %v358 = vld [vmem:[%s1 + $0x238] sm:$0xff]
      %v359 = vld [vmem:[%s1 + $0x240] sm:$0xff]
      %v360 = vld [vmem:[%s1 + $0x248] sm:$0xff]
      %v361 = vld [vmem:[%s1 + $0x250] sm:$0xff]
      %v362 = vld [vmem:[%s1 + $0x258] sm:$0xff]
      %v363 = vld [vmem:[%s1 + $0x260] sm:$0xff]
      %v364 = vld [vmem:[%s1 + $0x268] sm:$0xff]
      %v365 = vld [vmem:[%s1 + $0x270] sm:$0xff]
      %v366 = vld [vmem:[%s1 + $0x278] sm:$0xff]
      %v367 = vld [vmem:[%s1 + $0x280] sm:$0xff]
      %v368 = vld [vmem:[%s1 + $0x288] sm:$0xff]
      %v369 = vld [vmem:[%s1 + $0x290] sm:$0xff]
      %v370 = vld [vmem:[%s1 + $0x298] sm:$0xff]
      %v371 = vld [vmem:[%s1 + $0x2a0] sm:$0xff]
      %v372 = vld [vmem:[%s1 + $0x2a8] sm:$0xff]
      %v373 = vld [vmem:[%s1 + $0x2b0] sm:$0xff]
      %v374 = vld [vmem:[%s1 + $0x2b8] sm:$0xff]
      %v375 = vld [vmem:[%s1 + $0x2c0] sm:$0xff]
      %v376 = vld [vmem:[%s1 + $0x2c8] sm:$0xff]
      %v377 = vld [vmem:[%s1 + $0x2d0] sm:$0xff]
      %v378 = vld [vmem:[%s1 + $0x2d8] sm:$0xff]
      %v379 = vld [vmem:[%s1 + $0x2e0] sm:$0xff]
      %v380 = vld [vmem:[%s1 + $0x2e8] sm:$0xff]
      %v381 = vld [vmem:[%s1 + $0x2f0] sm:$0xff]
      %v382 = vld [vmem:[%s1 + $0x2f8] sm:$0xff]
      %v479 = vunpack.c.l.b16 %v287
      %v480 = vunpack.c.h.b16 %v287
      %v481 = vunpack.c.l.b16 %v288
      %v482 = vunpack.c.h.b16 %v288
      %v483 = vunpack.c.l.b16 %v289
      %v484 = vunpack.c.h.b16 %v289
      %v485 = vunpack.c.l.b16 %v290
      %v486 = vunpack.c.h.b16 %v290
      %v487 = vunpack.c.l.b16 %v291
      %v488 = vunpack.c.h.b16 %v291
      %v489 = vunpack.c.l.b16 %v292
      %v490 = vunpack.c.h.b16 %v292
      %v491 = vunpack.c.l.b16 %v293
      %v492 = vunpack.c.h.b16 %v293
      %v493 = vunpack.c.l.b16 %v294
      %v494 = vunpack.c.h.b16 %v294
      %v495 = vunpack.c.l.b16 %v295
      %v496 = vunpack.c.h.b16 %v295
      %v497 = vunpack.c.l.b16 %v296
      %v498 = vunpack.c.h.b16 %v296
      %v499 = vunpack.c.l.b16 %v297
      %v500 = vunpack.c.h.b16 %v297
      %v501 = vunpack.c.l.b16 %v298
      %v502 = vunpack.c.h.b16 %v298
      %v503 = vunpack.c.l.b16 %v299
      %v504 = vunpack.c.h.b16 %v299
      %v505 = vunpack.c.l.b16 %v300
      %v506 = vunpack.c.h.b16 %v300
      %v507 = vunpack.c.l.b16 %v301
      %v508 = vunpack.c.h.b16 %v301
      %v509 = vunpack.c.l.b16 %v302
      %v510 = vunpack.c.h.b16 %v302
      %v511 = vunpack.c.l.b16 %v303
      %v512 = vunpack.c.h.b16 %v303
      %v513 = vunpack.c.l.b16 %v304
      %v514 = vunpack.c.h.b16 %v304
      %v515 = vunpack.c.l.b16 %v305
      %v516 = vunpack.c.h.b16 %v305
      %v517 = vunpack.c.l.b16 %v306
      %v518 = vunpack.c.h.b16 %v306
      %v519 = vunpack.c.l.b16 %v307
      %v520 = vunpack.c.h.b16 %v307
      %v521 = vunpack.c.l.b16 %v308
      %v522 = vunpack.c.h.b16 %v308
      %v523 = vunpack.c.l.b16 %v309
      %v524 = vunpack.c.h.b16 %v309
      %v525 = vunpack.c.l.b16 %v310
      %v526 = vunpack.c.h.b16 %v310
      %v527 = vunpack.c.l.b16 %v311
      %v528 = vunpack.c.h.b16 %v311
      %v529 = vunpack.c.l.b16 %v312
      %v530 = vunpack.c.h.b16 %v312
      %v531 = vunpack.c.l.b16 %v313
      %v532 = vunpack.c.h.b16 %v313
      %v533 = vunpack.c.l.b16 %v314
      %v534 = vunpack.c.h.b16 %v314
      %v535 = vunpack.c.l.b16 %v315
      %v536 = vunpack.c.h.b16 %v315
      %v537 = vunpack.c.l.b16 %v316
      %v538 = vunpack.c.h.b16 %v316
      %v539 = vunpack.c.l.b16 %v317
      %v540 = vunpack.c.h.b16 %v317
      %v541 = vunpack.c.l.b16 %v318
      %v542 = vunpack.c.h.b16 %v318
      %v543 = vunpack.c.l.b16 %v319
      %v544 = vunpack.c.h.b16 %v319
      %v545 = vunpack.c.l.b16 %v320
      %v546 = vunpack.c.h.b16 %v320
      %v547 = vunpack.c.l.b16 %v321
      %v548 = vunpack.c.h.b16 %v321
      %v549 = vunpack.c.l.b16 %v322
      %v550 = vunpack.c.h.b16 %v322
      %v551 = vunpack.c.l.b16 %v323
      %v552 = vunpack.c.h.b16 %v323
      %v553 = vunpack.c.l.b16 %v324
      %v554 = vunpack.c.h.b16 %v324
      %v555 = vunpack.c.l.b16 %v325
      %v556 = vunpack.c.h.b16 %v325
      %v557 = vunpack.c.l.b16 %v326
      %v558 = vunpack.c.h.b16 %v326
      %v559 = vunpack.c.l.b16 %v327
      %v560 = vunpack.c.h.b16 %v327
      %v561 = vunpack.c.l.b16 %v328
      %v562 = vunpack.c.h.b16 %v328
      %v563 = vunpack.c.l.b16 %v329
      %v564 = vunpack.c.h.b16 %v329
      %v565 = vunpack.c.l.b16 %v330
      %v566 = vunpack.c.h.b16 %v330
      %v567 = vunpack.c.l.b16 %v331
      %v568 = vunpack.c.h.b16 %v331
      %v569 = vunpack.c.l.b16 %v332
      %v570 = vunpack.c.h.b16 %v332
      %v571 = vunpack.c.l.b16 %v333
      %v572 = vunpack.c.h.b16 %v333
      %v573 = vunpack.c.l.b16 %v334
      %v574 = vunpack.c.h.b16 %v334
      %v575 = vunpack.c.l.b16 %v335
      %v576 = vunpack.c.h.b16 %v335
      %v577 = vunpack.c.l.b16 %v336
      %v578 = vunpack.c.h.b16 %v336
      %v579 = vunpack.c.l.b16 %v337
      %v580 = vunpack.c.h.b16 %v337
      %v581 = vunpack.c.l.b16 %v338
      %v582 = vunpack.c.h.b16 %v338
      %v583 = vunpack.c.l.b16 %v339
      %v584 = vunpack.c.h.b16 %v339
      %v585 = vunpack.c.l.b16 %v340
      %v586 = vunpack.c.h.b16 %v340
      %v587 = vunpack.c.l.b16 %v341
      %v588 = vunpack.c.h.b16 %v341
      %v589 = vunpack.c.l.b16 %v342
      %v590 = vunpack.c.h.b16 %v342
      %v591 = vunpack.c.l.b16 %v343
      %v592 = vunpack.c.h.b16 %v343
      %v593 = vunpack.c.l.b16 %v344
      %v594 = vunpack.c.h.b16 %v344
      %v595 = vunpack.c.l.b16 %v345
      %v596 = vunpack.c.h.b16 %v345
      %v597 = vunpack.c.l.b16 %v346
      %v598 = vunpack.c.h.b16 %v346
      %v599 = vunpack.c.l.b16 %v347
      %v600 = vunpack.c.h.b16 %v347
      %v601 = vunpack.c.l.b16 %v348
      %v602 = vunpack.c.h.b16 %v348
      %v603 = vunpack.c.l.b16 %v349
      %v604 = vunpack.c.h.b16 %v349
      %v605 = vunpack.c.l.b16 %v350
      %v606 = vunpack.c.h.b16 %v350
      %v607 = vunpack.c.l.b16 %v351
      %v608 = vunpack.c.h.b16 %v351
      %v609 = vunpack.c.l.b16 %v352
      %v610 = vunpack.c.h.b16 %v352
      %v611 = vunpack.c.l.b16 %v353
      %v612 = vunpack.c.h.b16 %v353
      %v613 = vunpack.c.l.b16 %v354
      %v614 = vunpack.c.h.b16 %v354
      %v615 = vunpack.c.l.b16 %v355
      %v616 = vunpack.c.h.b16 %v355
      %v617 = vunpack.c.l.b16 %v356
      %v618 = vunpack.c.h.b16 %v356
      %v619 = vunpack.c.l.b16 %v357
      %v620 = vunpack.c.h.b16 %v357
      %v621 = vunpack.c.l.b16 %v358
      %v622 = vunpack.c.h.b16 %v358
      %v623 = vunpack.c.l.b16 %v359
      %v624 = vunpack.c.h.b16 %v359
      %v625 = vunpack.c.l.b16 %v360
      %v626 = vunpack.c.h.b16 %v360
      %v627 = vunpack.c.l.b16 %v361
      %v628 = vunpack.c.h.b16 %v361
      %v629 = vunpack.c.l.b16 %v362
      %v630 = vunpack.c.h.b16 %v362
      %v631 = vunpack.c.l.b16 %v363
      %v632 = vunpack.c.h.b16 %v363
      %v633 = vunpack.c.l.b16 %v364
      %v634 = vunpack.c.h.b16 %v364
      %v635 = vunpack.c.l.b16 %v365
      %v636 = vunpack.c.h.b16 %v365
      %v637 = vunpack.c.l.b16 %v366
      %v638 = vunpack.c.h.b16 %v366
      %v639 = vunpack.c.l.b16 %v367
      %v640 = vunpack.c.h.b16 %v367
      %v641 = vunpack.c.l.b16 %v368
      %v642 = vunpack.c.h.b16 %v368
      %v643 = vunpack.c.l.b16 %v369
      %v644 = vunpack.c.h.b16 %v369
      %v645 = vunpack.c.l.b16 %v370
      %v646 = vunpack.c.h.b16 %v370
      %v647 = vunpack.c.l.b16 %v371
      %v648 = vunpack.c.h.b16 %v371
      %v649 = vunpack.c.l.b16 %v372
      %v650 = vunpack.c.h.b16 %v372
      %v651 = vunpack.c.l.b16 %v373
      %v652 = vunpack.c.h.b16 %v373
      %v653 = vunpack.c.l.b16 %v374
      %v654 = vunpack.c.h.b16 %v374
      %v655 = vunpack.c.l.b16 %v375
      %v656 = vunpack.c.h.b16 %v375
      %v657 = vunpack.c.l.b16 %v376
      %v658 = vunpack.c.h.b16 %v376
      %v659 = vunpack.c.l.b16 %v377
      %v660 = vunpack.c.h.b16 %v377
      %v661 = vunpack.c.l.b16 %v378
      %v662 = vunpack.c.h.b16 %v378
      %v663 = vunpack.c.l.b16 %v379
      %v664 = vunpack.c.h.b16 %v379
      %v665 = vunpack.c.l.b16 %v380
      %v666 = vunpack.c.h.b16 %v380
      %v667 = vunpack.c.l.b16 %v381
      %v668 = vunpack.c.h.b16 %v381
      %v669 = vunpack.c.l.b16 %v382
      %v670 = vunpack.c.h.b16 %v382
      %v671 = vpack.c.b16 %v487, %v479
      %v672 = vpack.c.b16 %v488, %v480
      %v673 = vpack.c.b16 %v489, %v481
      %v674 = vpack.c.b16 %v490, %v482
      %v675 = vpack.c.b16 %v491, %v483
      %v676 = vpack.c.b16 %v492, %v484
      %v677 = vpack.c.b16 %v493, %v485
      %v678 = vpack.c.b16 %v494, %v486
      %v679 = vpack.c.b16 %v503, %v495
      %v680 = vpack.c.b16 %v504, %v496
      %v681 = vpack.c.b16 %v505, %v497
      %v682 = vpack.c.b16 %v506, %v498
      %v683 = vpack.c.b16 %v507, %v499
      %v684 = vpack.c.b16 %v508, %v500
      %v685 = vpack.c.b16 %v509, %v501
      %v686 = vpack.c.b16 %v510, %v502
      %v687 = vpack.c.b16 %v519, %v511
      %v688 = vpack.c.b16 %v520, %v512
      %v689 = vpack.c.b16 %v521, %v513
      %v690 = vpack.c.b16 %v522, %v514
      %v691 = vpack.c.b16 %v523, %v515
      %v692 = vpack.c.b16 %v524, %v516
      %v693 = vpack.c.b16 %v525, %v517
      %v694 = vpack.c.b16 %v526, %v518
      %v695 = vpack.c.b16 %v535, %v527
      %v696 = vpack.c.b16 %v536, %v528
      %v697 = vpack.c.b16 %v537, %v529
      %v698 = vpack.c.b16 %v538, %v530
      %v699 = vpack.c.b16 %v539, %v531
      %v700 = vpack.c.b16 %v540, %v532
      %v701 = vpack.c.b16 %v541, %v533
      %v702 = vpack.c.b16 %v542, %v534
      %v703 = vpack.c.b16 %v551, %v543
      %v704 = vpack.c.b16 %v552, %v544
      %v705 = vpack.c.b16 %v553, %v545
      %v706 = vpack.c.b16 %v554, %v546
      %v707 = vpack.c.b16 %v555, %v547
      %v708 = vpack.c.b16 %v556, %v548
      %v709 = vpack.c.b16 %v557, %v549
      %v710 = vpack.c.b16 %v558, %v550
      %v711 = vpack.c.b16 %v567, %v559
      %v712 = vpack.c.b16 %v568, %v560
      %v713 = vpack.c.b16 %v569, %v561
      %v714 = vpack.c.b16 %v570, %v562
      %v715 = vpack.c.b16 %v571, %v563
      %v716 = vpack.c.b16 %v572, %v564
      %v717 = vpack.c.b16 %v573, %v565
      %v718 = vpack.c.b16 %v574, %v566
      %v719 = vpack.c.b16 %v583, %v575
      %v720 = vpack.c.b16 %v584, %v576
      %v721 = vpack.c.b16 %v585, %v577
      %v722 = vpack.c.b16 %v586, %v578
      %v723 = vpack.c.b16 %v587, %v579
      %v724 = vpack.c.b16 %v588, %v580
      %v725 = vpack.c.b16 %v589, %v581
      %v726 = vpack.c.b16 %v590, %v582
      %v727 = vpack.c.b16 %v599, %v591
      %v728 = vpack.c.b16 %v600, %v592
      %v729 = vpack.c.b16 %v601, %v593
      %v730 = vpack.c.b16 %v602, %v594
      %v731 = vpack.c.b16 %v603, %v595
      %v732 = vpack.c.b16 %v604, %v596
      %v733 = vpack.c.b16 %v605, %v597
      %v734 = vpack.c.b16 %v606, %v598
      %v735 = vpack.c.b16 %v615, %v607
      %v736 = vpack.c.b16 %v616, %v608
      %v737 = vpack.c.b16 %v617, %v609
      %v738 = vpack.c.b16 %v618, %v610
      %v739 = vpack.c.b16 %v619, %v611
      %v740 = vpack.c.b16 %v620, %v612
      %v741 = vpack.c.b16 %v621, %v613
      %v742 = vpack.c.b16 %v622, %v614
      %v743 = vpack.c.b16 %v631, %v623
      %v744 = vpack.c.b16 %v632, %v624
      %v745 = vpack.c.b16 %v633, %v625
      %v746 = vpack.c.b16 %v634, %v626
      %v747 = vpack.c.b16 %v635, %v627
      %v748 = vpack.c.b16 %v636, %v628
      %v749 = vpack.c.b16 %v637, %v629
      %v750 = vpack.c.b16 %v638, %v630
      %v751 = vpack.c.b16 %v647, %v639
      %v752 = vpack.c.b16 %v648, %v640
      %v753 = vpack.c.b16 %v649, %v641
      %v754 = vpack.c.b16 %v650, %v642
      %v755 = vpack.c.b16 %v651, %v643
      %v756 = vpack.c.b16 %v652, %v644
      %v757 = vpack.c.b16 %v653, %v645
      %v758 = vpack.c.b16 %v654, %v646
      %v759 = vpack.c.b16 %v663, %v655
      %v760 = vpack.c.b16 %v664, %v656
      %v761 = vpack.c.b16 %v665, %v657
      %v762 = vpack.c.b16 %v666, %v658
      %v763 = vpack.c.b16 %v667, %v659
      %v764 = vpack.c.b16 %v668, %v660
      %v765 = vpack.c.b16 %v669, %v661
      %v766 = vpack.c.b16 %v670, %v662
      %vm863 = vcmask 523264
      %v865 = vsel %vm863, %v286, 0
      %867 = vmatpush.bf16.msra.mxu0 %v727
      %868 = vmatpush.bf16.msra.mxu0 %v719
      %869 = vmatpush.bf16.msra.mxu0 %v711
      %870 = vmatpush.bf16.msra.mxu0 %v703
      %871 = vmatpush.bf16.msra.mxu0 %v695
      %872 = vmatpush.bf16.msra.mxu0 %v687
      %873 = vmatpush.bf16.msra.mxu0 %v679
      %874 = vmatpush.bf16.msra.mxu0 %v671
      %875 = vmatmul.bf16.gmra.mxu0 %v285
      %v876 = vpop.f32.mrf.mxu0
      %v877 = vadd.f32 0.0, %v876
      %v878 = vpop.f32.mrf.mxu0
      %v879 = vadd.f32 0.0, %v878
      %880 = vdwg.mxu0
      %881 = vmatpush.bf16.msra.mxu0 0
      %882 = vmatpush.bf16.msra.mxu0 0
      %883 = vmatpush.bf16.msra.mxu0 0
      %884 = vmatpush.bf16.msra.mxu0 0
      %885 = vmatpush.bf16.msra.mxu0 %v759
      %886 = vmatpush.bf16.msra.mxu0 %v751
      %887 = vmatpush.bf16.msra.mxu0 %v743
      %888 = vmatpush.bf16.msra.mxu0 %v735
      %889 = vmatmul.bf16.gmra.mxu0 %v865
      %v890 = vpop.f32.mrf.mxu0
      %v891 = vadd.f32 %v877, %v890
      %v892 = vpop.f32.mrf.mxu0
      %v893 = vadd.f32 %v879, %v892
      %894 = vdwg.mxu0
      %895 = vmatpush.bf16.msra.mxu0 %v728
      %896 = vmatpush.bf16.msra.mxu0 %v720
      %897 = vmatpush.bf16.msra.mxu0 %v712
      %898 = vmatpush.bf16.msra.mxu0 %v704
      %899 = vmatpush.bf16.msra.mxu0 %v696
      %900 = vmatpush.bf16.msra.mxu0 %v688
      %901 = vmatpush.bf16.msra.mxu0 %v680
      %902 = vmatpush.bf16.msra.mxu0 %v672
      %903 = vmatmul.bf16.gmra.mxu0 %v285
      %v904 = vpop.f32.mrf.mxu0
      %v905 = vadd.f32 0.0, %v904
      %v906 = vpop.f32.mrf.mxu0
      %v907 = vadd.f32 0.0, %v906
      %908 = vdwg.mxu0
      %909 = vmatpush.bf16.msra.mxu0 0
      %910 = vmatpush.bf16.msra.mxu0 0
      %911 = vmatpush.bf16.msra.mxu0 0
      %912 = vmatpush.bf16.msra.mxu0 0
      %913 = vmatpush.bf16.msra.mxu0 %v760
      %914 = vmatpush.bf16.msra.mxu0 %v752
      %915 = vmatpush.bf16.msra.mxu0 %v744
      %916 = vmatpush.bf16.msra.mxu0 %v736
      %917 = vmatmul.bf16.gmra.mxu0 %v865
      %v918 = vpop.f32.mrf.mxu0
      %v919 = vadd.f32 %v905, %v918
      %v920 = vpop.f32.mrf.mxu0
      %v921 = vadd.f32 %v907, %v920
      %922 = vdwg.mxu0
      %923 = vmatpush.bf16.msra.mxu0 %v729
      %924 = vmatpush.bf16.msra.mxu0 %v721
      %925 = vmatpush.bf16.msra.mxu0 %v713
      %926 = vmatpush.bf16.msra.mxu0 %v705
      %927 = vmatpush.bf16.msra.mxu0 %v697
      %928 = vmatpush.bf16.msra.mxu0 %v689
      %929 = vmatpush.bf16.msra.mxu0 %v681
      %930 = vmatpush.bf16.msra.mxu0 %v673
      %931 = vmatmul.bf16.gmra.mxu0 %v285
      %v932 = vpop.f32.mrf.mxu0
      %v933 = vadd.f32 0.0, %v932
      %v934 = vpop.f32.mrf.mxu0
      %v935 = vadd.f32 0.0, %v934
      %936 = vdwg.mxu0
      %937 = vmatpush.bf16.msra.mxu0 0
      %938 = vmatpush.bf16.msra.mxu0 0
      %939 = vmatpush.bf16.msra.mxu0 0
      %940 = vmatpush.bf16.msra.mxu0 0
      %941 = vmatpush.bf16.msra.mxu0 %v761
      %942 = vmatpush.bf16.msra.mxu0 %v753
      %943 = vmatpush.bf16.msra.mxu0 %v745
      %944 = vmatpush.bf16.msra.mxu0 %v737
      %945 = vmatmul.bf16.gmra.mxu0 %v865
      %v946 = vpop.f32.mrf.mxu0
      %v947 = vadd.f32 %v933, %v946
      %v948 = vpop.f32.mrf.mxu0
      %v949 = vadd.f32 %v935, %v948
      %950 = vdwg.mxu0
      %951 = vmatpush.bf16.msra.mxu0 %v730
      %952 = vmatpush.bf16.msra.mxu0 %v722
      %953 = vmatpush.bf16.msra.mxu0 %v714
      %954 = vmatpush.bf16.msra.mxu0 %v706
      %955 = vmatpush.bf16.msra.mxu0 %v698
      %956 = vmatpush.bf16.msra.mxu0 %v690
      %957 = vmatpush.bf16.msra.mxu0 %v682
      %958 = vmatpush.bf16.msra.mxu0 %v674
      %959 = vmatmul.bf16.gmra.mxu0 %v285
      %v960 = vpop.f32.mrf.mxu0
      %v961 = vadd.f32 0.0, %v960
      %v962 = vpop.f32.mrf.mxu0
      %v963 = vadd.f32 0.0, %v962
      %964 = vdwg.mxu0
      %965 = vmatpush.bf16.msra.mxu0 0
      %966 = vmatpush.bf16.msra.mxu0 0
      %967 = vmatpush.bf16.msra.mxu0 0
      %968 = vmatpush.bf16.msra.mxu0 0
      %969 = vmatpush.bf16.msra.mxu0 %v762
      %970 = vmatpush.bf16.msra.mxu0 %v754
      %971 = vmatpush.bf16.msra.mxu0 %v746
      %972 = vmatpush.bf16.msra.mxu0 %v738
      %973 = vmatmul.bf16.gmra.mxu0 %v865
      %v974 = vpop.f32.mrf.mxu0
      %v975 = vadd.f32 %v961, %v974
      %v976 = vpop.f32.mrf.mxu0
      %v977 = vadd.f32 %v963, %v976
      %978 = vdwg.mxu0
      %979 = vmatpush.bf16.msra.mxu0 %v731
      %980 = vmatpush.bf16.msra.mxu0 %v723
      %981 = vmatpush.bf16.msra.mxu0 %v715
      %982 = vmatpush.bf16.msra.mxu0 %v707
      %983 = vmatpush.bf16.msra.mxu0 %v699
      %984 = vmatpush.bf16.msra.mxu0 %v691
      %985 = vmatpush.bf16.msra.mxu0 %v683
      %986 = vmatpush.bf16.msra.mxu0 %v675
      %987 = vmatmul.bf16.gmra.mxu0 %v285
      %v988 = vpop.f32.mrf.mxu0
      %v989 = vadd.f32 0.0, %v988
      %v990 = vpop.f32.mrf.mxu0
      %v991 = vadd.f32 0.0, %v990
      %992 = vdwg.mxu0
      %993 = vmatpush.bf16.msra.mxu0 0
      %994 = vmatpush.bf16.msra.mxu0 0
      %995 = vmatpush.bf16.msra.mxu0 0
      %996 = vmatpush.bf16.msra.mxu0 0
      %997 = vmatpush.bf16.msra.mxu0 %v763
      %998 = vmatpush.bf16.msra.mxu0 %v755
      %999 = vmatpush.bf16.msra.mxu0 %v747
      %1000 = vmatpush.bf16.msra.mxu0 %v739
      %1001 = vmatmul.bf16.gmra.mxu0 %v865
      %v1002 = vpop.f32.mrf.mxu0
      %v1003 = vadd.f32 %v989, %v1002
      %v1004 = vpop.f32.mrf.mxu0
      %v1005 = vadd.f32 %v991, %v1004
      %1006 = vdwg.mxu0
      %1007 = vmatpush.bf16.msra.mxu0 %v732
      %1008 = vmatpush.bf16.msra.mxu0 %v724
      %1009 = vmatpush.bf16.msra.mxu0 %v716
      %1010 = vmatpush.bf16.msra.mxu0 %v708
      %1011 = vmatpush.bf16.msra.mxu0 %v700
      %1012 = vmatpush.bf16.msra.mxu0 %v692
      %1013 = vmatpush.bf16.msra.mxu0 %v684
      %1014 = vmatpush.bf16.msra.mxu0 %v676
      %1015 = vmatmul.bf16.gmra.mxu0 %v285
      %v1016 = vpop.f32.mrf.mxu0
      %v1017 = vadd.f32 0.0, %v1016
      %v1018 = vpop.f32.mrf.mxu0
      %v1019 = vadd.f32 0.0, %v1018
      %1020 = vdwg.mxu0
      %1021 = vmatpush.bf16.msra.mxu0 0
      %1022 = vmatpush.bf16.msra.mxu0 0
      %1023 = vmatpush.bf16.msra.mxu0 0
      %1024 = vmatpush.bf16.msra.mxu0 0
      %1025 = vmatpush.bf16.msra.mxu0 %v764
      %1026 = vmatpush.bf16.msra.mxu0 %v756
      %1027 = vmatpush.bf16.msra.mxu0 %v748
      %1028 = vmatpush.bf16.msra.mxu0 %v740
      %1029 = vmatmul.bf16.gmra.mxu0 %v865
      %v1030 = vpop.f32.mrf.mxu0
      %v1031 = vadd.f32 %v1017, %v1030
      %v1032 = vpop.f32.mrf.mxu0
      %v1033 = vadd.f32 %v1019, %v1032
      %1034 = vdwg.mxu0
      %1035 = vmatpush.bf16.msra.mxu0 %v733
      %1036 = vmatpush.bf16.msra.mxu0 %v725
      %1037 = vmatpush.bf16.msra.mxu0 %v717
      %1038 = vmatpush.bf16.msra.mxu0 %v709
      %1039 = vmatpush.bf16.msra.mxu0 %v701
      %1040 = vmatpush.bf16.msra.mxu0 %v693
      %1041 = vmatpush.bf16.msra.mxu0 %v685
      %1042 = vmatpush.bf16.msra.mxu0 %v677
      %1043 = vmatmul.bf16.gmra.mxu0 %v285
      %v1044 = vpop.f32.mrf.mxu0
      %v1045 = vadd.f32 0.0, %v1044
      %v1046 = vpop.f32.mrf.mxu0
      %v1047 = vadd.f32 0.0, %v1046
      %1048 = vdwg.mxu0
      %1049 = vmatpush.bf16.msra.mxu0 0
      %1050 = vmatpush.bf16.msra.mxu0 0
      %1051 = vmatpush.bf16.msra.mxu0 0
      %1052 = vmatpush.bf16.msra.mxu0 0
      %1053 = vmatpush.bf16.msra.mxu0 %v765
      %1054 = vmatpush.bf16.msra.mxu0 %v757
      %1055 = vmatpush.bf16.msra.mxu0 %v749
      %1056 = vmatpush.bf16.msra.mxu0 %v741
      %1057 = vmatmul.bf16.gmra.mxu0 %v865
      %v1058 = vpop.f32.mrf.mxu0
      %v1059 = vadd.f32 %v1045, %v1058
      %v1060 = vpop.f32.mrf.mxu0
      %v1061 = vadd.f32 %v1047, %v1060
      %1062 = vdwg.mxu0
      %1063 = vmatpush.bf16.msra.mxu0 %v734
      %1064 = vmatpush.bf16.msra.mxu0 %v726
      %1065 = vmatpush.bf16.msra.mxu0 %v718
      %1066 = vmatpush.bf16.msra.mxu0 %v710
      %1067 = vmatpush.bf16.msra.mxu0 %v702
      %1068 = vmatpush.bf16.msra.mxu0 %v694
      %1069 = vmatpush.bf16.msra.mxu0 %v686
      %1070 = vmatpush.bf16.msra.mxu0 %v678
      %1071 = vmatmul.bf16.gmra.mxu0 %v285
      %v1072 = vpop.f32.mrf.mxu0
      %v1073 = vadd.f32 0.0, %v1072
      %v1074 = vpop.f32.mrf.mxu0
      %v1075 = vadd.f32 0.0, %v1074
      %1076 = vdwg.mxu0
      %1077 = vmatpush.bf16.msra.mxu0 0
      %1078 = vmatpush.bf16.msra.mxu0 0
      %1079 = vmatpush.bf16.msra.mxu0 0
      %1080 = vmatpush.bf16.msra.mxu0 0
      %1081 = vmatpush.bf16.msra.mxu0 %v766
      %1082 = vmatpush.bf16.msra.mxu0 %v758
      %1083 = vmatpush.bf16.msra.mxu0 %v750
      %1084 = vmatpush.bf16.msra.mxu0 %v742
      %1085 = vmatmul.bf16.gmra.mxu0 %v865
      %v1086 = vpop.f32.mrf.mxu0
      %v1087 = vadd.f32 %v1073, %v1086
      %v1088 = vpop.f32.mrf.mxu0
      %v1089 = vadd.f32 %v1075, %v1088
      %1090 = vdwg.mxu0
      %v1091 = vld [vmem:[%s2] sm:$0xff]
      %v1093 = vperm.slane %v1091, 0
      %v1094 = vperm.slane %v1091, 1
      %v1095 = vperm.slane %v1091, 2
      %v1096 = vperm.slane %v1091, 3
      %v1097 = vperm.slane %v1091, 4
      %v1098 = vperm.slane %v1091, 5
      %v1099 = vperm.slane %v1091, 6
      %v1100 = vperm.slane %v1091, 7
      %v1109 = vmul.f32 %v891, %v1093
      %v1110 = vmul.f32 %v919, %v1094
      %v1111 = vmul.f32 %v947, %v1095
      %v1112 = vmul.f32 %v975, %v1096
      %v1113 = vmul.f32 %v1003, %v1097
      %v1114 = vmul.f32 %v1031, %v1098
      %v1115 = vmul.f32 %v1059, %v1099
      %v1116 = vmul.f32 %v1087, %v1100
      %v1117 = vmul.f32 %v893, %v1093
      %v1118 = vmul.f32 %v921, %v1094
      %v1119 = vmul.f32 %v949, %v1095
      %v1120 = vmul.f32 %v977, %v1096
      %v1121 = vmul.f32 %v1005, %v1097
      %v1122 = vmul.f32 %v1033, %v1098
      %v1123 = vmul.f32 %v1061, %v1099
      %v1124 = vmul.f32 %v1089, %v1100
      %v1125 = vld [vmem:[%s3] sm:$0xff]
      %v1127 = vperm.slane %v1125, 0
      %v1128 = vperm.slane %v1125, 1
      %v1129 = vperm.slane %v1125, 2
      %v1130 = vperm.slane %v1125, 3
      %v1131 = vperm.slane %v1125, 4
      %v1132 = vperm.slane %v1125, 5
      %v1133 = vperm.slane %v1125, 6
      %v1134 = vperm.slane %v1125, 7
      %v1143 = vadd.f32 %v1109, %v1127
      %v1144 = vadd.f32 %v1110, %v1128
      %v1145 = vadd.f32 %v1111, %v1129
      %v1146 = vadd.f32 %v1112, %v1130
      %v1147 = vadd.f32 %v1113, %v1131
      %v1148 = vadd.f32 %v1114, %v1132
      %v1149 = vadd.f32 %v1115, %v1133
      %v1150 = vadd.f32 %v1116, %v1134
      %v1151 = vadd.f32 %v1117, %v1127
      %v1152 = vadd.f32 %v1118, %v1128
      %v1153 = vadd.f32 %v1119, %v1129
      %v1154 = vadd.f32 %v1120, %v1130
      %v1155 = vadd.f32 %v1121, %v1131
      %v1156 = vadd.f32 %v1122, %v1132
      %v1157 = vadd.f32 %v1123, %v1133
      %v1158 = vadd.f32 %v1124, %v1134
      %v1159 = vmax.f32 %v1143, 0.0
      %v1160 = vmax.f32 %v1144, 0.0
      %v1161 = vmax.f32 %v1145, 0.0
      %v1162 = vmax.f32 %v1146, 0.0
      %v1163 = vmax.f32 %v1147, 0.0
      %v1164 = vmax.f32 %v1148, 0.0
      %v1165 = vmax.f32 %v1149, 0.0
      %v1166 = vmax.f32 %v1150, 0.0
      %v1167 = vmax.f32 %v1151, 0.0
      %v1168 = vmax.f32 %v1152, 0.0
      %v1169 = vmax.f32 %v1153, 0.0
      %v1170 = vmax.f32 %v1154, 0.0
      %v1171 = vmax.f32 %v1155, 0.0
      %v1172 = vmax.f32 %v1156, 0.0
      %v1173 = vmax.f32 %v1157, 0.0
      %v1174 = vmax.f32 %v1158, 0.0
      %1175 = vst [vmem:[%s274] sm:$0xff] %v1159
      %1176 = vst [vmem:[%s274 + $0x8] sm:$0xff] %v1160
      %1177 = vst [vmem:[%s274 + $0x10] sm:$0xff] %v1161
      %1178 = vst [vmem:[%s274 + $0x18] sm:$0xff] %v1162
      %1179 = vst [vmem:[%s274 + $0x20] sm:$0xff] %v1163
      %1180 = vst [vmem:[%s274 + $0x28] sm:$0xff] %v1164
      %1181 = vst [vmem:[%s274 + $0x30] sm:$0xff] %v1165
      %1182 = vst [vmem:[%s274 + $0x38] sm:$0xff] %v1166
      %1183 = vst [vmem:[%s274 + $0x40] sm:$0xff] %v1167
      %1184 = vst [vmem:[%s274 + $0x48] sm:$0xff] %v1168
      %1185 = vst [vmem:[%s274 + $0x50] sm:$0xff] %v1169
      %1186 = vst [vmem:[%s274 + $0x58] sm:$0xff] %v1170
      %1187 = vst [vmem:[%s274 + $0x60] sm:$0xff] %v1171
      %1188 = vst [vmem:[%s274 + $0x68] sm:$0xff] %v1172
      %1189 = vst [vmem:[%s274 + $0x70] sm:$0xff] %v1173
      %1190 = vst [vmem:[%s274 + $0x78] sm:$0xff] %v1174
      %v1191 = vmax.f32 %v1159, %v1167
      %v1192 = vrot.slane %v1191, 4
      %v1193 = vmax.f32 %v1191, %v1192
      %v1194 = vrot.slane %v1193, 2
      %v1195 = vmax.f32 %v1193, %v1194
      %v1196 = vrot.slane %v1195, 1
      %v1197 = vmax.f32 %v1195, %v1196
      %v1198 = vmax.f32 %v1160, %v1168
      %v1199 = vrot.slane %v1198, 4
      %v1200 = vmax.f32 %v1198, %v1199
      %v1201 = vrot.slane %v1200, 2
      %v1202 = vmax.f32 %v1200, %v1201
      %v1203 = vrot.slane %v1202, 1
      %v1204 = vmax.f32 %v1202, %v1203
      %v1205 = vmax.f32 %v1161, %v1169
      %v1206 = vrot.slane %v1205, 4
      %v1207 = vmax.f32 %v1205, %v1206
      %v1208 = vrot.slane %v1207, 2
      %v1209 = vmax.f32 %v1207, %v1208
      %v1210 = vrot.slane %v1209, 1
      %v1211 = vmax.f32 %v1209, %v1210
      %v1212 = vmax.f32 %v1162, %v1170
      %v1213 = vrot.slane %v1212, 4
      %v1214 = vmax.f32 %v1212, %v1213
      %v1215 = vrot.slane %v1214, 2
      %v1216 = vmax.f32 %v1214, %v1215
      %v1217 = vrot.slane %v1216, 1
      %v1218 = vmax.f32 %v1216, %v1217
      %v1219 = vmax.f32 %v1163, %v1171
      %v1220 = vrot.slane %v1219, 4
      %v1221 = vmax.f32 %v1219, %v1220
      %v1222 = vrot.slane %v1221, 2
      %v1223 = vmax.f32 %v1221, %v1222
      %v1224 = vrot.slane %v1223, 1
      %v1225 = vmax.f32 %v1223, %v1224
      %v1226 = vmax.f32 %v1164, %v1172
      %v1227 = vrot.slane %v1226, 4
      %v1228 = vmax.f32 %v1226, %v1227
      %v1229 = vrot.slane %v1228, 2
      %v1230 = vmax.f32 %v1228, %v1229
      %v1231 = vrot.slane %v1230, 1
      %v1232 = vmax.f32 %v1230, %v1231
      %v1233 = vmax.f32 %v1165, %v1173
      %v1234 = vrot.slane %v1233, 4
      %v1235 = vmax.f32 %v1233, %v1234
      %v1236 = vrot.slane %v1235, 2
      %v1237 = vmax.f32 %v1235, %v1236
      %v1238 = vrot.slane %v1237, 1
      %v1239 = vmax.f32 %v1237, %v1238
      %v1240 = vmax.f32 %v1166, %v1174
      %v1241 = vrot.slane %v1240, 4
      %v1242 = vmax.f32 %v1240, %v1241
      %v1243 = vrot.slane %v1242, 2
      %v1244 = vmax.f32 %v1242, %v1243
      %v1245 = vrot.slane %v1244, 1
      %v1246 = vmax.f32 %v1244, %v1245
      %p1247 = scmp.eq.s32.totalorder %s22, 0
      // Predicated region
      $region37: #{dgcnn_seg_feature_fwd.27} parent=35 // pred_check
        %p1248 = pneg %p1247
      $region38: #{dgcnn_seg_feature_fwd.27} parent=35 // pred_check_branch
        %1250 = sbr.rel (%p1248) target = $region40
      $region39: #{dgcnn_seg_feature_fwd.27} parent=35 // pred_region
        %v1259 = vrot.slane %v1204, 7
        %v1260 = vrot.slane %v1211, 6
        %v1261 = vrot.slane %v1218, 5
        %v1262 = vrot.slane %v1225, 4
        %v1263 = vrot.slane %v1232, 3
        %v1264 = vrot.slane %v1239, 2
        %v1265 = vrot.slane %v1246, 1
        %vm1266 = vcmask 1040384
        %v1267 = vsel %vm1266, %v1197, %v1259
        %vm1268 = vcmask 1042434
        %v1269 = vsel %vm1268, %v1260, %v1261
        %vm1270 = vcmask 1041408
        %v1271 = vsel %vm1270, %v1267, %v1269
        %vm1272 = vcmask 1044484
        %v1273 = vsel %vm1272, %v1262, %v1263
        %vm1274 = vcmask 1046534
        %v1275 = vsel %vm1274, %v1264, %v1265
        %vm1276 = vcmask 1045508
        %v1277 = vsel %vm1276, %v1273, %v1275
        %vm1278 = vcmask 1043456
        %v1279 = vsel %vm1278, %v1271, %v1277
        %1281 = vst [vmem:[%s279] sm:$0xff] %v1279
      $region40: #{dgcnn_seg_feature_fwd.27} parent=35 // pred_fallthru
        _
      %p1282 = scmp.gt.s32.totalorder %s22, 0
      // Predicated region
      $region41: #{dgcnn_seg_feature_fwd.27} parent=35 // pred_check
        %p1283 = pneg %p1282
      $region42: #{dgcnn_seg_feature_fwd.27} parent=35 // pred_check_branch
        %1285 = sbr.rel (%p1283) target = $region44
      $region43: #{dgcnn_seg_feature_fwd.27} parent=35 // pred_region
        %v1286 = vld [vmem:[%s279] sm:$0xff]
        %v1295 = vrot.slane %v1204, 7
        %v1296 = vrot.slane %v1211, 6
        %v1297 = vrot.slane %v1218, 5
        %v1298 = vrot.slane %v1225, 4
        %v1299 = vrot.slane %v1232, 3
        %v1300 = vrot.slane %v1239, 2
        %v1301 = vrot.slane %v1246, 1
        %vm1302 = vcmask 1040384
        %v1303 = vsel %vm1302, %v1197, %v1295
        %vm1304 = vcmask 1042434
        %v1305 = vsel %vm1304, %v1296, %v1297
        %vm1306 = vcmask 1041408
        %v1307 = vsel %vm1306, %v1303, %v1305
        %vm1308 = vcmask 1044484
        %v1309 = vsel %vm1308, %v1298, %v1299
        %vm1310 = vcmask 1046534
        %v1311 = vsel %vm1310, %v1300, %v1301
        %vm1312 = vcmask 1045508
        %v1313 = vsel %vm1312, %v1309, %v1311
        %vm1314 = vcmask 1043456
        %v1315 = vsel %vm1314, %v1307, %v1313
        %v1317 = vmax.f32 %v1286, %v1315
        %1318 = vst [vmem:[%s279] sm:$0xff] %v1317
      $region44: #{dgcnn_seg_feature_fwd.27} parent=35 // pred_fallthru
        _
      %s1319 = smul.u32 2, %s22
      %p1320 = scmp.lt.s32.totalorder %s21, 1
      %s1321 = scalar_select %p1320, %s21, 1
      %p1322 = scmp.lt.s32.totalorder %s1319, 1
      %s1323 = scalar_select %p1322, %s1319, 1
      %s1324 = smul.addr %s1323, 8
      %s1325 = smul.addr %s1321, 16
      %s1326 = sadd.s32 %s1324, %s1325
      %s1327 = smul.addr %s1326, 8
      %s1328 = scalar_lea.vmem %s4, %s1327
      %p1329 = scmp.lt.s32.totalorder %s21, 1
      %s1330 = scalar_select %p1329, %s21, 1
      %s1331 = smul.addr %s1330, 8
      %s1332 = scalar_lea.vmem %s5, %s1331
      // Predicated region
      $region45: #{dgcnn_seg_feature_fwd.27} parent=35 // pred_check
        %p1333 = pneg %p140
      $region46: #{dgcnn_seg_feature_fwd.27} parent=35 // pred_check_branch
        %1335 = sbr.rel (%p1333) target = $region48
      $region47: #{dgcnn_seg_feature_fwd.27} parent=35 // pred_region
        %s1336 = smul.u32 2, %s22
      $region48: #{dgcnn_seg_feature_fwd.27} parent=35 // pred_fallthru
        _
      // Predicated region
      $region49: #{dgcnn_seg_feature_fwd.27} parent=35 // pred_check
        %p1337 = pneg %p166
      $region50: #{dgcnn_seg_feature_fwd.27} parent=35 // pred_check_branch
        %1339 = sbr.rel (%p1337) target = $region52
      $region51: #{dgcnn_seg_feature_fwd.27} parent=35 // pred_region
        _
      $region52: #{dgcnn_seg_feature_fwd.27} parent=35 // pred_fallthru
        _
    $region36: #{dgcnn_seg_feature_fwd.27} parent=5 // pred_fallthru
      _
    %p1340 = scmp.le.s32.totalorder 2, %s12
    // Predicated region
    $region53: #{dgcnn_seg_feature_fwd.27} parent=5 // pred_check
      %p1341 = pneg %p1340
    $region54: #{dgcnn_seg_feature_fwd.27} parent=5 // pred_check_branch
      %1343 = sbr.rel (%p1341) target = $region56
    $region55: #{dgcnn_seg_feature_fwd.27} parent=5 // pred_region
      %s1344 = ssub.s32 %s12, 2
      // Predicated region
      $region57: #{dgcnn_seg_feature_fwd.27} parent=55 // pred_check
        %p1345 = pneg %p146
      $region58: #{dgcnn_seg_feature_fwd.27} parent=55 // pred_check_branch
        %1347 = sbr.rel (%p1345) target = $region60
      $region59: #{dgcnn_seg_feature_fwd.27} parent=55 // pred_region
        %s1348 = smul.u32 2, %s24
        %p1349 = scmp.lt.s32.totalorder %s23, 1
        %s1350 = scalar_select %p1349, %s23, 1
        %p1351 = scmp.lt.s32.totalorder %s1348, 1
        %s1352 = scalar_select %p1351, %s1348, 1
        %s1353 = smul.addr %s1352, 8
        %s1354 = smul.addr %s1350, 16
        %s1355 = sadd.s32 %s1353, %s1354
        %s1356 = smul.addr %s1355, 8
        %s1357 = scalar_lea.vmem %s4, %s1356
      $region60: #{dgcnn_seg_feature_fwd.27} parent=55 // pred_fallthru
        _
      // Predicated region
      $region61: #{dgcnn_seg_feature_fwd.27} parent=55 // pred_check
        %p1358 = pneg %p172
      $region62: #{dgcnn_seg_feature_fwd.27} parent=55 // pred_check_branch
        %1360 = sbr.rel (%p1358) target = $region64
      $region63: #{dgcnn_seg_feature_fwd.27} parent=55 // pred_region
        %p1361 = scmp.lt.s32.totalorder %s23, 1
        %s1362 = scalar_select %p1361, %s23, 1
        %s1363 = smul.addr %s1362, 8
        %s1364 = scalar_lea.vmem %s5, %s1363
      $region64: #{dgcnn_seg_feature_fwd.27} parent=55 // pred_fallthru
        _
    $region56: #{dgcnn_seg_feature_fwd.27} parent=5 // pred_fallthru
      _
  $region6: #{dgcnn_seg_feature_fwd.27} parent=0 // loop_footer
    %s16 = sadd.s32 1, %s12
  $region7: #{dgcnn_seg_feature_fwd.27} parent=0 // loop_footer_branch
    %11 = sbr.rel target = $region3
  $region8: #{dgcnn_seg_feature_fwd.27} parent=0 // loop_exit
    _

</llo_original>
